<compile_context>
chip_gen: v5e
topology: v5e:2x2
jax: 0.10.0
libtpu: 0.0.40
codegen_flags: <defaults>
</compile_context>

<pallas_src>
import functools
import math

import jax
import jax.numpy as jnp
import numpy as np
from jax.experimental import pallas as pl
from jax.experimental.pallas import tpu as pltpu

_LN_EPS = 1e-5  # nn.LayerNorm default


# --------------------------------------------------------------------------------------
# In-kernel helpers (operate on loaded VMEM values, f32 stats, bf16 MXU feeds)
# --------------------------------------------------------------------------------------
def _layer_norm(x, gamma, beta):
    mean = jnp.mean(x, axis=-1, keepdims=True)
    xc = x - mean
    var = jnp.mean(xc * xc, axis=-1, keepdims=True)
    return xc * jax.lax.rsqrt(var + _LN_EPS) * gamma + beta


def _gelu_tanh(x):
    # TODO(synk): nn.GELU() default is the exact erf formulation; tanh approximation
    # is used here (max deviation ~3e-3) since erf lowering in Mosaic is not guaranteed.
    c = math.sqrt(2.0 / math.pi)
    return 0.5 * x * (1.0 + jnp.tanh(c * (x + 0.044715 * x * x * x)))


def _attention(xq, ctx, wq, wk, wv, wo, bo, *, n_heads, d_head, scale):
    """Multi-head scaled-dot-product attention.  Weights arrive as bf16 values; the
    head concat + output projection is rewritten as a per-head accumulation
    (sum_h head_h @ Wo[h-block]) to avoid a lane-concat."""
    bf16 = jnp.bfloat16
    q = jnp.dot(xq.astype(bf16), wq, preferred_element_type=jnp.float32)    # (S, H*Dh)
    k = jnp.dot(ctx.astype(bf16), wk, preferred_element_type=jnp.float32)   # (T, H*Dh)
    v = jnp.dot(ctx.astype(bf16), wv, preferred_element_type=jnp.float32)   # (T, H*Dh)

    out = jnp.zeros((q.shape[0], wo.shape[1]), jnp.float32)                  # (S, D)
    for h in range(n_heads):                                                 # small, unrolled
        sl = slice(h * d_head, (h + 1) * d_head)
        qh = q[:, sl].astype(bf16)
        kh = k[:, sl].astype(bf16)
        vh = v[:, sl].astype(bf16)
        # scores: (S, Dh) x (T, Dh) contracted on Dh  -> (S, T)
        s = jax.lax.dot_general(qh, kh, (((1,), (1,)), ((), ())),
                                preferred_element_type=jnp.float32) * scale
        m = jnp.max(s, axis=-1, keepdims=True)
        p = jnp.exp(s - m)
        p = p * pl.reciprocal(jnp.sum(p, axis=-1, keepdims=True), approx=True)
        oh = jnp.dot(p.astype(bf16), vh, preferred_element_type=jnp.float32)  # (S, Dh)
        out = out + jnp.dot(oh.astype(bf16), wo[sl, :],
                            preferred_element_type=jnp.float32)
    return out + bo


# --------------------------------------------------------------------------------------
# Fused kernel: whole BasicTransformerBlock for one batch element per grid step
# --------------------------------------------------------------------------------------
def _transformer_block_kernel(
        x_ref, ctx_ref,
        g1_ref, b1_ref, wq1_ref, wk1_ref, wv1_ref, wo1_ref, bo1_ref,
        g2_ref, b2_ref, wq2_ref, wk2_ref, wv2_ref, wo2_ref, bo2_ref,
        g3_ref, b3_ref, wp_ref, bp_ref, wf_ref, bf_ref,
        o_ref, *, n_heads, d_head, d_ff):
    scale = float(d_head) ** -0.5
    x = x_ref[0]          # (S, D)  f32
    ctx = ctx_ref[0]      # (T, Cc) f32

    # ---- x = attn1(norm1(x)) + x   (self-attention: K/V from the normalized x)
    xn = _layer_norm(x, g1_ref[...], b1_ref[...])
    h = _attention(xn, xn, wq1_ref[...], wk1_ref[...], wv1_ref[...],
                   wo1_ref[...], bo1_ref[...],
                   n_heads=n_heads, d_head=d_head, scale=scale) + x

    # ---- x = attn2(norm2(x), context) + x   (cross-attention)
    hn = _layer_norm(h, g2_ref[...], b2_ref[...])
    h = _attention(hn, ctx, wq2_ref[...], wk2_ref[...], wv2_ref[...],
                   wo2_ref[...], bo2_ref[...],
                   n_heads=n_heads, d_head=d_head, scale=scale) + h

    # ---- x = ff(norm3(x)) + x    (GEGLU -> Linear)
    hn = _layer_norm(h, g3_ref[...], b3_ref[...])
    proj = jnp.dot(hn.astype(jnp.bfloat16), wp_ref[...],
                   preferred_element_type=jnp.float32) + bp_ref[...]       # (S, 2*d_ff)
    gated = proj[:, :d_ff] * _gelu_tanh(proj[:, d_ff:])                    # (S, d_ff) f32
    h = (jnp.dot(gated.astype(jnp.bfloat16), wf_ref[...],
                 preferred_element_type=jnp.float32) + bf_ref[...]) + h

    o_ref[0] = h


# --------------------------------------------------------------------------------------
# Wrapper
# --------------------------------------------------------------------------------------
@functools.partial(jax.jit, static_argnames=("n_heads", "d_head"))
def basic_transformer_block(x, context, params, *, n_heads, d_head):
    N, S, D = x.shape
    _, T, Cc = context.shape
    d_ff = params["ff_wf"].shape[0]          # dim * 4
    bf16 = jnp.bfloat16

    inputs = (
        x,
        context,
        params["norm1_g"], params["norm1_b"],
        params["attn1_wq"].astype(bf16), params["attn1_wk"].astype(bf16),
        params["attn1_wv"].astype(bf16), params["attn1_wo"].astype(bf16),
        params["attn1_bo"],
        params["norm2_g"], params["norm2_b"],
        params["attn2_wq"].astype(bf16), params["attn2_wk"].astype(bf16),
        params["attn2_wv"].astype(bf16), params["attn2_wo"].astype(bf16),
        params["attn2_bo"],
        params["norm3_g"], params["norm3_b"],
        params["ff_wp"].astype(bf16), params["ff_bp"],
        params["ff_wf"].astype(bf16), params["ff_bf"],
    )

    def resident_spec(shape):
        # weights / norm params: constant block index -> stays resident across grid steps
        return pl.BlockSpec(shape, lambda n, _s=shape: (0,) * len(_s))

    in_specs = [
        pl.BlockSpec((1, S, D), lambda n: (n, 0, 0)),     # x (per batch element)
        pl.BlockSpec((1, T, Cc), lambda n: (n, 0, 0)),    # context (per batch element)
    ] + [resident_spec(a.shape) for a in inputs[2:]]

    kernel = functools.partial(_transformer_block_kernel,
                               n_heads=n_heads, d_head=d_head, d_ff=d_ff)

    return pl.pallas_call(
        kernel,
        out_shape=jax.ShapeDtypeStruct((N, S, D), jnp.float32),
        grid=(N,),
        in_specs=in_specs,
        out_specs=pl.BlockSpec((1, S, D), lambda n: (n, 0, 0)),
        compiler_params=pltpu.CompilerParams(
            dimension_semantics=("parallel",),
            vmem_limit_bytes=32 * 1024 * 1024,
        ),
    )(*inputs)


# --------------------------------------------------------------------------------------
# Deterministic parameter init + pure-JAX reference
# --------------------------------------------------------------------------------------
def init_params(key, dim, context_dim, n_heads, d_head, mult=4):
    inner = n_heads * d_head
    d_ff = dim * mult
    ks = jax.random.split(key, 16)
    ks2 = jax.random.split(jax.random.fold_in(key, 1), 4)

    def lin(k, fan_in, fan_out):
        return (jax.random.normal(k, (fan_in, fan_out), jnp.float32)
                / np.sqrt(fan_in).astype(np.float32))

    def vec(k, n, scale=0.05):
        return scale * jax.random.normal(k, (1, n), jnp.float32)

    return {
        "norm1_g": 1.0 + vec(ks[0], dim), "norm1_b": vec(ks[1], dim),
        "attn1_wq": lin(ks[2], dim, inner), "attn1_wk": lin(ks[3], dim, inner),
        "attn1_wv": lin(ks[4], dim, inner), "attn1_wo": lin(ks[5], inner, dim),
        "attn1_bo": vec(ks[6], dim),
        "norm2_g": 1.0 + vec(ks[7], dim), "norm2_b": vec(ks[8], dim),
        "attn2_wq": lin(ks[9], dim, inner), "attn2_wk": lin(ks[10], context_dim, inner),
        "attn2_wv": lin(ks[11], context_dim, inner), "attn2_wo": lin(ks[12], inner, dim),
        "attn2_bo": vec(ks[13], dim),
        "norm3_g": 1.0 + vec(ks[14], dim), "norm3_b": vec(ks[15], dim),
        "ff_wp": lin(ks2[0], dim, 2 * d_ff), "ff_bp": vec(ks2[1], 2 * d_ff),
        "ff_wf": lin(ks2[2], d_ff, dim), "ff_bf": vec(ks2[3], dim),
    }


def ref_block(x, context, p, n_heads, d_head):
    def ln(h, g, b):
        mean = h.mean(-1, keepdims=True)
        var = ((h - mean) ** 2).mean(-1, keepdims=True)
        return (h - mean) / jnp.sqrt(var + _LN_EPS) * g + b

    def attn(xq, ctx, wq, wk, wv, wo, bo):
        N, S, _ = xq.shape
        T = ctx.shape[1]
        q = (xq @ wq).reshape(N, S, n_heads, d_head).transpose(0, 2, 1, 3)
        k = (ctx @ wk).reshape(N, T, n_heads, d_head).transpose(0, 2, 1, 3)
        v = (ctx @ wv).reshape(N, T, n_heads, d_head).transpose(0, 2, 1, 3)
        s = jnp.einsum("nhqd,nhkd->nhqk", q, k) * (float(d_head) ** -0.5)
        w = jax.nn.softmax(s, axis=-1)
        a = jnp.einsum("nhqk,nhkd->nhqd", w, v).transpose(0, 2, 1, 3).reshape(N, S, -1)
        return a @ wo + bo

    def gelu(v):
        c = math.sqrt(2.0 / math.pi)
        return 0.5 * v * (1.0 + jnp.tanh(c * (v + 0.044715 * v ** 3)))

    xn = ln(x, p["norm1_g"], p["norm1_b"])
    x = attn(xn, xn, p["attn1_wq"], p["attn1_wk"], p["attn1_wv"],
             p["attn1_wo"], p["attn1_bo"]) + x
    xn = ln(x, p["norm2_g"], p["norm2_b"])
    x = attn(xn, context, p["attn2_wq"], p["attn2_wk"], p["attn2_wv"],
             p["attn2_wo"], p["attn2_bo"]) + x
    xn = ln(x, p["norm3_g"], p["norm3_b"])
    proj = xn @ p["ff_wp"] + p["ff_bp"]
    d_ff = p["ff_wf"].shape[0]
    x = (proj[..., :d_ff] * gelu(proj[..., d_ff:])) @ p["ff_wf"] + p["ff_bf"] + x
    return x


# --------------------------------------------------------------------------------------
if __name__ == "__main__":
    N, S, T = 2, 16, 8
    dim, context_dim, n_heads, d_head = 128, 64, 4, 32   # n_heads*d_head == dim

    key = jax.random.PRNGKey(0)
    kx, kc, kp = jax.random.split(key, 3)
    x = jax.random.normal(kx, (N, S, dim), jnp.float32)
    context = jax.random.normal(kc, (N, T, context_dim), jnp.float32)
    params = init_params(kp, dim, context_dim, n_heads, d_head)

    out = jax.block_until_ready(
        basic_transformer_block(x, context, params, n_heads=n_heads, d_head=d_head))
    ref = jax.block_until_ready(ref_block(x, context, params, n_heads, d_head))

    assert out.shape == (N, S, dim)
    # tolerance covers bf16 MXU operands (kernel) vs default-precision f32 matmuls (ref)
    np.testing.assert_allclose(np.asarray(out), np.asarray(ref), rtol=3e-2, atol=3e-2)
    print("KERNEL_OK")
</pallas_src>

<mosaic_0001>
module attributes {stable_mosaic.version = 11 : i64} {
  func.func @_transformer_block_kernel(%arg0: i32, %arg1: memref<1x16x128xf32, #tpu.memory_space<vmem>>, %arg2: memref<1x8x64xf32, #tpu.memory_space<vmem>>, %arg3: memref<1x128xf32, #tpu.memory_space<vmem>>, %arg4: memref<1x128xf32, #tpu.memory_space<vmem>>, %arg5: memref<128x128xbf16, #tpu.memory_space<vmem>>, %arg6: memref<128x128xbf16, #tpu.memory_space<vmem>>, %arg7: memref<128x128xbf16, #tpu.memory_space<vmem>>, %arg8: memref<128x128xbf16, #tpu.memory_space<vmem>>, %arg9: memref<1x128xf32, #tpu.memory_space<vmem>>, %arg10: memref<1x128xf32, #tpu.memory_space<vmem>>, %arg11: memref<1x128xf32, #tpu.memory_space<vmem>>, %arg12: memref<128x128xbf16, #tpu.memory_space<vmem>>, %arg13: memref<64x128xbf16, #tpu.memory_space<vmem>>, %arg14: memref<64x128xbf16, #tpu.memory_space<vmem>>, %arg15: memref<128x128xbf16, #tpu.memory_space<vmem>>, %arg16: memref<1x128xf32, #tpu.memory_space<vmem>>, %arg17: memref<1x128xf32, #tpu.memory_space<vmem>>, %arg18: memref<1x128xf32, #tpu.memory_space<vmem>>, %arg19: memref<128x1024xbf16, #tpu.memory_space<vmem>>, %arg20: memref<1x1024xf32, #tpu.memory_space<vmem>>, %arg21: memref<512x128xbf16, #tpu.memory_space<vmem>>, %arg22: memref<1x128xf32, #tpu.memory_space<vmem>>, %arg23: memref<1x16x128xf32, #tpu.memory_space<vmem>>) attributes {dimension_semantics = [#tpu.dimension_semantics<parallel>], iteration_bounds = array<i64: 2>, scalar_prefetch = 0 : i64, scratch_operands = 0 : i64, tpu.core_type = #tpu.core_type<tc>, window_params = [{transform_indices = @transform_0, window_bounds = array<i64: 1, 16, 128>}, {transform_indices = @transform_1, window_bounds = array<i64: 1, 8, 64>}, {pipeline_mode = #tpu.pipeline_mode<synchronous>, transform_indices = @transform_2, window_bounds = array<i64: 1, 128>}, {pipeline_mode = #tpu.pipeline_mode<synchronous>, transform_indices = @transform_3, window_bounds = array<i64: 1, 128>}, {pipeline_mode = #tpu.pipeline_mode<synchronous>, transform_indices = @transform_4, window_bounds = array<i64: 128, 128>}, {pipeline_mode = #tpu.pipeline_mode<synchronous>, transform_indices = @transform_5, window_bounds = array<i64: 128, 128>}, {pipeline_mode = #tpu.pipeline_mode<synchronous>, transform_indices = @transform_6, window_bounds = array<i64: 128, 128>}, {pipeline_mode = #tpu.pipeline_mode<synchronous>, transform_indices = @transform_7, window_bounds = array<i64: 128, 128>}, {pipeline_mode = #tpu.pipeline_mode<synchronous>, transform_indices = @transform_8, window_bounds = array<i64: 1, 128>}, {pipeline_mode = #tpu.pipeline_mode<synchronous>, transform_indices = @transform_9, window_bounds = array<i64: 1, 128>}, {pipeline_mode = #tpu.pipeline_mode<synchronous>, transform_indices = @transform_10, window_bounds = array<i64: 1, 128>}, {pipeline_mode = #tpu.pipeline_mode<synchronous>, transform_indices = @transform_11, window_bounds = array<i64: 128, 128>}, {pipeline_mode = #tpu.pipeline_mode<synchronous>, transform_indices = @transform_12, window_bounds = array<i64: 64, 128>}, {pipeline_mode = #tpu.pipeline_mode<synchronous>, transform_indices = @transform_13, window_bounds = array<i64: 64, 128>}, {pipeline_mode = #tpu.pipeline_mode<synchronous>, transform_indices = @transform_14, window_bounds = array<i64: 128, 128>}, {pipeline_mode = #tpu.pipeline_mode<synchronous>, transform_indices = @transform_15, window_bounds = array<i64: 1, 128>}, {pipeline_mode = #tpu.pipeline_mode<synchronous>, transform_indices = @transform_16, window_bounds = array<i64: 1, 128>}, {pipeline_mode = #tpu.pipeline_mode<synchronous>, transform_indices = @transform_17, window_bounds = array<i64: 1, 128>}, {pipeline_mode = #tpu.pipeline_mode<synchronous>, transform_indices = @transform_18, window_bounds = array<i64: 128, 1024>}, {pipeline_mode = #tpu.pipeline_mode<synchronous>, transform_indices = @transform_19, window_bounds = array<i64: 1, 1024>}, {pipeline_mode = #tpu.pipeline_mode<synchronous>, transform_indices = @transform_20, window_bounds = array<i64: 512, 128>}, {pipeline_mode = #tpu.pipeline_mode<synchronous>, transform_indices = @transform_21, window_bounds = array<i64: 1, 128>}, {transform_indices = @transform_22, window_bounds = array<i64: 1, 16, 128>}]} {
    %c0 = arith.constant 0 : index
    %c0_0 = arith.constant 0 : index
    %c0_1 = arith.constant 0 : index
    %0 = vector.load %arg1[%c0, %c0_0, %c0_1] : memref<1x16x128xf32, #tpu.memory_space<vmem>>, vector<1x16x128xf32>
    %1 = vector.shape_cast %0 : vector<1x16x128xf32> to vector<16x128xf32>
    %c0_2 = arith.constant 0 : index
    %c0_3 = arith.constant 0 : index
    %c0_4 = arith.constant 0 : index
    %2 = vector.load %arg2[%c0_2, %c0_3, %c0_4] : memref<1x8x64xf32, #tpu.memory_space<vmem>>, vector<1x8x64xf32>
    %3 = vector.shape_cast %2 : vector<1x8x64xf32> to vector<8x64xf32>
    %c0_5 = arith.constant 0 : index
    %c0_6 = arith.constant 0 : index
    %4 = vector.load %arg3[%c0_5, %c0_6] : memref<1x128xf32, #tpu.memory_space<vmem>>, vector<1x128xf32>
    %c0_7 = arith.constant 0 : index
    %c0_8 = arith.constant 0 : index
    %5 = vector.load %arg4[%c0_7, %c0_8] : memref<1x128xf32, #tpu.memory_space<vmem>>, vector<1x128xf32>
    %cst = arith.constant dense<0.000000e+00> : vector<16xf32>
    %6 = vector.multi_reduction <add>, %1, %cst [1] : vector<16x128xf32> to vector<16xf32>
    %7 = vector.shape_cast %6 : vector<16xf32> to vector<16x1xf32>
    %cst_9 = arith.constant 1.280000e+02 : f32
    %8 = vector.broadcast %cst_9 : f32 to vector<16x1xf32>
    %9 = arith.divf %7, %8 : vector<16x1xf32>
    %10 = vector.broadcast %9 : vector<16x1xf32> to vector<16x128xf32>
    %11 = arith.subf %1, %10 : vector<16x128xf32>
    %12 = arith.mulf %11, %11 : vector<16x128xf32>
    %cst_10 = arith.constant dense<0.000000e+00> : vector<16xf32>
    %13 = vector.multi_reduction <add>, %12, %cst_10 [1] : vector<16x128xf32> to vector<16xf32>
    %14 = vector.shape_cast %13 : vector<16xf32> to vector<16x1xf32>
    %cst_11 = arith.constant 1.280000e+02 : f32
    %15 = vector.broadcast %cst_11 : f32 to vector<16x1xf32>
    %16 = arith.divf %14, %15 : vector<16x1xf32>
    %cst_12 = arith.constant 9.99999974E-6 : f32
    %17 = vector.broadcast %cst_12 : f32 to vector<16x1xf32>
    %18 = arith.addf %16, %17 : vector<16x1xf32>
    %19 = math.rsqrt %18 : vector<16x1xf32>
    %20 = vector.broadcast %19 : vector<16x1xf32> to vector<16x128xf32>
    %21 = arith.mulf %11, %20 : vector<16x128xf32>
    %22 = vector.broadcast %4 : vector<1x128xf32> to vector<16x128xf32>
    %23 = arith.mulf %21, %22 : vector<16x128xf32>
    %24 = vector.broadcast %5 : vector<1x128xf32> to vector<16x128xf32>
    %25 = arith.addf %23, %24 : vector<16x128xf32>
    %c0_13 = arith.constant 0 : index
    %c0_14 = arith.constant 0 : index
    %26 = vector.load %arg5[%c0_13, %c0_14] : memref<128x128xbf16, #tpu.memory_space<vmem>>, vector<128x128xbf16>
    %c0_15 = arith.constant 0 : index
    %c0_16 = arith.constant 0 : index
    %27 = vector.load %arg6[%c0_15, %c0_16] : memref<128x128xbf16, #tpu.memory_space<vmem>>, vector<128x128xbf16>
    %c0_17 = arith.constant 0 : index
    %c0_18 = arith.constant 0 : index
    %28 = vector.load %arg7[%c0_17, %c0_18] : memref<128x128xbf16, #tpu.memory_space<vmem>>, vector<128x128xbf16>
    %c0_19 = arith.constant 0 : index
    %c0_20 = arith.constant 0 : index
    %29 = vector.load %arg8[%c0_19, %c0_20] : memref<128x128xbf16, #tpu.memory_space<vmem>>, vector<128x128xbf16>
    %c0_21 = arith.constant 0 : index
    %c0_22 = arith.constant 0 : index
    %30 = vector.load %arg9[%c0_21, %c0_22] : memref<1x128xf32, #tpu.memory_space<vmem>>, vector<1x128xf32>
    %31 = arith.truncf %25 : vector<16x128xf32> to vector<16x128xbf16>
    %cst_23 = arith.constant dense<0.000000e+00> : vector<16x128xf32>
    %32 = tpu.matmul %31, %26, %cst_23 {dimension_numbers = #tpu.dot_dimension_numbers<[1], [0], [0], [1], [0, 0, 1, 1], [], []>} : vector<16x128xbf16>, vector<128x128xbf16>, vector<16x128xf32> -> vector<16x128xf32>
    %33 = arith.truncf %25 : vector<16x128xf32> to vector<16x128xbf16>
    %cst_24 = arith.constant dense<0.000000e+00> : vector<16x128xf32>
    %34 = tpu.matmul %33, %27, %cst_24 {dimension_numbers = #tpu.dot_dimension_numbers<[1], [0], [0], [1], [0, 0, 1, 1], [], []>} : vector<16x128xbf16>, vector<128x128xbf16>, vector<16x128xf32> -> vector<16x128xf32>
    %35 = arith.truncf %25 : vector<16x128xf32> to vector<16x128xbf16>
    %cst_25 = arith.constant dense<0.000000e+00> : vector<16x128xf32>
    %36 = tpu.matmul %35, %28, %cst_25 {dimension_numbers = #tpu.dot_dimension_numbers<[1], [0], [0], [1], [0, 0, 1, 1], [], []>} : vector<16x128xbf16>, vector<128x128xbf16>, vector<16x128xf32> -> vector<16x128xf32>
    %cst_26 = arith.constant 0.000000e+00 : f32
    %37 = vector.broadcast %cst_26 : f32 to vector<16x128xf32>
    %38 = vector.extract_strided_slice %32 {offsets = [0, 0], sizes = [16, 32], strides = [1, 1]} : vector<16x128xf32> to vector<16x32xf32>
    %39 = arith.truncf %38 : vector<16x32xf32> to vector<16x32xbf16>
    %40 = vector.extract_strided_slice %34 {offsets = [0, 0], sizes = [16, 32], strides = [1, 1]} : vector<16x128xf32> to vector<16x32xf32>
    %41 = arith.truncf %40 : vector<16x32xf32> to vector<16x32xbf16>
    %42 = vector.extract_strided_slice %36 {offsets = [0, 0], sizes = [16, 32], strides = [1, 1]} : vector<16x128xf32> to vector<16x32xf32>
    %43 = arith.truncf %42 : vector<16x32xf32> to vector<16x32xbf16>
    %cst_27 = arith.constant dense<0.000000e+00> : vector<16x16xf32>
    %44 = tpu.matmul %39, %41, %cst_27 {dimension_numbers = #tpu.dot_dimension_numbers<[1], [1], [0], [0], [0, 0, 1, 0], [], []>} : vector<16x32xbf16>, vector<16x32xbf16>, vector<16x16xf32> -> vector<16x16xf32>
    %cst_28 = arith.constant 0.176776692 : f32
    %45 = vector.broadcast %cst_28 : f32 to vector<16x16xf32>
    %46 = arith.mulf %44, %45 : vector<16x16xf32>
    %cst_29 = arith.constant dense<0xFF800000> : vector<16xf32>
    %47 = vector.multi_reduction <maximumf>, %46, %cst_29 [1] : vector<16x16xf32> to vector<16xf32>
    %48 = vector.shape_cast %47 : vector<16xf32> to vector<16x1xf32>
    %49 = vector.broadcast %48 : vector<16x1xf32> to vector<16x16xf32>
    %50 = arith.subf %46, %49 : vector<16x16xf32>
    %51 = math.exp %50 : vector<16x16xf32>
    %cst_30 = arith.constant dense<0.000000e+00> : vector<16xf32>
    %52 = vector.multi_reduction <add>, %51, %cst_30 [1] : vector<16x16xf32> to vector<16xf32>
    %53 = vector.shape_cast %52 : vector<16xf32> to vector<16x1xf32>
    %54 = tpu.reciprocal %53 {approx = true} : vector<16x1xf32> -> vector<16x1xf32>
    %55 = vector.broadcast %54 : vector<16x1xf32> to vector<16x16xf32>
    %56 = arith.mulf %51, %55 : vector<16x16xf32>
    %57 = arith.truncf %56 : vector<16x16xf32> to vector<16x16xbf16>
    %cst_31 = arith.constant dense<0.000000e+00> : vector<16x32xf32>
    %58 = tpu.matmul %57, %43, %cst_31 {dimension_numbers = #tpu.dot_dimension_numbers<[1], [0], [0], [1], [0, 0, 1, 1], [], []>} : vector<16x16xbf16>, vector<16x32xbf16>, vector<16x32xf32> -> vector<16x32xf32>
    %59 = arith.truncf %58 : vector<16x32xf32> to vector<16x32xbf16>
    %60 = vector.extract_strided_slice %29 {offsets = [0, 0], sizes = [32, 128], strides = [1, 1]} : vector<128x128xbf16> to vector<32x128xbf16>
    %cst_32 = arith.constant dense<0.000000e+00> : vector<16x128xf32>
    %61 = tpu.matmul %59, %60, %cst_32 {dimension_numbers = #tpu.dot_dimension_numbers<[1], [0], [0], [1], [0, 0, 1, 1], [], []>} : vector<16x32xbf16>, vector<32x128xbf16>, vector<16x128xf32> -> vector<16x128xf32>
    %62 = arith.addf %37, %61 : vector<16x128xf32>
    %63 = vector.extract_strided_slice %32 {offsets = [0, 32], sizes = [16, 32], strides = [1, 1]} : vector<16x128xf32> to vector<16x32xf32>
    %64 = arith.truncf %63 : vector<16x32xf32> to vector<16x32xbf16>
    %65 = vector.extract_strided_slice %34 {offsets = [0, 32], sizes = [16, 32], strides = [1, 1]} : vector<16x128xf32> to vector<16x32xf32>
    %66 = arith.truncf %65 : vector<16x32xf32> to vector<16x32xbf16>
    %67 = vector.extract_strided_slice %36 {offsets = [0, 32], sizes = [16, 32], strides = [1, 1]} : vector<16x128xf32> to vector<16x32xf32>
    %68 = arith.truncf %67 : vector<16x32xf32> to vector<16x32xbf16>
    %cst_33 = arith.constant dense<0.000000e+00> : vector<16x16xf32>
    %69 = tpu.matmul %64, %66, %cst_33 {dimension_numbers = #tpu.dot_dimension_numbers<[1], [1], [0], [0], [0, 0, 1, 0], [], []>} : vector<16x32xbf16>, vector<16x32xbf16>, vector<16x16xf32> -> vector<16x16xf32>
    %cst_34 = arith.constant 0.176776692 : f32
    %70 = vector.broadcast %cst_34 : f32 to vector<16x16xf32>
    %71 = arith.mulf %69, %70 : vector<16x16xf32>
    %cst_35 = arith.constant dense<0xFF800000> : vector<16xf32>
    %72 = vector.multi_reduction <maximumf>, %71, %cst_35 [1] : vector<16x16xf32> to vector<16xf32>
    %73 = vector.shape_cast %72 : vector<16xf32> to vector<16x1xf32>
    %74 = vector.broadcast %73 : vector<16x1xf32> to vector<16x16xf32>
    %75 = arith.subf %71, %74 : vector<16x16xf32>
    %76 = math.exp %75 : vector<16x16xf32>
    %cst_36 = arith.constant dense<0.000000e+00> : vector<16xf32>
    %77 = vector.multi_reduction <add>, %76, %cst_36 [1] : vector<16x16xf32> to vector<16xf32>
    %78 = vector.shape_cast %77 : vector<16xf32> to vector<16x1xf32>
    %79 = tpu.reciprocal %78 {approx = true} : vector<16x1xf32> -> vector<16x1xf32>
    %80 = vector.broadcast %79 : vector<16x1xf32> to vector<16x16xf32>
    %81 = arith.mulf %76, %80 : vector<16x16xf32>
    %82 = arith.truncf %81 : vector<16x16xf32> to vector<16x16xbf16>
    %cst_37 = arith.constant dense<0.000000e+00> : vector<16x32xf32>
    %83 = tpu.matmul %82, %68, %cst_37 {dimension_numbers = #tpu.dot_dimension_numbers<[1], [0], [0], [1], [0, 0, 1, 1], [], []>} : vector<16x16xbf16>, vector<16x32xbf16>, vector<16x32xf32> -> vector<16x32xf32>
    %84 = arith.truncf %83 : vector<16x32xf32> to vector<16x32xbf16>
    %85 = vector.extract_strided_slice %29 {offsets = [32, 0], sizes = [32, 128], strides = [1, 1]} : vector<128x128xbf16> to vector<32x128xbf16>
    %cst_38 = arith.constant dense<0.000000e+00> : vector<16x128xf32>
    %86 = tpu.matmul %84, %85, %cst_38 {dimension_numbers = #tpu.dot_dimension_numbers<[1], [0], [0], [1], [0, 0, 1, 1], [], []>} : vector<16x32xbf16>, vector<32x128xbf16>, vector<16x128xf32> -> vector<16x128xf32>
    %87 = arith.addf %62, %86 : vector<16x128xf32>
    %88 = vector.extract_strided_slice %32 {offsets = [0, 64], sizes = [16, 32], strides = [1, 1]} : vector<16x128xf32> to vector<16x32xf32>
    %89 = arith.truncf %88 : vector<16x32xf32> to vector<16x32xbf16>
    %90 = vector.extract_strided_slice %34 {offsets = [0, 64], sizes = [16, 32], strides = [1, 1]} : vector<16x128xf32> to vector<16x32xf32>
    %91 = arith.truncf %90 : vector<16x32xf32> to vector<16x32xbf16>
    %92 = vector.extract_strided_slice %36 {offsets = [0, 64], sizes = [16, 32], strides = [1, 1]} : vector<16x128xf32> to vector<16x32xf32>
    %93 = arith.truncf %92 : vector<16x32xf32> to vector<16x32xbf16>
    %cst_39 = arith.constant dense<0.000000e+00> : vector<16x16xf32>
    %94 = tpu.matmul %89, %91, %cst_39 {dimension_numbers = #tpu.dot_dimension_numbers<[1], [1], [0], [0], [0, 0, 1, 0], [], []>} : vector<16x32xbf16>, vector<16x32xbf16>, vector<16x16xf32> -> vector<16x16xf32>
    %cst_40 = arith.constant 0.176776692 : f32
    %95 = vector.broadcast %cst_40 : f32 to vector<16x16xf32>
    %96 = arith.mulf %94, %95 : vector<16x16xf32>
    %cst_41 = arith.constant dense<0xFF800000> : vector<16xf32>
    %97 = vector.multi_reduction <maximumf>, %96, %cst_41 [1] : vector<16x16xf32> to vector<16xf32>
    %98 = vector.shape_cast %97 : vector<16xf32> to vector<16x1xf32>
    %99 = vector.broadcast %98 : vector<16x1xf32> to vector<16x16xf32>
    %100 = arith.subf %96, %99 : vector<16x16xf32>
    %101 = math.exp %100 : vector<16x16xf32>
    %cst_42 = arith.constant dense<0.000000e+00> : vector<16xf32>
    %102 = vector.multi_reduction <add>, %101, %cst_42 [1] : vector<16x16xf32> to vector<16xf32>
    %103 = vector.shape_cast %102 : vector<16xf32> to vector<16x1xf32>
    %104 = tpu.reciprocal %103 {approx = true} : vector<16x1xf32> -> vector<16x1xf32>
    %105 = vector.broadcast %104 : vector<16x1xf32> to vector<16x16xf32>
    %106 = arith.mulf %101, %105 : vector<16x16xf32>
    %107 = arith.truncf %106 : vector<16x16xf32> to vector<16x16xbf16>
    %cst_43 = arith.constant dense<0.000000e+00> : vector<16x32xf32>
    %108 = tpu.matmul %107, %93, %cst_43 {dimension_numbers = #tpu.dot_dimension_numbers<[1], [0], [0], [1], [0, 0, 1, 1], [], []>} : vector<16x16xbf16>, vector<16x32xbf16>, vector<16x32xf32> -> vector<16x32xf32>
    %109 = arith.truncf %108 : vector<16x32xf32> to vector<16x32xbf16>
    %110 = vector.extract_strided_slice %29 {offsets = [64, 0], sizes = [32, 128], strides = [1, 1]} : vector<128x128xbf16> to vector<32x128xbf16>
    %cst_44 = arith.constant dense<0.000000e+00> : vector<16x128xf32>
    %111 = tpu.matmul %109, %110, %cst_44 {dimension_numbers = #tpu.dot_dimension_numbers<[1], [0], [0], [1], [0, 0, 1, 1], [], []>} : vector<16x32xbf16>, vector<32x128xbf16>, vector<16x128xf32> -> vector<16x128xf32>
    %112 = arith.addf %87, %111 : vector<16x128xf32>
    %113 = vector.extract_strided_slice %32 {offsets = [0, 96], sizes = [16, 32], strides = [1, 1]} : vector<16x128xf32> to vector<16x32xf32>
    %114 = arith.truncf %113 : vector<16x32xf32> to vector<16x32xbf16>
    %115 = vector.extract_strided_slice %34 {offsets = [0, 96], sizes = [16, 32], strides = [1, 1]} : vector<16x128xf32> to vector<16x32xf32>
    %116 = arith.truncf %115 : vector<16x32xf32> to vector<16x32xbf16>
    %117 = vector.extract_strided_slice %36 {offsets = [0, 96], sizes = [16, 32], strides = [1, 1]} : vector<16x128xf32> to vector<16x32xf32>
    %118 = arith.truncf %117 : vector<16x32xf32> to vector<16x32xbf16>
    %cst_45 = arith.constant dense<0.000000e+00> : vector<16x16xf32>
    %119 = tpu.matmul %114, %116, %cst_45 {dimension_numbers = #tpu.dot_dimension_numbers<[1], [1], [0], [0], [0, 0, 1, 0], [], []>} : vector<16x32xbf16>, vector<16x32xbf16>, vector<16x16xf32> -> vector<16x16xf32>
    %cst_46 = arith.constant 0.176776692 : f32
    %120 = vector.broadcast %cst_46 : f32 to vector<16x16xf32>
    %121 = arith.mulf %119, %120 : vector<16x16xf32>
    %cst_47 = arith.constant dense<0xFF800000> : vector<16xf32>
    %122 = vector.multi_reduction <maximumf>, %121, %cst_47 [1] : vector<16x16xf32> to vector<16xf32>
    %123 = vector.shape_cast %122 : vector<16xf32> to vector<16x1xf32>
    %124 = vector.broadcast %123 : vector<16x1xf32> to vector<16x16xf32>
    %125 = arith.subf %121, %124 : vector<16x16xf32>
    %126 = math.exp %125 : vector<16x16xf32>
    %cst_48 = arith.constant dense<0.000000e+00> : vector<16xf32>
    %127 = vector.multi_reduction <add>, %126, %cst_48 [1] : vector<16x16xf32> to vector<16xf32>
    %128 = vector.shape_cast %127 : vector<16xf32> to vector<16x1xf32>
    %129 = tpu.reciprocal %128 {approx = true} : vector<16x1xf32> -> vector<16x1xf32>
    %130 = vector.broadcast %129 : vector<16x1xf32> to vector<16x16xf32>
    %131 = arith.mulf %126, %130 : vector<16x16xf32>
    %132 = arith.truncf %131 : vector<16x16xf32> to vector<16x16xbf16>
    %cst_49 = arith.constant dense<0.000000e+00> : vector<16x32xf32>
    %133 = tpu.matmul %132, %118, %cst_49 {dimension_numbers = #tpu.dot_dimension_numbers<[1], [0], [0], [1], [0, 0, 1, 1], [], []>} : vector<16x16xbf16>, vector<16x32xbf16>, vector<16x32xf32> -> vector<16x32xf32>
    %134 = arith.truncf %133 : vector<16x32xf32> to vector<16x32xbf16>
    %135 = vector.extract_strided_slice %29 {offsets = [96, 0], sizes = [32, 128], strides = [1, 1]} : vector<128x128xbf16> to vector<32x128xbf16>
    %cst_50 = arith.constant dense<0.000000e+00> : vector<16x128xf32>
    %136 = tpu.matmul %134, %135, %cst_50 {dimension_numbers = #tpu.dot_dimension_numbers<[1], [0], [0], [1], [0, 0, 1, 1], [], []>} : vector<16x32xbf16>, vector<32x128xbf16>, vector<16x128xf32> -> vector<16x128xf32>
    %137 = arith.addf %112, %136 : vector<16x128xf32>
    %138 = vector.broadcast %30 : vector<1x128xf32> to vector<16x128xf32>
    %139 = arith.addf %137, %138 : vector<16x128xf32>
    %140 = arith.addf %139, %1 : vector<16x128xf32>
    %c0_51 = arith.constant 0 : index
    %c0_52 = arith.constant 0 : index
    %141 = vector.load %arg10[%c0_51, %c0_52] : memref<1x128xf32, #tpu.memory_space<vmem>>, vector<1x128xf32>
    %c0_53 = arith.constant 0 : index
    %c0_54 = arith.constant 0 : index
    %142 = vector.load %arg11[%c0_53, %c0_54] : memref<1x128xf32, #tpu.memory_space<vmem>>, vector<1x128xf32>
    %cst_55 = arith.constant dense<0.000000e+00> : vector<16xf32>
    %143 = vector.multi_reduction <add>, %140, %cst_55 [1] : vector<16x128xf32> to vector<16xf32>
    %144 = vector.shape_cast %143 : vector<16xf32> to vector<16x1xf32>
    %cst_56 = arith.constant 1.280000e+02 : f32
    %145 = vector.broadcast %cst_56 : f32 to vector<16x1xf32>
    %146 = arith.divf %144, %145 : vector<16x1xf32>
    %147 = vector.broadcast %146 : vector<16x1xf32> to vector<16x128xf32>
    %148 = arith.subf %140, %147 : vector<16x128xf32>
    %149 = arith.mulf %148, %148 : vector<16x128xf32>
    %cst_57 = arith.constant dense<0.000000e+00> : vector<16xf32>
    %150 = vector.multi_reduction <add>, %149, %cst_57 [1] : vector<16x128xf32> to vector<16xf32>
    %151 = vector.shape_cast %150 : vector<16xf32> to vector<16x1xf32>
    %cst_58 = arith.constant 1.280000e+02 : f32
    %152 = vector.broadcast %cst_58 : f32 to vector<16x1xf32>
    %153 = arith.divf %151, %152 : vector<16x1xf32>
    %cst_59 = arith.constant 9.99999974E-6 : f32
    %154 = vector.broadcast %cst_59 : f32 to vector<16x1xf32>
    %155 = arith.addf %153, %154 : vector<16x1xf32>
    %156 = math.rsqrt %155 : vector<16x1xf32>
    %157 = vector.broadcast %156 : vector<16x1xf32> to vector<16x128xf32>
    %158 = arith.mulf %148, %157 : vector<16x128xf32>
    %159 = vector.broadcast %141 : vector<1x128xf32> to vector<16x128xf32>
    %160 = arith.mulf %158, %159 : vector<16x128xf32>
    %161 = vector.broadcast %142 : vector<1x128xf32> to vector<16x128xf32>
    %162 = arith.addf %160, %161 : vector<16x128xf32>
    %c0_60 = arith.constant 0 : index
    %c0_61 = arith.constant 0 : index
    %163 = vector.load %arg12[%c0_60, %c0_61] : memref<128x128xbf16, #tpu.memory_space<vmem>>, vector<128x128xbf16>
    %c0_62 = arith.constant 0 : index
    %c0_63 = arith.constant 0 : index
    %164 = vector.load %arg13[%c0_62, %c0_63] : memref<64x128xbf16, #tpu.memory_space<vmem>>, vector<64x128xbf16>
    %c0_64 = arith.constant 0 : index
    %c0_65 = arith.constant 0 : index
    %165 = vector.load %arg14[%c0_64, %c0_65] : memref<64x128xbf16, #tpu.memory_space<vmem>>, vector<64x128xbf16>
    %c0_66 = arith.constant 0 : index
    %c0_67 = arith.constant 0 : index
    %166 = vector.load %arg15[%c0_66, %c0_67] : memref<128x128xbf16, #tpu.memory_space<vmem>>, vector<128x128xbf16>
    %c0_68 = arith.constant 0 : index
    %c0_69 = arith.constant 0 : index
    %167 = vector.load %arg16[%c0_68, %c0_69] : memref<1x128xf32, #tpu.memory_space<vmem>>, vector<1x128xf32>
    %168 = arith.truncf %162 : vector<16x128xf32> to vector<16x128xbf16>
    %cst_70 = arith.constant dense<0.000000e+00> : vector<16x128xf32>
    %169 = tpu.matmul %168, %163, %cst_70 {dimension_numbers = #tpu.dot_dimension_numbers<[1], [0], [0], [1], [0, 0, 1, 1], [], []>} : vector<16x128xbf16>, vector<128x128xbf16>, vector<16x128xf32> -> vector<16x128xf32>
    %170 = arith.truncf %3 : vector<8x64xf32> to vector<8x64xbf16>
    %cst_71 = arith.constant dense<0.000000e+00> : vector<8x128xf32>
    %171 = tpu.matmul %170, %164, %cst_71 {dimension_numbers = #tpu.dot_dimension_numbers<[1], [0], [0], [1], [0, 0, 1, 1], [], []>} : vector<8x64xbf16>, vector<64x128xbf16>, vector<8x128xf32> -> vector<8x128xf32>
    %172 = arith.truncf %3 : vector<8x64xf32> to vector<8x64xbf16>
    %cst_72 = arith.constant dense<0.000000e+00> : vector<8x128xf32>
    %173 = tpu.matmul %172, %165, %cst_72 {dimension_numbers = #tpu.dot_dimension_numbers<[1], [0], [0], [1], [0, 0, 1, 1], [], []>} : vector<8x64xbf16>, vector<64x128xbf16>, vector<8x128xf32> -> vector<8x128xf32>
    %cst_73 = arith.constant 0.000000e+00 : f32
    %174 = vector.broadcast %cst_73 : f32 to vector<16x128xf32>
    %175 = vector.extract_strided_slice %169 {offsets = [0, 0], sizes = [16, 32], strides = [1, 1]} : vector<16x128xf32> to vector<16x32xf32>
    %176 = arith.truncf %175 : vector<16x32xf32> to vector<16x32xbf16>
    %177 = vector.extract_strided_slice %171 {offsets = [0, 0], sizes = [8, 32], strides = [1, 1]} : vector<8x128xf32> to vector<8x32xf32>
    %178 = arith.truncf %177 : vector<8x32xf32> to vector<8x32xbf16>
    %179 = vector.extract_strided_slice %173 {offsets = [0, 0], sizes = [8, 32], strides = [1, 1]} : vector<8x128xf32> to vector<8x32xf32>
    %180 = arith.truncf %179 : vector<8x32xf32> to vector<8x32xbf16>
    %cst_74 = arith.constant dense<0.000000e+00> : vector<16x8xf32>
    %181 = tpu.matmul %176, %178, %cst_74 {dimension_numbers = #tpu.dot_dimension_numbers<[1], [1], [0], [0], [0, 0, 1, 0], [], []>} : vector<16x32xbf16>, vector<8x32xbf16>, vector<16x8xf32> -> vector<16x8xf32>
    %cst_75 = arith.constant 0.176776692 : f32
    %182 = vector.broadcast %cst_75 : f32 to vector<16x8xf32>
    %183 = arith.mulf %181, %182 : vector<16x8xf32>
    %cst_76 = arith.constant dense<0xFF800000> : vector<16xf32>
    %184 = vector.multi_reduction <maximumf>, %183, %cst_76 [1] : vector<16x8xf32> to vector<16xf32>
    %185 = vector.shape_cast %184 : vector<16xf32> to vector<16x1xf32>
    %186 = vector.broadcast %185 : vector<16x1xf32> to vector<16x8xf32>
    %187 = arith.subf %183, %186 : vector<16x8xf32>
    %188 = math.exp %187 : vector<16x8xf32>
    %cst_77 = arith.constant dense<0.000000e+00> : vector<16xf32>
    %189 = vector.multi_reduction <add>, %188, %cst_77 [1] : vector<16x8xf32> to vector<16xf32>
    %190 = vector.shape_cast %189 : vector<16xf32> to vector<16x1xf32>
    %191 = tpu.reciprocal %190 {approx = true} : vector<16x1xf32> -> vector<16x1xf32>
    %192 = vector.broadcast %191 : vector<16x1xf32> to vector<16x8xf32>
    %193 = arith.mulf %188, %192 : vector<16x8xf32>
    %194 = arith.truncf %193 : vector<16x8xf32> to vector<16x8xbf16>
    %cst_78 = arith.constant dense<0.000000e+00> : vector<16x32xf32>
    %195 = tpu.matmul %194, %180, %cst_78 {dimension_numbers = #tpu.dot_dimension_numbers<[1], [0], [0], [1], [0, 0, 1, 1], [], []>} : vector<16x8xbf16>, vector<8x32xbf16>, vector<16x32xf32> -> vector<16x32xf32>
    %196 = arith.truncf %195 : vector<16x32xf32> to vector<16x32xbf16>
    %197 = vector.extract_strided_slice %166 {offsets = [0, 0], sizes = [32, 128], strides = [1, 1]} : vector<128x128xbf16> to vector<32x128xbf16>
    %cst_79 = arith.constant dense<0.000000e+00> : vector<16x128xf32>
    %198 = tpu.matmul %196, %197, %cst_79 {dimension_numbers = #tpu.dot_dimension_numbers<[1], [0], [0], [1], [0, 0, 1, 1], [], []>} : vector<16x32xbf16>, vector<32x128xbf16>, vector<16x128xf32> -> vector<16x128xf32>
    %199 = arith.addf %174, %198 : vector<16x128xf32>
    %200 = vector.extract_strided_slice %169 {offsets = [0, 32], sizes = [16, 32], strides = [1, 1]} : vector<16x128xf32> to vector<16x32xf32>
    %201 = arith.truncf %200 : vector<16x32xf32> to vector<16x32xbf16>
    %202 = vector.extract_strided_slice %171 {offsets = [0, 32], sizes = [8, 32], strides = [1, 1]} : vector<8x128xf32> to vector<8x32xf32>
    %203 = arith.truncf %202 : vector<8x32xf32> to vector<8x32xbf16>
    %204 = vector.extract_strided_slice %173 {offsets = [0, 32], sizes = [8, 32], strides = [1, 1]} : vector<8x128xf32> to vector<8x32xf32>
    %205 = arith.truncf %204 : vector<8x32xf32> to vector<8x32xbf16>
    %cst_80 = arith.constant dense<0.000000e+00> : vector<16x8xf32>
    %206 = tpu.matmul %201, %203, %cst_80 {dimension_numbers = #tpu.dot_dimension_numbers<[1], [1], [0], [0], [0, 0, 1, 0], [], []>} : vector<16x32xbf16>, vector<8x32xbf16>, vector<16x8xf32> -> vector<16x8xf32>
    %cst_81 = arith.constant 0.176776692 : f32
    %207 = vector.broadcast %cst_81 : f32 to vector<16x8xf32>
    %208 = arith.mulf %206, %207 : vector<16x8xf32>
    %cst_82 = arith.constant dense<0xFF800000> : vector<16xf32>
    %209 = vector.multi_reduction <maximumf>, %208, %cst_82 [1] : vector<16x8xf32> to vector<16xf32>
    %210 = vector.shape_cast %209 : vector<16xf32> to vector<16x1xf32>
    %211 = vector.broadcast %210 : vector<16x1xf32> to vector<16x8xf32>
    %212 = arith.subf %208, %211 : vector<16x8xf32>
    %213 = math.exp %212 : vector<16x8xf32>
    %cst_83 = arith.constant dense<0.000000e+00> : vector<16xf32>
    %214 = vector.multi_reduction <add>, %213, %cst_83 [1] : vector<16x8xf32> to vector<16xf32>
    %215 = vector.shape_cast %214 : vector<16xf32> to vector<16x1xf32>
    %216 = tpu.reciprocal %215 {approx = true} : vector<16x1xf32> -> vector<16x1xf32>
    %217 = vector.broadcast %216 : vector<16x1xf32> to vector<16x8xf32>
    %218 = arith.mulf %213, %217 : vector<16x8xf32>
    %219 = arith.truncf %218 : vector<16x8xf32> to vector<16x8xbf16>
    %cst_84 = arith.constant dense<0.000000e+00> : vector<16x32xf32>
    %220 = tpu.matmul %219, %205, %cst_84 {dimension_numbers = #tpu.dot_dimension_numbers<[1], [0], [0], [1], [0, 0, 1, 1], [], []>} : vector<16x8xbf16>, vector<8x32xbf16>, vector<16x32xf32> -> vector<16x32xf32>
    %221 = arith.truncf %220 : vector<16x32xf32> to vector<16x32xbf16>
    %222 = vector.extract_strided_slice %166 {offsets = [32, 0], sizes = [32, 128], strides = [1, 1]} : vector<128x128xbf16> to vector<32x128xbf16>
    %cst_85 = arith.constant dense<0.000000e+00> : vector<16x128xf32>
    %223 = tpu.matmul %221, %222, %cst_85 {dimension_numbers = #tpu.dot_dimension_numbers<[1], [0], [0], [1], [0, 0, 1, 1], [], []>} : vector<16x32xbf16>, vector<32x128xbf16>, vector<16x128xf32> -> vector<16x128xf32>
    %224 = arith.addf %199, %223 : vector<16x128xf32>
    %225 = vector.extract_strided_slice %169 {offsets = [0, 64], sizes = [16, 32], strides = [1, 1]} : vector<16x128xf32> to vector<16x32xf32>
    %226 = arith.truncf %225 : vector<16x32xf32> to vector<16x32xbf16>
    %227 = vector.extract_strided_slice %171 {offsets = [0, 64], sizes = [8, 32], strides = [1, 1]} : vector<8x128xf32> to vector<8x32xf32>
    %228 = arith.truncf %227 : vector<8x32xf32> to vector<8x32xbf16>
    %229 = vector.extract_strided_slice %173 {offsets = [0, 64], sizes = [8, 32], strides = [1, 1]} : vector<8x128xf32> to vector<8x32xf32>
    %230 = arith.truncf %229 : vector<8x32xf32> to vector<8x32xbf16>
    %cst_86 = arith.constant dense<0.000000e+00> : vector<16x8xf32>
    %231 = tpu.matmul %226, %228, %cst_86 {dimension_numbers = #tpu.dot_dimension_numbers<[1], [1], [0], [0], [0, 0, 1, 0], [], []>} : vector<16x32xbf16>, vector<8x32xbf16>, vector<16x8xf32> -> vector<16x8xf32>
    %cst_87 = arith.constant 0.176776692 : f32
    %232 = vector.broadcast %cst_87 : f32 to vector<16x8xf32>
    %233 = arith.mulf %231, %232 : vector<16x8xf32>
    %cst_88 = arith.constant dense<0xFF800000> : vector<16xf32>
    %234 = vector.multi_reduction <maximumf>, %233, %cst_88 [1] : vector<16x8xf32> to vector<16xf32>
    %235 = vector.shape_cast %234 : vector<16xf32> to vector<16x1xf32>
    %236 = vector.broadcast %235 : vector<16x1xf32> to vector<16x8xf32>
    %237 = arith.subf %233, %236 : vector<16x8xf32>
    %238 = math.exp %237 : vector<16x8xf32>
    %cst_89 = arith.constant dense<0.000000e+00> : vector<16xf32>
    %239 = vector.multi_reduction <add>, %238, %cst_89 [1] : vector<16x8xf32> to vector<16xf32>
    %240 = vector.shape_cast %239 : vector<16xf32> to vector<16x1xf32>
    %241 = tpu.reciprocal %240 {approx = true} : vector<16x1xf32> -> vector<16x1xf32>
    %242 = vector.broadcast %241 : vector<16x1xf32> to vector<16x8xf32>
    %243 = arith.mulf %238, %242 : vector<16x8xf32>
    %244 = arith.truncf %243 : vector<16x8xf32> to vector<16x8xbf16>
    %cst_90 = arith.constant dense<0.000000e+00> : vector<16x32xf32>
    %245 = tpu.matmul %244, %230, %cst_90 {dimension_numbers = #tpu.dot_dimension_numbers<[1], [0], [0], [1], [0, 0, 1, 1], [], []>} : vector<16x8xbf16>, vector<8x32xbf16>, vector<16x32xf32> -> vector<16x32xf32>
    %246 = arith.truncf %245 : vector<16x32xf32> to vector<16x32xbf16>
    %247 = vector.extract_strided_slice %166 {offsets = [64, 0], sizes = [32, 128], strides = [1, 1]} : vector<128x128xbf16> to vector<32x128xbf16>
    %cst_91 = arith.constant dense<0.000000e+00> : vector<16x128xf32>
    %248 = tpu.matmul %246, %247, %cst_91 {dimension_numbers = #tpu.dot_dimension_numbers<[1], [0], [0], [1], [0, 0, 1, 1], [], []>} : vector<16x32xbf16>, vector<32x128xbf16>, vector<16x128xf32> -> vector<16x128xf32>
    %249 = arith.addf %224, %248 : vector<16x128xf32>
    %250 = vector.extract_strided_slice %169 {offsets = [0, 96], sizes = [16, 32], strides = [1, 1]} : vector<16x128xf32> to vector<16x32xf32>
    %251 = arith.truncf %250 : vector<16x32xf32> to vector<16x32xbf16>
    %252 = vector.extract_strided_slice %171 {offsets = [0, 96], sizes = [8, 32], strides = [1, 1]} : vector<8x128xf32> to vector<8x32xf32>
    %253 = arith.truncf %252 : vector<8x32xf32> to vector<8x32xbf16>
    %254 = vector.extract_strided_slice %173 {offsets = [0, 96], sizes = [8, 32], strides = [1, 1]} : vector<8x128xf32> to vector<8x32xf32>
    %255 = arith.truncf %254 : vector<8x32xf32> to vector<8x32xbf16>
    %cst_92 = arith.constant dense<0.000000e+00> : vector<16x8xf32>
    %256 = tpu.matmul %251, %253, %cst_92 {dimension_numbers = #tpu.dot_dimension_numbers<[1], [1], [0], [0], [0, 0, 1, 0], [], []>} : vector<16x32xbf16>, vector<8x32xbf16>, vector<16x8xf32> -> vector<16x8xf32>
    %cst_93 = arith.constant 0.176776692 : f32
    %257 = vector.broadcast %cst_93 : f32 to vector<16x8xf32>
    %258 = arith.mulf %256, %257 : vector<16x8xf32>
    %cst_94 = arith.constant dense<0xFF800000> : vector<16xf32>
    %259 = vector.multi_reduction <maximumf>, %258, %cst_94 [1] : vector<16x8xf32> to vector<16xf32>
    %260 = vector.shape_cast %259 : vector<16xf32> to vector<16x1xf32>
    %261 = vector.broadcast %260 : vector<16x1xf32> to vector<16x8xf32>
    %262 = arith.subf %258, %261 : vector<16x8xf32>
    %263 = math.exp %262 : vector<16x8xf32>
    %cst_95 = arith.constant dense<0.000000e+00> : vector<16xf32>
    %264 = vector.multi_reduction <add>, %263, %cst_95 [1] : vector<16x8xf32> to vector<16xf32>
    %265 = vector.shape_cast %264 : vector<16xf32> to vector<16x1xf32>
    %266 = tpu.reciprocal %265 {approx = true} : vector<16x1xf32> -> vector<16x1xf32>
    %267 = vector.broadcast %266 : vector<16x1xf32> to vector<16x8xf32>
    %268 = arith.mulf %263, %267 : vector<16x8xf32>
    %269 = arith.truncf %268 : vector<16x8xf32> to vector<16x8xbf16>
    %cst_96 = arith.constant dense<0.000000e+00> : vector<16x32xf32>
    %270 = tpu.matmul %269, %255, %cst_96 {dimension_numbers = #tpu.dot_dimension_numbers<[1], [0], [0], [1], [0, 0, 1, 1], [], []>} : vector<16x8xbf16>, vector<8x32xbf16>, vector<16x32xf32> -> vector<16x32xf32>
    %271 = arith.truncf %270 : vector<16x32xf32> to vector<16x32xbf16>
    %272 = vector.extract_strided_slice %166 {offsets = [96, 0], sizes = [32, 128], strides = [1, 1]} : vector<128x128xbf16> to vector<32x128xbf16>
    %cst_97 = arith.constant dense<0.000000e+00> : vector<16x128xf32>
    %273 = tpu.matmul %271, %272, %cst_97 {dimension_numbers = #tpu.dot_dimension_numbers<[1], [0], [0], [1], [0, 0, 1, 1], [], []>} : vector<16x32xbf16>, vector<32x128xbf16>, vector<16x128xf32> -> vector<16x128xf32>
    %274 = arith.addf %249, %273 : vector<16x128xf32>
    %275 = vector.broadcast %167 : vector<1x128xf32> to vector<16x128xf32>
    %276 = arith.addf %274, %275 : vector<16x128xf32>
    %277 = arith.addf %276, %140 : vector<16x128xf32>
    %c0_98 = arith.constant 0 : index
    %c0_99 = arith.constant 0 : index
    %278 = vector.load %arg17[%c0_98, %c0_99] : memref<1x128xf32, #tpu.memory_space<vmem>>, vector<1x128xf32>
    %c0_100 = arith.constant 0 : index
    %c0_101 = arith.constant 0 : index
    %279 = vector.load %arg18[%c0_100, %c0_101] : memref<1x128xf32, #tpu.memory_space<vmem>>, vector<1x128xf32>
    %cst_102 = arith.constant dense<0.000000e+00> : vector<16xf32>
    %280 = vector.multi_reduction <add>, %277, %cst_102 [1] : vector<16x128xf32> to vector<16xf32>
    %281 = vector.shape_cast %280 : vector<16xf32> to vector<16x1xf32>
    %cst_103 = arith.constant 1.280000e+02 : f32
    %282 = vector.broadcast %cst_103 : f32 to vector<16x1xf32>
    %283 = arith.divf %281, %282 : vector<16x1xf32>
    %284 = vector.broadcast %283 : vector<16x1xf32> to vector<16x128xf32>
    %285 = arith.subf %277, %284 : vector<16x128xf32>
    %286 = arith.mulf %285, %285 : vector<16x128xf32>
    %cst_104 = arith.constant dense<0.000000e+00> : vector<16xf32>
    %287 = vector.multi_reduction <add>, %286, %cst_104 [1] : vector<16x128xf32> to vector<16xf32>
    %288 = vector.shape_cast %287 : vector<16xf32> to vector<16x1xf32>
    %cst_105 = arith.constant 1.280000e+02 : f32
    %289 = vector.broadcast %cst_105 : f32 to vector<16x1xf32>
    %290 = arith.divf %288, %289 : vector<16x1xf32>
    %cst_106 = arith.constant 9.99999974E-6 : f32
    %291 = vector.broadcast %cst_106 : f32 to vector<16x1xf32>
    %292 = arith.addf %290, %291 : vector<16x1xf32>
    %293 = math.rsqrt %292 : vector<16x1xf32>
    %294 = vector.broadcast %293 : vector<16x1xf32> to vector<16x128xf32>
    %295 = arith.mulf %285, %294 : vector<16x128xf32>
    %296 = vector.broadcast %278 : vector<1x128xf32> to vector<16x128xf32>
    %297 = arith.mulf %295, %296 : vector<16x128xf32>
    %298 = vector.broadcast %279 : vector<1x128xf32> to vector<16x128xf32>
    %299 = arith.addf %297, %298 : vector<16x128xf32>
    %300 = arith.truncf %299 : vector<16x128xf32> to vector<16x128xbf16>
    %c0_107 = arith.constant 0 : index
    %c0_108 = arith.constant 0 : index
    %301 = vector.load %arg19[%c0_107, %c0_108] : memref<128x1024xbf16, #tpu.memory_space<vmem>>, vector<128x1024xbf16>
    %cst_109 = arith.constant dense<0.000000e+00> : vector<16x1024xf32>
    %302 = tpu.matmul %300, %301, %cst_109 {dimension_numbers = #tpu.dot_dimension_numbers<[1], [0], [0], [1], [0, 0, 1, 1], [], []>} : vector<16x128xbf16>, vector<128x1024xbf16>, vector<16x1024xf32> -> vector<16x1024xf32>
    %c0_110 = arith.constant 0 : index
    %c0_111 = arith.constant 0 : index
    %303 = vector.load %arg20[%c0_110, %c0_111] : memref<1x1024xf32, #tpu.memory_space<vmem>>, vector<1x1024xf32>
    %304 = vector.broadcast %303 : vector<1x1024xf32> to vector<16x1024xf32>
    %305 = arith.addf %302, %304 : vector<16x1024xf32>
    %306 = vector.extract_strided_slice %305 {offsets = [0, 0], sizes = [16, 512], strides = [1, 1]} : vector<16x1024xf32> to vector<16x512xf32>
    %307 = vector.extract_strided_slice %305 {offsets = [0, 512], sizes = [16, 512], strides = [1, 1]} : vector<16x1024xf32> to vector<16x512xf32>
    %cst_112 = arith.constant 5.000000e-01 : f32
    %308 = vector.broadcast %cst_112 : f32 to vector<16x512xf32>
    %309 = arith.mulf %308, %307 : vector<16x512xf32>
    %cst_113 = arith.constant 4.471500e-02 : f32
    %310 = vector.broadcast %cst_113 : f32 to vector<16x512xf32>
    %311 = arith.mulf %310, %307 : vector<16x512xf32>
    %312 = arith.mulf %311, %307 : vector<16x512xf32>
    %313 = arith.mulf %312, %307 : vector<16x512xf32>
    %314 = arith.addf %307, %313 : vector<16x512xf32>
    %cst_114 = arith.constant 0.797884583 : f32
    %315 = vector.broadcast %cst_114 : f32 to vector<16x512xf32>
    %316 = arith.mulf %315, %314 : vector<16x512xf32>
    %317 = math.tanh %316 : vector<16x512xf32>
    %cst_115 = arith.constant 1.000000e+00 : f32
    %318 = vector.broadcast %cst_115 : f32 to vector<16x512xf32>
    %319 = arith.addf %318, %317 : vector<16x512xf32>
    %320 = arith.mulf %309, %319 : vector<16x512xf32>
    %321 = arith.mulf %306, %320 : vector<16x512xf32>
    %322 = arith.truncf %321 : vector<16x512xf32> to vector<16x512xbf16>
    %c0_116 = arith.constant 0 : index
    %c0_117 = arith.constant 0 : index
    %323 = vector.load %arg21[%c0_116, %c0_117] : memref<512x128xbf16, #tpu.memory_space<vmem>>, vector<512x128xbf16>
    %cst_118 = arith.constant dense<0.000000e+00> : vector<16x128xf32>
    %324 = tpu.matmul %322, %323, %cst_118 {dimension_numbers = #tpu.dot_dimension_numbers<[1], [0], [0], [1], [0, 0, 1, 1], [], []>} : vector<16x512xbf16>, vector<512x128xbf16>, vector<16x128xf32> -> vector<16x128xf32>
    %c0_119 = arith.constant 0 : index
    %c0_120 = arith.constant 0 : index
    %325 = vector.load %arg22[%c0_119, %c0_120] : memref<1x128xf32, #tpu.memory_space<vmem>>, vector<1x128xf32>
    %326 = vector.broadcast %325 : vector<1x128xf32> to vector<16x128xf32>
    %327 = arith.addf %324, %326 : vector<16x128xf32>
    %328 = arith.addf %327, %277 : vector<16x128xf32>
    %c0_121 = arith.constant 0 : index
    %c0_122 = arith.constant 0 : index
    %c0_123 = arith.constant 0 : index
    %329 = vector.load %arg23[%c0_121, %c0_122, %c0_123] : memref<1x16x128xf32, #tpu.memory_space<vmem>>, vector<1x16x128xf32>
    %330 = vector.shape_cast %329 : vector<1x16x128xf32> to vector<16x128xf32>
    %331 = vector.shape_cast %328 : vector<16x128xf32> to vector<1x16x128xf32>
    tpu.vector_store %arg23[%c0_121, %c0_122, %c0_123], %331 {strides = array<i32>} : memref<1x16x128xf32, #tpu.memory_space<vmem>>, vector<1x16x128xf32>,
    return
  }
  func.func @transform_0(%arg0: i32) -> (i32, i32, i32) {
    %c0_i32 = arith.constant 0 : i32
    %c0_i32_0 = arith.constant 0 : i32
    %c0_i32_1 = arith.constant 0 : i32
    return %arg0, %c0_i32, %c0_i32_0 : i32, i32, i32
  }
  func.func @transform_1(%arg0: i32) -> (i32, i32, i32) {
    %c0_i32 = arith.constant 0 : i32
    %c0_i32_0 = arith.constant 0 : i32
    %c0_i32_1 = arith.constant 0 : i32
    return %arg0, %c0_i32, %c0_i32_0 : i32, i32, i32
  }
  func.func @transform_2(%arg0: i32) -> (i32, i32) {
    %c0_i32 = arith.constant 0 : i32
    %c0_i32_0 = arith.constant 0 : i32
    %c0_i32_1 = arith.constant 0 : i32
    return %c0_i32, %c0_i32_0 : i32, i32
  }
  func.func @transform_3(%arg0: i32) -> (i32, i32) {
    %c0_i32 = arith.constant 0 : i32
    %c0_i32_0 = arith.constant 0 : i32
    %c0_i32_1 = arith.constant 0 : i32
    return %c0_i32, %c0_i32_0 : i32, i32
  }
  func.func @transform_4(%arg0: i32) -> (i32, i32) {
    %c0_i32 = arith.constant 0 : i32
    %c0_i32_0 = arith.constant 0 : i32
    %c0_i32_1 = arith.constant 0 : i32
    return %c0_i32, %c0_i32_0 : i32, i32
  }
  func.func @transform_5(%arg0: i32) -> (i32, i32) {
    %c0_i32 = arith.constant 0 : i32
    %c0_i32_0 = arith.constant 0 : i32
    %c0_i32_1 = arith.constant 0 : i32
    return %c0_i32, %c0_i32_0 : i32, i32
  }
  func.func @transform_6(%arg0: i32) -> (i32, i32) {
    %c0_i32 = arith.constant 0 : i32
    %c0_i32_0 = arith.constant 0 : i32
    %c0_i32_1 = arith.constant 0 : i32
    return %c0_i32, %c0_i32_0 : i32, i32
  }
  func.func @transform_7(%arg0: i32) -> (i32, i32) {
    %c0_i32 = arith.constant 0 : i32
    %c0_i32_0 = arith.constant 0 : i32
    %c0_i32_1 = arith.constant 0 : i32
    return %c0_i32, %c0_i32_0 : i32, i32
  }
  func.func @transform_8(%arg0: i32) -> (i32, i32) {
    %c0_i32 = arith.constant 0 : i32
    %c0_i32_0 = arith.constant 0 : i32
    %c0_i32_1 = arith.constant 0 : i32
    return %c0_i32, %c0_i32_0 : i32, i32
  }
  func.func @transform_9(%arg0: i32) -> (i32, i32) {
    %c0_i32 = arith.constant 0 : i32
    %c0_i32_0 = arith.constant 0 : i32
    %c0_i32_1 = arith.constant 0 : i32
    return %c0_i32, %c0_i32_0 : i32, i32
  }
  func.func @transform_10(%arg0: i32) -> (i32, i32) {
    %c0_i32 = arith.constant 0 : i32
    %c0_i32_0 = arith.constant 0 : i32
    %c0_i32_1 = arith.constant 0 : i32
    return %c0_i32, %c0_i32_0 : i32, i32
  }
  func.func @transform_11(%arg0: i32) -> (i32, i32) {
    %c0_i32 = arith.constant 0 : i32
    %c0_i32_0 = arith.constant 0 : i32
    %c0_i32_1 = arith.constant 0 : i32
    return %c0_i32, %c0_i32_0 : i32, i32
  }
  func.func @transform_12(%arg0: i32) -> (i32, i32) {
    %c0_i32 = arith.constant 0 : i32
    %c0_i32_0 = arith.constant 0 : i32
    %c0_i32_1 = arith.constant 0 : i32
    return %c0_i32, %c0_i32_0 : i32, i32
  }
  func.func @transform_13(%arg0: i32) -> (i32, i32) {
    %c0_i32 = arith.constant 0 : i32
    %c0_i32_0 = arith.constant 0 : i32
    %c0_i32_1 = arith.constant 0 : i32
    return %c0_i32, %c0_i32_0 : i32, i32
  }
  func.func @transform_14(%arg0: i32) -> (i32, i32) {
    %c0_i32 = arith.constant 0 : i32
    %c0_i32_0 = arith.constant 0 : i32
    %c0_i32_1 = arith.constant 0 : i32
    return %c0_i32, %c0_i32_0 : i32, i32
  }
  func.func @transform_15(%arg0: i32) -> (i32, i32) {
    %c0_i32 = arith.constant 0 : i32
    %c0_i32_0 = arith.constant 0 : i32
    %c0_i32_1 = arith.constant 0 : i32
    return %c0_i32, %c0_i32_0 : i32, i32
  }
  func.func @transform_16(%arg0: i32) -> (i32, i32) {
    %c0_i32 = arith.constant 0 : i32
    %c0_i32_0 = arith.constant 0 : i32
    %c0_i32_1 = arith.constant 0 : i32
    return %c0_i32, %c0_i32_0 : i32, i32
  }
  func.func @transform_17(%arg0: i32) -> (i32, i32) {
    %c0_i32 = arith.constant 0 : i32
    %c0_i32_0 = arith.constant 0 : i32
    %c0_i32_1 = arith.constant 0 : i32
    return %c0_i32, %c0_i32_0 : i32, i32
  }
  func.func @transform_18(%arg0: i32) -> (i32, i32) {
    %c0_i32 = arith.constant 0 : i32
    %c0_i32_0 = arith.constant 0 : i32
    %c0_i32_1 = arith.constant 0 : i32
    return %c0_i32, %c0_i32_0 : i32, i32
  }
  func.func @transform_19(%arg0: i32) -> (i32, i32) {
    %c0_i32 = arith.constant 0 : i32
    %c0_i32_0 = arith.constant 0 : i32
    %c0_i32_1 = arith.constant 0 : i32
    return %c0_i32, %c0_i32_0 : i32, i32
  }
  func.func @transform_20(%arg0: i32) -> (i32, i32) {
    %c0_i32 = arith.constant 0 : i32
    %c0_i32_0 = arith.constant 0 : i32
    %c0_i32_1 = arith.constant 0 : i32
    return %c0_i32, %c0_i32_0 : i32, i32
  }
  func.func @transform_21(%arg0: i32) -> (i32, i32) {
    %c0_i32 = arith.constant 0 : i32
    %c0_i32_0 = arith.constant 0 : i32
    %c0_i32_1 = arith.constant 0 : i32
    return %c0_i32, %c0_i32_0 : i32, i32
  }
  func.func @transform_22(%arg0: i32) -> (i32, i32, i32) {
    %c0_i32 = arith.constant 0 : i32
    %c0_i32_0 = arith.constant 0 : i32
    %c0_i32_1 = arith.constant 0 : i32
    return %arg0, %c0_i32, %c0_i32_0 : i32, i32, i32
  }
}

</mosaic_0001>

<llo_original>
// kernel: basic_transformer_block.1
$region0: #{basic_transformer_block.1}
  #allocation0 [shape = 'u32[]', space=smem, size = 0x4, offset = 0x4, fixed_abs, tag = 'smem constant byte address 0x4 - core index']
  #allocation1 [shape = 'u32[72,128]{1,0:T(1,128)}', space=vmem, size = 0x9000, scoped, tag = 'internal scratch']
  %s0 = inlined_call_operand.vmem [shape: f32[2,16,128], index: 0, kind: input, shape index: {}]
  %s1 = inlined_call_operand.vmem [shape: f32[2,8,64], index: 1, kind: input, shape index: {}]
  %s2 = inlined_call_operand.vmem [shape: f32[1,128], index: 2, kind: input, shape index: {}]
  %s3 = inlined_call_operand.vmem [shape: f32[1,128], index: 3, kind: input, shape index: {}]
  %s4 = inlined_call_operand.vmem [shape: bf16[128,128], index: 4, kind: input, shape index: {}]
  %s5 = inlined_call_operand.vmem [shape: bf16[128,128], index: 5, kind: input, shape index: {}]
  %s6 = inlined_call_operand.vmem [shape: bf16[128,128], index: 6, kind: input, shape index: {}]
  %s7 = inlined_call_operand.vmem [shape: bf16[128,128], index: 7, kind: input, shape index: {}]
  %s8 = inlined_call_operand.vmem [shape: f32[1,128], index: 8, kind: input, shape index: {}]
  %s9 = inlined_call_operand.vmem [shape: f32[1,128], index: 9, kind: input, shape index: {}]
  %s10 = inlined_call_operand.vmem [shape: f32[1,128], index: 10, kind: input, shape index: {}]
  %s11 = inlined_call_operand.vmem [shape: bf16[128,128], index: 11, kind: input, shape index: {}]
  %s12 = inlined_call_operand.vmem [shape: bf16[64,128], index: 12, kind: input, shape index: {}]
  %s13 = inlined_call_operand.vmem [shape: bf16[64,128], index: 13, kind: input, shape index: {}]
  %s14 = inlined_call_operand.vmem [shape: bf16[128,128], index: 14, kind: input, shape index: {}]
  %s15 = inlined_call_operand.vmem [shape: f32[1,128], index: 15, kind: input, shape index: {}]
  %s16 = inlined_call_operand.vmem [shape: f32[1,128], index: 16, kind: input, shape index: {}]
  %s17 = inlined_call_operand.vmem [shape: f32[1,128], index: 17, kind: input, shape index: {}]
  %s18 = inlined_call_operand.vmem [shape: bf16[128,1024], index: 18, kind: input, shape index: {}]
  %s19 = inlined_call_operand.vmem [shape: f32[1,1024], index: 19, kind: input, shape index: {}]
  %s20 = inlined_call_operand.vmem [shape: bf16[512,128], index: 20, kind: input, shape index: {}]
  %s21 = inlined_call_operand.vmem [shape: f32[1,128], index: 21, kind: input, shape index: {}]
  %s22 = inlined_call_operand.hbm [shape: f32[2,16,128], index: 22, kind: output, shape index: {}]
  %s23 = sld [smem:[#allocation0]]
  $region121: #{basic_transformer_block.1} parent=0
    _
  %s25 = ssub.s32 1, %s23
  %s26 = scalar_select 0, %s25, %s23
  $region1: #{basic_transformer_block.1} parent=0
    #allocation2 [shape = 'u8[16384]{0}', space=vmem, size = 0x4000, scoped, tag = 'output window, operand 0']
    #allocation3 [shape = 's32[2]{0}', space=sflag, size = 0x8, scoped, tag = 'scoped memory for basic_transformer_block.1']
    %27 = vsyncpa [#allocation3], 0
    %s28 = scalar_lea.sflag [#allocation3], 1
    %29 = vsyncpa %s28, 0
    loop: start=0, step=1, limit=4
    $region2: #{basic_transformer_block.1} parent=1 // loop_pre_header
      _
    $region3: #{basic_transformer_block.1} parent=1 // loop_header
      %s31 = sphi 0, %s35
      %p32 = scmp.ge.s32.totalorder %s31, 4
      %s41 = sphi 0, %s43
      %s44 = sphi 0, %s41
      %s45 = sphi 0, %s44
      %s61 = sphi 0, %s45
      %s67 = sphi 0, %s69
      %s70 = sphi 0, %s67
      %s71 = sphi 0, %s70
      %s87 = sphi 0, %s71
      %s91 = sphi 0, %s91
      %s93 = sphi 0, %s91
      %s94 = sphi 0, %s93
      %s108 = sphi 0, %s94
      %s112 = sphi 0, %s112
      %s114 = sphi 0, %s112
      %s115 = sphi 0, %s114
      %s129 = sphi 0, %s115
      %s133 = sphi 0, %s133
      %s135 = sphi 0, %s133
      %s136 = sphi 0, %s135
      %s150 = sphi 0, %s136
      %s154 = sphi 0, %s154
      %s156 = sphi 0, %s154
      %s157 = sphi 0, %s156
      %s171 = sphi 0, %s157
      %s175 = sphi 0, %s175
      %s177 = sphi 0, %s175
      %s178 = sphi 0, %s177
      %s192 = sphi 0, %s178
      %s196 = sphi 0, %s196
      %s198 = sphi 0, %s196
      %s199 = sphi 0, %s198
      %s213 = sphi 0, %s199
      %s217 = sphi 0, %s217
      %s219 = sphi 0, %s217
      %s220 = sphi 0, %s219
      %s234 = sphi 0, %s220
      %s238 = sphi 0, %s238
      %s240 = sphi 0, %s238
      %s241 = sphi 0, %s240
      %s255 = sphi 0, %s241
      %s259 = sphi 0, %s259
      %s261 = sphi 0, %s259
      %s262 = sphi 0, %s261
      %s276 = sphi 0, %s262
      %s280 = sphi 0, %s280
      %s282 = sphi 0, %s280
      %s283 = sphi 0, %s282
      %s297 = sphi 0, %s283
      %s301 = sphi 0, %s301
      %s303 = sphi 0, %s301
      %s304 = sphi 0, %s303
      %s318 = sphi 0, %s304
      %s322 = sphi 0, %s322
      %s324 = sphi 0, %s322
      %s325 = sphi 0, %s324
      %s339 = sphi 0, %s325
      %s343 = sphi 0, %s343
      %s345 = sphi 0, %s343
      %s346 = sphi 0, %s345
      %s360 = sphi 0, %s346
      %s364 = sphi 0, %s364
      %s366 = sphi 0, %s364
      %s367 = sphi 0, %s366
      %s381 = sphi 0, %s367
      %s385 = sphi 0, %s385
      %s387 = sphi 0, %s385
      %s388 = sphi 0, %s387
      %s402 = sphi 0, %s388
      %s406 = sphi 0, %s406
      %s408 = sphi 0, %s406
      %s409 = sphi 0, %s408
      %s423 = sphi 0, %s409
      %s427 = sphi 0, %s427
      %s429 = sphi 0, %s427
      %s430 = sphi 0, %s429
      %s444 = sphi 0, %s430
      %s448 = sphi 0, %s448
      %s450 = sphi 0, %s448
      %s451 = sphi 0, %s450
      %s465 = sphi 0, %s451
      %s469 = sphi 0, %s469
      %s471 = sphi 0, %s469
      %s472 = sphi 0, %s471
      %s486 = sphi 0, %s472
      %s490 = sphi 0, %s490
      %s492 = sphi 0, %s490
      %s493 = sphi 0, %s492
      %s507 = sphi 0, %s493
      %s513 = sphi 0, %s515
      %s516 = sphi 0, %s513
      %s517 = sphi 0, %s516
      %s533 = sphi 0, %s517
    $region4: #{basic_transformer_block.1} parent=1 // loop_header_branch
      %34 = sbr.rel (%p32) target = $region8
    $region5: #{basic_transformer_block.1} parent=1 // loop_body
      %s36 = ssub.s32 %s31, 1
      %s37 = ssub.s32 %s31, 2
      %s38 = sadd.s32 %s31, 1
      %s39 = ssub.s32 %s31, %s38
      %p40 = scmp.eq.s32.totalorder %s39, 0
      %s42 = sadd.s32 %s41, 1
      %s43 = scalar_select %p40, %s41, %s42
      %p46 = pneg %p40
      %p47 = scmp.eq.s32.totalorder %s31, 1
      %p48 = por %p46, %p47
      %p49 = scmp.ne.s32.totalorder %s41, %s44
      %p50 = scmp.eq.s32.totalorder %s31, 0
      %p51 = por %p49, %p50
      %p52 = scmp.ne.s32.totalorder %s41, %s44
      %p53 = scmp.eq.s32.totalorder %s36, 1
      %p54 = por %p52, %p53
      %p55 = scmp.ne.s32.totalorder %s44, %s45
      %p56 = scmp.eq.s32.totalorder %s36, 0
      %p57 = por %p55, %p56
      %p58 = scmp.ne.s32.totalorder %s44, %s45
      %p59 = scmp.eq.s32.totalorder %s37, 1
      %p60 = por %p58, %p59
      %p62 = scmp.ne.s32.totalorder %s45, %s61
      %p63 = scmp.eq.s32.totalorder %s37, 0
      %p64 = por %p62, %p63
      %s65 = ssub.s32 %s31, %s38
      %p66 = scmp.eq.s32.totalorder %s65, 0
      %s68 = sadd.s32 %s67, 1
      %s69 = scalar_select %p66, %s67, %s68
      %p72 = pneg %p66
      %p73 = scmp.eq.s32.totalorder %s31, 1
      %p74 = por %p72, %p73
      %p75 = scmp.ne.s32.totalorder %s67, %s70
      %p76 = scmp.eq.s32.totalorder %s31, 0
      %p77 = por %p75, %p76
      %p78 = scmp.ne.s32.totalorder %s67, %s70
      %p79 = scmp.eq.s32.totalorder %s36, 1
      %p80 = por %p78, %p79
      %p81 = scmp.ne.s32.totalorder %s70, %s71
      %p82 = scmp.eq.s32.totalorder %s36, 0
      %p83 = por %p81, %p82
      %p84 = scmp.ne.s32.totalorder %s70, %s71
      %p85 = scmp.eq.s32.totalorder %s37, 1
      %p86 = por %p84, %p85
      %p88 = scmp.ne.s32.totalorder %s71, %s87
      %p89 = scmp.eq.s32.totalorder %s37, 0
      %p90 = por %p88, %p89
      %s92 = sadd.s32 %s91, 1
      %p95 = scmp.eq.s32.totalorder %s31, 1
      %p96 = scmp.ne.s32.totalorder %s91, %s93
      %p97 = scmp.eq.s32.totalorder %s31, 0
      %p98 = por %p96, %p97
      %p99 = scmp.ne.s32.totalorder %s91, %s93
      %p100 = scmp.eq.s32.totalorder %s36, 1
      %p101 = por %p99, %p100
      %p102 = scmp.ne.s32.totalorder %s93, %s94
      %p103 = scmp.eq.s32.totalorder %s36, 0
      %p104 = por %p102, %p103
      %p105 = scmp.ne.s32.totalorder %s93, %s94
      %p106 = scmp.eq.s32.totalorder %s37, 1
      %p107 = por %p105, %p106
      %p109 = scmp.ne.s32.totalorder %s94, %s108
      %p110 = scmp.eq.s32.totalorder %s37, 0
      %p111 = por %p109, %p110
      %s113 = sadd.s32 %s112, 1
      %p116 = scmp.eq.s32.totalorder %s31, 1
      %p117 = scmp.ne.s32.totalorder %s112, %s114
      %p118 = scmp.eq.s32.totalorder %s31, 0
      %p119 = por %p117, %p118
      %p120 = scmp.ne.s32.totalorder %s112, %s114
      %p121 = scmp.eq.s32.totalorder %s36, 1
      %p122 = por %p120, %p121
      %p123 = scmp.ne.s32.totalorder %s114, %s115
      %p124 = scmp.eq.s32.totalorder %s36, 0
      %p125 = por %p123, %p124
      %p126 = scmp.ne.s32.totalorder %s114, %s115
      %p127 = scmp.eq.s32.totalorder %s37, 1
      %p128 = por %p126, %p127
      %p130 = scmp.ne.s32.totalorder %s115, %s129
      %p131 = scmp.eq.s32.totalorder %s37, 0
      %p132 = por %p130, %p131
      %s134 = sadd.s32 %s133, 1
      %p137 = scmp.eq.s32.totalorder %s31, 1
      %p138 = scmp.ne.s32.totalorder %s133, %s135
      %p139 = scmp.eq.s32.totalorder %s31, 0
      %p140 = por %p138, %p139
      %p141 = scmp.ne.s32.totalorder %s133, %s135
      %p142 = scmp.eq.s32.totalorder %s36, 1
      %p143 = por %p141, %p142
      %p144 = scmp.ne.s32.totalorder %s135, %s136
      %p145 = scmp.eq.s32.totalorder %s36, 0
      %p146 = por %p144, %p145
      %p147 = scmp.ne.s32.totalorder %s135, %s136
      %p148 = scmp.eq.s32.totalorder %s37, 1
      %p149 = por %p147, %p148
      %p151 = scmp.ne.s32.totalorder %s136, %s150
      %p152 = scmp.eq.s32.totalorder %s37, 0
      %p153 = por %p151, %p152
      %s155 = sadd.s32 %s154, 1
      %p158 = scmp.eq.s32.totalorder %s31, 1
      %p159 = scmp.ne.s32.totalorder %s154, %s156
      %p160 = scmp.eq.s32.totalorder %s31, 0
      %p161 = por %p159, %p160
      %p162 = scmp.ne.s32.totalorder %s154, %s156
      %p163 = scmp.eq.s32.totalorder %s36, 1
      %p164 = por %p162, %p163
      %p165 = scmp.ne.s32.totalorder %s156, %s157
      %p166 = scmp.eq.s32.totalorder %s36, 0
      %p167 = por %p165, %p166
      %p168 = scmp.ne.s32.totalorder %s156, %s157
      %p169 = scmp.eq.s32.totalorder %s37, 1
      %p170 = por %p168, %p169
      %p172 = scmp.ne.s32.totalorder %s157, %s171
      %p173 = scmp.eq.s32.totalorder %s37, 0
      %p174 = por %p172, %p173
      %s176 = sadd.s32 %s175, 1
      %p179 = scmp.eq.s32.totalorder %s31, 1
      %p180 = scmp.ne.s32.totalorder %s175, %s177
      %p181 = scmp.eq.s32.totalorder %s31, 0
      %p182 = por %p180, %p181
      %p183 = scmp.ne.s32.totalorder %s175, %s177
      %p184 = scmp.eq.s32.totalorder %s36, 1
      %p185 = por %p183, %p184
      %p186 = scmp.ne.s32.totalorder %s177, %s178
      %p187 = scmp.eq.s32.totalorder %s36, 0
      %p188 = por %p186, %p187
      %p189 = scmp.ne.s32.totalorder %s177, %s178
      %p190 = scmp.eq.s32.totalorder %s37, 1
      %p191 = por %p189, %p190
      %p193 = scmp.ne.s32.totalorder %s178, %s192
      %p194 = scmp.eq.s32.totalorder %s37, 0
      %p195 = por %p193, %p194
      %s197 = sadd.s32 %s196, 1
      %p200 = scmp.eq.s32.totalorder %s31, 1
      %p201 = scmp.ne.s32.totalorder %s196, %s198
      %p202 = scmp.eq.s32.totalorder %s31, 0
      %p203 = por %p201, %p202
      %p204 = scmp.ne.s32.totalorder %s196, %s198
      %p205 = scmp.eq.s32.totalorder %s36, 1
      %p206 = por %p204, %p205
      %p207 = scmp.ne.s32.totalorder %s198, %s199
      %p208 = scmp.eq.s32.totalorder %s36, 0
      %p209 = por %p207, %p208
      %p210 = scmp.ne.s32.totalorder %s198, %s199
      %p211 = scmp.eq.s32.totalorder %s37, 1
      %p212 = por %p210, %p211
      %p214 = scmp.ne.s32.totalorder %s199, %s213
      %p215 = scmp.eq.s32.totalorder %s37, 0
      %p216 = por %p214, %p215
      %s218 = sadd.s32 %s217, 1
      %p221 = scmp.eq.s32.totalorder %s31, 1
      %p222 = scmp.ne.s32.totalorder %s217, %s219
      %p223 = scmp.eq.s32.totalorder %s31, 0
      %p224 = por %p222, %p223
      %p225 = scmp.ne.s32.totalorder %s217, %s219
      %p226 = scmp.eq.s32.totalorder %s36, 1
      %p227 = por %p225, %p226
      %p228 = scmp.ne.s32.totalorder %s219, %s220
      %p229 = scmp.eq.s32.totalorder %s36, 0
      %p230 = por %p228, %p229
      %p231 = scmp.ne.s32.totalorder %s219, %s220
      %p232 = scmp.eq.s32.totalorder %s37, 1
      %p233 = por %p231, %p232
      %p235 = scmp.ne.s32.totalorder %s220, %s234
      %p236 = scmp.eq.s32.totalorder %s37, 0
      %p237 = por %p235, %p236
      %s239 = sadd.s32 %s238, 1
      %p242 = scmp.eq.s32.totalorder %s31, 1
      %p243 = scmp.ne.s32.totalorder %s238, %s240
      %p244 = scmp.eq.s32.totalorder %s31, 0
      %p245 = por %p243, %p244
      %p246 = scmp.ne.s32.totalorder %s238, %s240
      %p247 = scmp.eq.s32.totalorder %s36, 1
      %p248 = por %p246, %p247
      %p249 = scmp.ne.s32.totalorder %s240, %s241
      %p250 = scmp.eq.s32.totalorder %s36, 0
      %p251 = por %p249, %p250
      %p252 = scmp.ne.s32.totalorder %s240, %s241
      %p253 = scmp.eq.s32.totalorder %s37, 1
      %p254 = por %p252, %p253
      %p256 = scmp.ne.s32.totalorder %s241, %s255
      %p257 = scmp.eq.s32.totalorder %s37, 0
      %p258 = por %p256, %p257
      %s260 = sadd.s32 %s259, 1
      %p263 = scmp.eq.s32.totalorder %s31, 1
      %p264 = scmp.ne.s32.totalorder %s259, %s261
      %p265 = scmp.eq.s32.totalorder %s31, 0
      %p266 = por %p264, %p265
      %p267 = scmp.ne.s32.totalorder %s259, %s261
      %p268 = scmp.eq.s32.totalorder %s36, 1
      %p269 = por %p267, %p268
      %p270 = scmp.ne.s32.totalorder %s261, %s262
      %p271 = scmp.eq.s32.totalorder %s36, 0
      %p272 = por %p270, %p271
      %p273 = scmp.ne.s32.totalorder %s261, %s262
      %p274 = scmp.eq.s32.totalorder %s37, 1
      %p275 = por %p273, %p274
      %p277 = scmp.ne.s32.totalorder %s262, %s276
      %p278 = scmp.eq.s32.totalorder %s37, 0
      %p279 = por %p277, %p278
      %s281 = sadd.s32 %s280, 1
      %p284 = scmp.eq.s32.totalorder %s31, 1
      %p285 = scmp.ne.s32.totalorder %s280, %s282
      %p286 = scmp.eq.s32.totalorder %s31, 0
      %p287 = por %p285, %p286
      %p288 = scmp.ne.s32.totalorder %s280, %s282
      %p289 = scmp.eq.s32.totalorder %s36, 1
      %p290 = por %p288, %p289
      %p291 = scmp.ne.s32.totalorder %s282, %s283
      %p292 = scmp.eq.s32.totalorder %s36, 0
      %p293 = por %p291, %p292
      %p294 = scmp.ne.s32.totalorder %s282, %s283
      %p295 = scmp.eq.s32.totalorder %s37, 1
      %p296 = por %p294, %p295
      %p298 = scmp.ne.s32.totalorder %s283, %s297
      %p299 = scmp.eq.s32.totalorder %s37, 0
      %p300 = por %p298, %p299
      %s302 = sadd.s32 %s301, 1
      %p305 = scmp.eq.s32.totalorder %s31, 1
      %p306 = scmp.ne.s32.totalorder %s301, %s303
      %p307 = scmp.eq.s32.totalorder %s31, 0
      %p308 = por %p306, %p307
      %p309 = scmp.ne.s32.totalorder %s301, %s303
      %p310 = scmp.eq.s32.totalorder %s36, 1
      %p311 = por %p309, %p310
      %p312 = scmp.ne.s32.totalorder %s303, %s304
      %p313 = scmp.eq.s32.totalorder %s36, 0
      %p314 = por %p312, %p313
      %p315 = scmp.ne.s32.totalorder %s303, %s304
      %p316 = scmp.eq.s32.totalorder %s37, 1
      %p317 = por %p315, %p316
      %p319 = scmp.ne.s32.totalorder %s304, %s318
      %p320 = scmp.eq.s32.totalorder %s37, 0
      %p321 = por %p319, %p320
      %s323 = sadd.s32 %s322, 1
      %p326 = scmp.eq.s32.totalorder %s31, 1
      %p327 = scmp.ne.s32.totalorder %s322, %s324
      %p328 = scmp.eq.s32.totalorder %s31, 0
      %p329 = por %p327, %p328
      %p330 = scmp.ne.s32.totalorder %s322, %s324
      %p331 = scmp.eq.s32.totalorder %s36, 1
      %p332 = por %p330, %p331
      %p333 = scmp.ne.s32.totalorder %s324, %s325
      %p334 = scmp.eq.s32.totalorder %s36, 0
      %p335 = por %p333, %p334
      %p336 = scmp.ne.s32.totalorder %s324, %s325
      %p337 = scmp.eq.s32.totalorder %s37, 1
      %p338 = por %p336, %p337
      %p340 = scmp.ne.s32.totalorder %s325, %s339
      %p341 = scmp.eq.s32.totalorder %s37, 0
      %p342 = por %p340, %p341
      %s344 = sadd.s32 %s343, 1
      %p347 = scmp.eq.s32.totalorder %s31, 1
      %p348 = scmp.ne.s32.totalorder %s343, %s345
      %p349 = scmp.eq.s32.totalorder %s31, 0
      %p350 = por %p348, %p349
      %p351 = scmp.ne.s32.totalorder %s343, %s345
      %p352 = scmp.eq.s32.totalorder %s36, 1
      %p353 = por %p351, %p352
      %p354 = scmp.ne.s32.totalorder %s345, %s346
      %p355 = scmp.eq.s32.totalorder %s36, 0
      %p356 = por %p354, %p355
      %p357 = scmp.ne.s32.totalorder %s345, %s346
      %p358 = scmp.eq.s32.totalorder %s37, 1
      %p359 = por %p357, %p358
      %p361 = scmp.ne.s32.totalorder %s346, %s360
      %p362 = scmp.eq.s32.totalorder %s37, 0
      %p363 = por %p361, %p362
      %s365 = sadd.s32 %s364, 1
      %p368 = scmp.eq.s32.totalorder %s31, 1
      %p369 = scmp.ne.s32.totalorder %s364, %s366
      %p370 = scmp.eq.s32.totalorder %s31, 0
      %p371 = por %p369, %p370
      %p372 = scmp.ne.s32.totalorder %s364, %s366
      %p373 = scmp.eq.s32.totalorder %s36, 1
      %p374 = por %p372, %p373
      %p375 = scmp.ne.s32.totalorder %s366, %s367
      %p376 = scmp.eq.s32.totalorder %s36, 0
      %p377 = por %p375, %p376
      %p378 = scmp.ne.s32.totalorder %s366, %s367
      %p379 = scmp.eq.s32.totalorder %s37, 1
      %p380 = por %p378, %p379
      %p382 = scmp.ne.s32.totalorder %s367, %s381
      %p383 = scmp.eq.s32.totalorder %s37, 0
      %p384 = por %p382, %p383
      %s386 = sadd.s32 %s385, 1
      %p389 = scmp.eq.s32.totalorder %s31, 1
      %p390 = scmp.ne.s32.totalorder %s385, %s387
      %p391 = scmp.eq.s32.totalorder %s31, 0
      %p392 = por %p390, %p391
      %p393 = scmp.ne.s32.totalorder %s385, %s387
      %p394 = scmp.eq.s32.totalorder %s36, 1
      %p395 = por %p393, %p394
      %p396 = scmp.ne.s32.totalorder %s387, %s388
      %p397 = scmp.eq.s32.totalorder %s36, 0
      %p398 = por %p396, %p397
      %p399 = scmp.ne.s32.totalorder %s387, %s388
      %p400 = scmp.eq.s32.totalorder %s37, 1
      %p401 = por %p399, %p400
      %p403 = scmp.ne.s32.totalorder %s388, %s402
      %p404 = scmp.eq.s32.totalorder %s37, 0
      %p405 = por %p403, %p404
      %s407 = sadd.s32 %s406, 1
      %p410 = scmp.eq.s32.totalorder %s31, 1
      %p411 = scmp.ne.s32.totalorder %s406, %s408
      %p412 = scmp.eq.s32.totalorder %s31, 0
      %p413 = por %p411, %p412
      %p414 = scmp.ne.s32.totalorder %s406, %s408
      %p415 = scmp.eq.s32.totalorder %s36, 1
      %p416 = por %p414, %p415
      %p417 = scmp.ne.s32.totalorder %s408, %s409
      %p418 = scmp.eq.s32.totalorder %s36, 0
      %p419 = por %p417, %p418
      %p420 = scmp.ne.s32.totalorder %s408, %s409
      %p421 = scmp.eq.s32.totalorder %s37, 1
      %p422 = por %p420, %p421
      %p424 = scmp.ne.s32.totalorder %s409, %s423
      %p425 = scmp.eq.s32.totalorder %s37, 0
      %p426 = por %p424, %p425
      %s428 = sadd.s32 %s427, 1
      %p431 = scmp.eq.s32.totalorder %s31, 1
      %p432 = scmp.ne.s32.totalorder %s427, %s429
      %p433 = scmp.eq.s32.totalorder %s31, 0
      %p434 = por %p432, %p433
      %p435 = scmp.ne.s32.totalorder %s427, %s429
      %p436 = scmp.eq.s32.totalorder %s36, 1
      %p437 = por %p435, %p436
      %p438 = scmp.ne.s32.totalorder %s429, %s430
      %p439 = scmp.eq.s32.totalorder %s36, 0
      %p440 = por %p438, %p439
      %p441 = scmp.ne.s32.totalorder %s429, %s430
      %p442 = scmp.eq.s32.totalorder %s37, 1
      %p443 = por %p441, %p442
      %p445 = scmp.ne.s32.totalorder %s430, %s444
      %p446 = scmp.eq.s32.totalorder %s37, 0
      %p447 = por %p445, %p446
      %s449 = sadd.s32 %s448, 1
      %p452 = scmp.eq.s32.totalorder %s31, 1
      %p453 = scmp.ne.s32.totalorder %s448, %s450
      %p454 = scmp.eq.s32.totalorder %s31, 0
      %p455 = por %p453, %p454
      %p456 = scmp.ne.s32.totalorder %s448, %s450
      %p457 = scmp.eq.s32.totalorder %s36, 1
      %p458 = por %p456, %p457
      %p459 = scmp.ne.s32.totalorder %s450, %s451
      %p460 = scmp.eq.s32.totalorder %s36, 0
      %p461 = por %p459, %p460
      %p462 = scmp.ne.s32.totalorder %s450, %s451
      %p463 = scmp.eq.s32.totalorder %s37, 1
      %p464 = por %p462, %p463
      %p466 = scmp.ne.s32.totalorder %s451, %s465
      %p467 = scmp.eq.s32.totalorder %s37, 0
      %p468 = por %p466, %p467
      %s470 = sadd.s32 %s469, 1
      %p473 = scmp.eq.s32.totalorder %s31, 1
      %p474 = scmp.ne.s32.totalorder %s469, %s471
      %p475 = scmp.eq.s32.totalorder %s31, 0
      %p476 = por %p474, %p475
      %p477 = scmp.ne.s32.totalorder %s469, %s471
      %p478 = scmp.eq.s32.totalorder %s36, 1
      %p479 = por %p477, %p478
      %p480 = scmp.ne.s32.totalorder %s471, %s472
      %p481 = scmp.eq.s32.totalorder %s36, 0
      %p482 = por %p480, %p481
      %p483 = scmp.ne.s32.totalorder %s471, %s472
      %p484 = scmp.eq.s32.totalorder %s37, 1
      %p485 = por %p483, %p484
      %p487 = scmp.ne.s32.totalorder %s472, %s486
      %p488 = scmp.eq.s32.totalorder %s37, 0
      %p489 = por %p487, %p488
      %s491 = sadd.s32 %s490, 1
      %p494 = scmp.eq.s32.totalorder %s31, 1
      %p495 = scmp.ne.s32.totalorder %s490, %s492
      %p496 = scmp.eq.s32.totalorder %s31, 0
      %p497 = por %p495, %p496
      %p498 = scmp.ne.s32.totalorder %s490, %s492
      %p499 = scmp.eq.s32.totalorder %s36, 1
      %p500 = por %p498, %p499
      %p501 = scmp.ne.s32.totalorder %s492, %s493
      %p502 = scmp.eq.s32.totalorder %s36, 0
      %p503 = por %p501, %p502
      %p504 = scmp.ne.s32.totalorder %s492, %s493
      %p505 = scmp.eq.s32.totalorder %s37, 1
      %p506 = por %p504, %p505
      %p508 = scmp.ne.s32.totalorder %s493, %s507
      %p509 = scmp.eq.s32.totalorder %s37, 0
      %p510 = por %p508, %p509
      %s511 = ssub.s32 %s31, %s38
      %p512 = scmp.eq.s32.totalorder %s511, 0
      %s514 = sadd.s32 %s513, 1
      %s515 = scalar_select %p512, %s513, %s514
      %p518 = pneg %p512
      %p519 = scmp.eq.s32.totalorder %s31, 1
      %p520 = por %p518, %p519
      %p521 = scmp.ne.s32.totalorder %s513, %s516
      %p522 = scmp.eq.s32.totalorder %s31, 0
      %p523 = por %p521, %p522
      %p524 = scmp.ne.s32.totalorder %s513, %s516
      %p525 = scmp.eq.s32.totalorder %s36, 1
      %p526 = por %p524, %p525
      %p527 = scmp.ne.s32.totalorder %s516, %s517
      %p528 = scmp.eq.s32.totalorder %s36, 0
      %p529 = por %p527, %p528
      %p530 = scmp.ne.s32.totalorder %s516, %s517
      %p531 = scmp.eq.s32.totalorder %s37, 1
      %p532 = por %p530, %p531
      %p534 = scmp.ne.s32.totalorder %s517, %s533
      %p535 = scmp.eq.s32.totalorder %s37, 0
      %p536 = por %p534, %p535
      %p537 = scmp.le.s32.totalorder 1, %s31
      %p538 = scmp.lt.s32.totalorder %s31, 3
      %p539 = pnand %p537, %p538
      %p540 = pneg %p539
      // Predicated region
      $region9: #{basic_transformer_block.1} parent=5 // pred_check
        _
      $region10: #{basic_transformer_block.1} parent=5 // pred_check_branch
        %542 = sbr.rel (%p539) target = $region12
      $region11: #{basic_transformer_block.1} parent=5 // pred_region
        %s543 = ssub.s32 %s31, 1
        // Predicated region
        $region13: #{basic_transformer_block.1} parent=11 // pred_check
          %p544 = pneg %p104
        $region14: #{basic_transformer_block.1} parent=11 // pred_check_branch
          %546 = sbr.rel (%p544) target = $region16
        $region15: #{basic_transformer_block.1} parent=11 // pred_region
          _
        $region16: #{basic_transformer_block.1} parent=11 // pred_fallthru
          _
        // Predicated region
        $region17: #{basic_transformer_block.1} parent=11 // pred_check
          %p547 = pneg %p125
        $region18: #{basic_transformer_block.1} parent=11 // pred_check_branch
          %549 = sbr.rel (%p547) target = $region20
        $region19: #{basic_transformer_block.1} parent=11 // pred_region
          _
        $region20: #{basic_transformer_block.1} parent=11 // pred_fallthru
          _
        // Predicated region
        $region21: #{basic_transformer_block.1} parent=11 // pred_check
          %p550 = pneg %p146
        $region22: #{basic_transformer_block.1} parent=11 // pred_check_branch
          %552 = sbr.rel (%p550) target = $region24
        $region23: #{basic_transformer_block.1} parent=11 // pred_region
          _
        $region24: #{basic_transformer_block.1} parent=11 // pred_fallthru
          _
        // Predicated region
        $region25: #{basic_transformer_block.1} parent=11 // pred_check
          %p553 = pneg %p167
        $region26: #{basic_transformer_block.1} parent=11 // pred_check_branch
          %555 = sbr.rel (%p553) target = $region28
        $region27: #{basic_transformer_block.1} parent=11 // pred_region
          _
        $region28: #{basic_transformer_block.1} parent=11 // pred_fallthru
          _
        // Predicated region
        $region29: #{basic_transformer_block.1} parent=11 // pred_check
          %p556 = pneg %p188
        $region30: #{basic_transformer_block.1} parent=11 // pred_check_branch
          %558 = sbr.rel (%p556) target = $region32
        $region31: #{basic_transformer_block.1} parent=11 // pred_region
          _
        $region32: #{basic_transformer_block.1} parent=11 // pred_fallthru
          _
        // Predicated region
        $region33: #{basic_transformer_block.1} parent=11 // pred_check
          %p559 = pneg %p209
        $region34: #{basic_transformer_block.1} parent=11 // pred_check_branch
          %561 = sbr.rel (%p559) target = $region36
        $region35: #{basic_transformer_block.1} parent=11 // pred_region
          _
        $region36: #{basic_transformer_block.1} parent=11 // pred_fallthru
          _
        // Predicated region
        $region37: #{basic_transformer_block.1} parent=11 // pred_check
          %p562 = pneg %p230
        $region38: #{basic_transformer_block.1} parent=11 // pred_check_branch
          %564 = sbr.rel (%p562) target = $region40
        $region39: #{basic_transformer_block.1} parent=11 // pred_region
          _
        $region40: #{basic_transformer_block.1} parent=11 // pred_fallthru
          _
        // Predicated region
        $region41: #{basic_transformer_block.1} parent=11 // pred_check
          %p565 = pneg %p251
        $region42: #{basic_transformer_block.1} parent=11 // pred_check_branch
          %567 = sbr.rel (%p565) target = $region44
        $region43: #{basic_transformer_block.1} parent=11 // pred_region
          _
        $region44: #{basic_transformer_block.1} parent=11 // pred_fallthru
          _
        // Predicated region
        $region45: #{basic_transformer_block.1} parent=11 // pred_check
          %p568 = pneg %p272
        $region46: #{basic_transformer_block.1} parent=11 // pred_check_branch
          %570 = sbr.rel (%p568) target = $region48
        $region47: #{basic_transformer_block.1} parent=11 // pred_region
          _
        $region48: #{basic_transformer_block.1} parent=11 // pred_fallthru
          _
        // Predicated region
        $region49: #{basic_transformer_block.1} parent=11 // pred_check
          %p571 = pneg %p293
        $region50: #{basic_transformer_block.1} parent=11 // pred_check_branch
          %573 = sbr.rel (%p571) target = $region52
        $region51: #{basic_transformer_block.1} parent=11 // pred_region
          _
        $region52: #{basic_transformer_block.1} parent=11 // pred_fallthru
          _
        // Predicated region
        $region53: #{basic_transformer_block.1} parent=11 // pred_check
          %p574 = pneg %p314
        $region54: #{basic_transformer_block.1} parent=11 // pred_check_branch
          %576 = sbr.rel (%p574) target = $region56
        $region55: #{basic_transformer_block.1} parent=11 // pred_region
          _
        $region56: #{basic_transformer_block.1} parent=11 // pred_fallthru
          _
        // Predicated region
        $region57: #{basic_transformer_block.1} parent=11 // pred_check
          %p577 = pneg %p335
        $region58: #{basic_transformer_block.1} parent=11 // pred_check_branch
          %579 = sbr.rel (%p577) target = $region60
        $region59: #{basic_transformer_block.1} parent=11 // pred_region
          _
        $region60: #{basic_transformer_block.1} parent=11 // pred_fallthru
          _
        // Predicated region
        $region61: #{basic_transformer_block.1} parent=11 // pred_check
          %p580 = pneg %p356
        $region62: #{basic_transformer_block.1} parent=11 // pred_check_branch
          %582 = sbr.rel (%p580) target = $region64
        $region63: #{basic_transformer_block.1} parent=11 // pred_region
          _
        $region64: #{basic_transformer_block.1} parent=11 // pred_fallthru
          _
        // Predicated region
        $region65: #{basic_transformer_block.1} parent=11 // pred_check
          %p583 = pneg %p377
        $region66: #{basic_transformer_block.1} parent=11 // pred_check_branch
          %585 = sbr.rel (%p583) target = $region68
        $region67: #{basic_transformer_block.1} parent=11 // pred_region
          _
        $region68: #{basic_transformer_block.1} parent=11 // pred_fallthru
          _
        // Predicated region
        $region69: #{basic_transformer_block.1} parent=11 // pred_check
          %p586 = pneg %p398
        $region70: #{basic_transformer_block.1} parent=11 // pred_check_branch
          %588 = sbr.rel (%p586) target = $region72
        $region71: #{basic_transformer_block.1} parent=11 // pred_region
          _
        $region72: #{basic_transformer_block.1} parent=11 // pred_fallthru
          _
        // Predicated region
        $region73: #{basic_transformer_block.1} parent=11 // pred_check
          %p589 = pneg %p419
        $region74: #{basic_transformer_block.1} parent=11 // pred_check_branch
          %591 = sbr.rel (%p589) target = $region76
        $region75: #{basic_transformer_block.1} parent=11 // pred_region
          _
        $region76: #{basic_transformer_block.1} parent=11 // pred_fallthru
          _
        // Predicated region
        $region77: #{basic_transformer_block.1} parent=11 // pred_check
          %p592 = pneg %p440
        $region78: #{basic_transformer_block.1} parent=11 // pred_check_branch
          %594 = sbr.rel (%p592) target = $region80
        $region79: #{basic_transformer_block.1} parent=11 // pred_region
          _
        $region80: #{basic_transformer_block.1} parent=11 // pred_fallthru
          _
        // Predicated region
        $region81: #{basic_transformer_block.1} parent=11 // pred_check
          %p595 = pneg %p461
        $region82: #{basic_transformer_block.1} parent=11 // pred_check_branch
          %597 = sbr.rel (%p595) target = $region84
        $region83: #{basic_transformer_block.1} parent=11 // pred_region
          _
        $region84: #{basic_transformer_block.1} parent=11 // pred_fallthru
          _
        // Predicated region
        $region85: #{basic_transformer_block.1} parent=11 // pred_check
          %p598 = pneg %p482
        $region86: #{basic_transformer_block.1} parent=11 // pred_check_branch
          %600 = sbr.rel (%p598) target = $region88
        $region87: #{basic_transformer_block.1} parent=11 // pred_region
          _
        $region88: #{basic_transformer_block.1} parent=11 // pred_fallthru
          _
        // Predicated region
        $region89: #{basic_transformer_block.1} parent=11 // pred_check
          %p601 = pneg %p503
        $region90: #{basic_transformer_block.1} parent=11 // pred_check_branch
          %603 = sbr.rel (%p601) target = $region92
        $region91: #{basic_transformer_block.1} parent=11 // pred_region
          _
        $region92: #{basic_transformer_block.1} parent=11 // pred_fallthru
          _
      $region12: #{basic_transformer_block.1} parent=5 // pred_fallthru
        _
      %p604 = scmp.lt.s32.totalorder %s31, 2
      // Predicated region
      $region93: #{basic_transformer_block.1} parent=5 // pred_check
        %p605 = pneg %p604
      $region94: #{basic_transformer_block.1} parent=5 // pred_check_branch
        %607 = sbr.rel (%p605) target = $region96
      $region95: #{basic_transformer_block.1} parent=5 // pred_region
        // Predicated region
        $region97: #{basic_transformer_block.1} parent=95 // pred_check
          %p608 = pneg %p51
        $region98: #{basic_transformer_block.1} parent=95 // pred_check_branch
          %610 = sbr.rel (%p608) target = $region100
        $region99: #{basic_transformer_block.1} parent=95 // pred_region
          %p611 = scmp.lt.s32.totalorder %s31, 1
          %s612 = scalar_select %p611, %s31, 1
          %s613 = smul.addr %s612, 2
          %s614 = smul.addr %s613, 8
          %s615 = scalar_lea.vmem %s0, %s614
        $region100: #{basic_transformer_block.1} parent=95 // pred_fallthru
          _
        // Predicated region
        $region101: #{basic_transformer_block.1} parent=95 // pred_check
          %p616 = pneg %p77
        $region102: #{basic_transformer_block.1} parent=95 // pred_check_branch
          %618 = sbr.rel (%p616) target = $region104
        $region103: #{basic_transformer_block.1} parent=95 // pred_region
          %p619 = scmp.lt.s32.totalorder %s31, 1
          %s620 = scalar_select %p619, %s31, 1
          %s621 = smul.addr %s620, 8
          %s622 = scalar_lea.vmem %s1, %s621
        $region104: #{basic_transformer_block.1} parent=95 // pred_fallthru
          _
      $region96: #{basic_transformer_block.1} parent=5 // pred_fallthru
        _
      %p623 = scmp.le.s32.totalorder 1, %s31
      %p624 = scmp.lt.s32.totalorder %s31, 3
      %p625 = pnand %p623, %p624
      %p626 = pneg %p625
      // Predicated region
      $region105: #{basic_transformer_block.1} parent=5 // pred_check
        _
      $region106: #{basic_transformer_block.1} parent=5 // pred_check_branch
        %628 = sbr.rel (%p625) target = $region108
      $region107: #{basic_transformer_block.1} parent=5 // pred_region
        %s629 = ssub.s32 %s31, 1
        %p630 = scmp.lt.s32.totalorder %s36, 1
        %s631 = scalar_select %p630, %s36, 1
        %s632 = smul.addr %s631, 2
        %s633 = smul.addr %s632, 8
        %s634 = scalar_lea.vmem %s0, %s633
        %p635 = pneg %p57
        %p636 = pneg %p54
        %p637 = scmp.lt.s32.totalorder %s36, 1
        %s638 = scalar_select %p637, %s36, 1
        %s639 = smul.addr %s638, 8
        %s640 = scalar_lea.vmem %s1, %s639
        %p641 = pneg %p83
        %p642 = pneg %p80
        %p643 = pneg %p104
        %p644 = pneg %p101
        %p645 = pneg %p125
        %p646 = pneg %p122
        %p647 = pneg %p146
        %p648 = pneg %p143
        %p649 = pneg %p167
        %p650 = pneg %p164
        %p651 = pneg %p188
        %p652 = pneg %p185
        %p653 = pneg %p209
        %p654 = pneg %p206
        %p655 = pneg %p230
        %p656 = pneg %p227
        %p657 = pneg %p251
        %p658 = pneg %p248
        %p659 = pneg %p272
        %p660 = pneg %p269
        %p661 = pneg %p293
        %p662 = pneg %p290
        %p663 = pneg %p314
        %p664 = pneg %p311
        %p665 = pneg %p335
        %p666 = pneg %p332
        %p667 = pneg %p356
        %p668 = pneg %p353
        %p669 = pneg %p377
        %p670 = pneg %p374
        %p671 = pneg %p398
        %p672 = pneg %p395
        %p673 = pneg %p419
        %p674 = pneg %p416
        %p675 = pneg %p440
        %p676 = pneg %p437
        %p677 = pneg %p461
        %p678 = pneg %p458
        %p679 = pneg %p482
        %p680 = pneg %p479
        %p681 = pneg %p503
        %p682 = pneg %p500
        %p683 = pneg %p529
        %p684 = pneg %p526
        %s685 = sand.u32 %s516, 1
        %s686 = scalar_lea.sflag [#allocation3], %s685
        %s687 = sand.u32 %s516, 1
        %s688 = smul.addr %s687, 16
        %s689 = scalar_lea.vmem [#allocation2], %s688
        %p690 = scmp.lt.s32.totalorder %s36, 1
        %s691 = scalar_select %p690, %s36, 1
        %s692 = smul.addr %s691, 2
        %s693 = smul.addr %s692, 8
        %s694 = scalar_lea.vmem %s0, %s693
        %p695 = scmp.lt.s32.totalorder %s36, 1
        %s696 = scalar_select %p695, %s36, 1
        %s697 = smul.addr %s696, 8
        %s698 = scalar_lea.vmem %s1, %s697
        %v700 = vld [vmem:[%s694] sm:$0xff]
        %v701 = vld [vmem:[%s694 + $0x8] sm:$0xff]
        %v702 = vld [vmem:[%s698] sm:$0xff]
        %v703 = vld [vmem:[%s2] sm:$0x1]
        %v704 = vld [vmem:[%s3] sm:$0x1]
        %705 = vadd.xlane.f32.xlu0 %v700
        %v706 = vpop.xlane.xlu0 %705
        %707 = vadd.xlane.f32.xlu0 %v701
        %v708 = vpop.xlane.xlu0 %707
        %v709 = vrcp.pop 128.0
        %v710 = vmul.f32 128.0, %v709
        %v711 = vsub.f32 1.0, %v710
        %v712 = vmul.f32 %v709, %v711
        %v713 = vadd.f32 %v709, %v712
        %vm714 = vweird.f32 %v709
        %v715 = vsel %vm714, %v709, %v713
        %v716 = vmul.f32 %v706, %v715
        %v717 = vmul.f32 %v708, %v715
        %v718 = vsub.f32 %v700, %v716
        %v719 = vsub.f32 %v701, %v717
        %v720 = vmul.f32 %v718, %v718
        %v721 = vmul.f32 %v719, %v719
        %722 = vadd.xlane.f32.xlu0 %v720
        %v723 = vpop.xlane.xlu0 %722
        %724 = vadd.xlane.f32.xlu0 %v721
        %v725 = vpop.xlane.xlu0 %724
        %v726 = vmul.f32 %v723, %v715
        %v727 = vmul.f32 %v725, %v715
        %v728 = vadd.f32 %v726, 1e-05
        %v729 = vadd.f32 %v727, 1e-05
        %v730 = vrsqrt.pop %v728
        %v731 = vmul.f32 %v730, %v728
        %v732 = vmul.f32 %v731, %v730
        %v733 = vmul.f32 0.5, %v732
        %v734 = vsub.f32 1.5, %v733
        %v735 = vmul.f32 %v730, %v734
        %vm736 = vweird.f32 %v728
        %vm737 = vweird.f32 %v730
        %vm738 = vmor %vm736, %vm737
        %v739 = vsel %vm738, %v730, %v735
        %v740 = vrsqrt.pop %v729
        %v741 = vmul.f32 %v740, %v729
        %v742 = vmul.f32 %v741, %v740
        %v743 = vmul.f32 0.5, %v742
        %v744 = vsub.f32 1.5, %v743
        %v745 = vmul.f32 %v740, %v744
        %vm746 = vweird.f32 %v729
        %vm747 = vweird.f32 %v740
        %vm748 = vmor %vm746, %vm747
        %v749 = vsel %vm748, %v740, %v745
        %v750 = vmul.f32 %v718, %v739
        %v751 = vmul.f32 %v719, %v749
        %v753 = vperm.slane %v703, 0
        %v755 = vmul.f32 %v750, %v753
        %v756 = vmul.f32 %v751, %v753
        %v758 = vperm.slane %v704, 0
        %v760 = vadd.f32 %v755, %v758
        %v761 = vadd.f32 %v756, %v758
        %v762 = vld [vmem:[%s4] sm:$0xf]
        %v763 = vld [vmem:[%s4 + $0x4] sm:$0xf]
        %v764 = vld [vmem:[%s4 + $0x8] sm:$0xf]
        %v765 = vld [vmem:[%s4 + $0xc] sm:$0xf]
        %v766 = vld [vmem:[%s4 + $0x10] sm:$0xf]
        %v767 = vld [vmem:[%s4 + $0x14] sm:$0xf]
        %v768 = vld [vmem:[%s4 + $0x18] sm:$0xf]
        %v769 = vld [vmem:[%s4 + $0x1c] sm:$0xf]
        %v770 = vld [vmem:[%s4 + $0x20] sm:$0xf]
        %v771 = vld [vmem:[%s4 + $0x24] sm:$0xf]
        %v772 = vld [vmem:[%s4 + $0x28] sm:$0xf]
        %v773 = vld [vmem:[%s4 + $0x2c] sm:$0xf]
        %v774 = vld [vmem:[%s4 + $0x30] sm:$0xf]
        %v775 = vld [vmem:[%s4 + $0x34] sm:$0xf]
        %v776 = vld [vmem:[%s4 + $0x38] sm:$0xf]
        %v777 = vld [vmem:[%s4 + $0x3c] sm:$0xf]
        %v778 = vld [vmem:[%s5] sm:$0xf]
        %v779 = vld [vmem:[%s5 + $0x4] sm:$0xf]
        %v780 = vld [vmem:[%s5 + $0x8] sm:$0xf]
        %v781 = vld [vmem:[%s5 + $0xc] sm:$0xf]
        %v782 = vld [vmem:[%s5 + $0x10] sm:$0xf]
        %v783 = vld [vmem:[%s5 + $0x14] sm:$0xf]
        %v784 = vld [vmem:[%s5 + $0x18] sm:$0xf]
        %v785 = vld [vmem:[%s5 + $0x1c] sm:$0xf]
        %v786 = vld [vmem:[%s5 + $0x20] sm:$0xf]
        %v787 = vld [vmem:[%s5 + $0x24] sm:$0xf]
        %v788 = vld [vmem:[%s5 + $0x28] sm:$0xf]
        %v789 = vld [vmem:[%s5 + $0x2c] sm:$0xf]
        %v790 = vld [vmem:[%s5 + $0x30] sm:$0xf]
        %v791 = vld [vmem:[%s5 + $0x34] sm:$0xf]
        %v792 = vld [vmem:[%s5 + $0x38] sm:$0xf]
        %v793 = vld [vmem:[%s5 + $0x3c] sm:$0xf]
        %v794 = vld [vmem:[%s6] sm:$0xf]
        %v795 = vld [vmem:[%s6 + $0x4] sm:$0xf]
        %v796 = vld [vmem:[%s6 + $0x8] sm:$0xf]
        %v797 = vld [vmem:[%s6 + $0xc] sm:$0xf]
        %v798 = vld [vmem:[%s6 + $0x10] sm:$0xf]
        %v799 = vld [vmem:[%s6 + $0x14] sm:$0xf]
        %v800 = vld [vmem:[%s6 + $0x18] sm:$0xf]
        %v801 = vld [vmem:[%s6 + $0x1c] sm:$0xf]
        %v802 = vld [vmem:[%s6 + $0x20] sm:$0xf]
        %v803 = vld [vmem:[%s6 + $0x24] sm:$0xf]
        %v804 = vld [vmem:[%s6 + $0x28] sm:$0xf]
        %v805 = vld [vmem:[%s6 + $0x2c] sm:$0xf]
        %v806 = vld [vmem:[%s6 + $0x30] sm:$0xf]
        %v807 = vld [vmem:[%s6 + $0x34] sm:$0xf]
        %v808 = vld [vmem:[%s6 + $0x38] sm:$0xf]
        %v809 = vld [vmem:[%s6 + $0x3c] sm:$0xf]
        %v810 = vld [vmem:[%s7] sm:$0xf]
        %v811 = vld [vmem:[%s7 + $0x4] sm:$0xf]
        %v812 = vld [vmem:[%s7 + $0x8] sm:$0xf]
        %v813 = vld [vmem:[%s7 + $0xc] sm:$0xf]
        %v814 = vld [vmem:[%s7 + $0x10] sm:$0xf]
        %v815 = vld [vmem:[%s7 + $0x14] sm:$0xf]
        %v816 = vld [vmem:[%s7 + $0x18] sm:$0xf]
        %v817 = vld [vmem:[%s7 + $0x1c] sm:$0xf]
        %v818 = vld [vmem:[%s7 + $0x20] sm:$0xf]
        %v819 = vld [vmem:[%s7 + $0x24] sm:$0xf]
        %v820 = vld [vmem:[%s7 + $0x28] sm:$0xf]
        %v821 = vld [vmem:[%s7 + $0x2c] sm:$0xf]
        %v822 = vld [vmem:[%s7 + $0x30] sm:$0xf]
        %v823 = vld [vmem:[%s7 + $0x34] sm:$0xf]
        %v824 = vld [vmem:[%s7 + $0x38] sm:$0xf]
        %v825 = vld [vmem:[%s7 + $0x3c] sm:$0xf]
        %v826 = vld [vmem:[%s8] sm:$0x1]
        %v827 = vpack.c.bf16 %v761, %v760
        %v844 = vunpack.c.l.b16 %v762
        %v845 = vunpack.c.l.b16 %v763
        %v846 = vunpack.c.l.b16 %v764
        %v847 = vunpack.c.l.b16 %v765
        %v848 = vunpack.c.l.b16 %v766
        %v849 = vunpack.c.l.b16 %v767
        %v850 = vunpack.c.l.b16 %v768
        %v851 = vunpack.c.l.b16 %v769
        %v852 = vunpack.c.l.b16 %v770
        %v853 = vunpack.c.l.b16 %v771
        %v854 = vunpack.c.l.b16 %v772
        %v855 = vunpack.c.l.b16 %v773
        %v856 = vunpack.c.l.b16 %v774
        %v857 = vunpack.c.l.b16 %v775
        %v858 = vunpack.c.l.b16 %v776
        %v859 = vunpack.c.l.b16 %v777
        %v860 = vpack.c.b16 %v845, %v844
        %v861 = vpack.c.b16 %v847, %v846
        %v862 = vpack.c.b16 %v849, %v848
        %v863 = vpack.c.b16 %v851, %v850
        %v864 = vpack.c.b16 %v853, %v852
        %v865 = vpack.c.b16 %v855, %v854
        %v866 = vpack.c.b16 %v857, %v856
        %v867 = vpack.c.b16 %v859, %v858
        %876 = vmatpush.bf16.msra.mxu0 %v867
        %877 = vmatpush.bf16.msra.mxu0 %v866
        %878 = vmatpush.bf16.msra.mxu0 %v865
        %879 = vmatpush.bf16.msra.mxu0 %v864
        %880 = vmatpush.bf16.msra.mxu0 %v863
        %881 = vmatpush.bf16.msra.mxu0 %v862
        %882 = vmatpush.bf16.msra.mxu0 %v861
        %883 = vmatpush.bf16.msra.mxu0 %v860
        %884 = vmatmul.bf16.gmra.mxu0 %v827
        %v885 = vpop.f32.mrf.mxu0
        %v886 = vadd.f32 0.0, %v885
        %v887 = vpop.f32.mrf.mxu0
        %v888 = vadd.f32 0.0, %v887
        %889 = vdwg.mxu0
        %v906 = vunpack.c.l.b16 %v778
        %v907 = vunpack.c.l.b16 %v779
        %v908 = vunpack.c.l.b16 %v780
        %v909 = vunpack.c.l.b16 %v781
        %v910 = vunpack.c.l.b16 %v782
        %v911 = vunpack.c.l.b16 %v783
        %v912 = vunpack.c.l.b16 %v784
        %v913 = vunpack.c.l.b16 %v785
        %v914 = vunpack.c.l.b16 %v786
        %v915 = vunpack.c.l.b16 %v787
        %v916 = vunpack.c.l.b16 %v788
        %v917 = vunpack.c.l.b16 %v789
        %v918 = vunpack.c.l.b16 %v790
        %v919 = vunpack.c.l.b16 %v791
        %v920 = vunpack.c.l.b16 %v792
        %v921 = vunpack.c.l.b16 %v793
        %v922 = vpack.c.b16 %v907, %v906
        %v923 = vpack.c.b16 %v909, %v908
        %v924 = vpack.c.b16 %v911, %v910
        %v925 = vpack.c.b16 %v913, %v912
        %v926 = vpack.c.b16 %v915, %v914
        %v927 = vpack.c.b16 %v917, %v916
        %v928 = vpack.c.b16 %v919, %v918
        %v929 = vpack.c.b16 %v921, %v920
        %938 = vmatpush.bf16.msra.mxu0 %v929
        %939 = vmatpush.bf16.msra.mxu0 %v928
        %940 = vmatpush.bf16.msra.mxu0 %v927
        %941 = vmatpush.bf16.msra.mxu0 %v926
        %942 = vmatpush.bf16.msra.mxu0 %v925
        %943 = vmatpush.bf16.msra.mxu0 %v924
        %944 = vmatpush.bf16.msra.mxu0 %v923
        %945 = vmatpush.bf16.msra.mxu0 %v922
        %946 = vmatmul.bf16.gmra.mxu0 %v827
        %v947 = vpop.f32.mrf.mxu0
        %v948 = vadd.f32 0.0, %v947
        %v949 = vpop.f32.mrf.mxu0
        %v950 = vadd.f32 0.0, %v949
        %951 = vdwg.mxu0
        %v968 = vunpack.c.l.b16 %v794
        %v969 = vunpack.c.l.b16 %v795
        %v970 = vunpack.c.l.b16 %v796
        %v971 = vunpack.c.l.b16 %v797
        %v972 = vunpack.c.l.b16 %v798
        %v973 = vunpack.c.l.b16 %v799
        %v974 = vunpack.c.l.b16 %v800
        %v975 = vunpack.c.l.b16 %v801
        %v976 = vunpack.c.l.b16 %v802
        %v977 = vunpack.c.l.b16 %v803
        %v978 = vunpack.c.l.b16 %v804
        %v979 = vunpack.c.l.b16 %v805
        %v980 = vunpack.c.l.b16 %v806
        %v981 = vunpack.c.l.b16 %v807
        %v982 = vunpack.c.l.b16 %v808
        %v983 = vunpack.c.l.b16 %v809
        %v984 = vpack.c.b16 %v969, %v968
        %v985 = vpack.c.b16 %v971, %v970
        %v986 = vpack.c.b16 %v973, %v972
        %v987 = vpack.c.b16 %v975, %v974
        %v988 = vpack.c.b16 %v977, %v976
        %v989 = vpack.c.b16 %v979, %v978
        %v990 = vpack.c.b16 %v981, %v980
        %v991 = vpack.c.b16 %v983, %v982
        %1000 = vmatpush.bf16.msra.mxu0 %v991
        %1001 = vmatpush.bf16.msra.mxu0 %v990
        %1002 = vmatpush.bf16.msra.mxu0 %v989
        %1003 = vmatpush.bf16.msra.mxu0 %v988
        %1004 = vmatpush.bf16.msra.mxu0 %v987
        %1005 = vmatpush.bf16.msra.mxu0 %v986
        %1006 = vmatpush.bf16.msra.mxu0 %v985
        %1007 = vmatpush.bf16.msra.mxu0 %v984
        %1008 = vmatmul.bf16.gmra.mxu0 %v827
        %v1009 = vpop.f32.mrf.mxu0
        %v1010 = vadd.f32 0.0, %v1009
        %v1011 = vpop.f32.mrf.mxu0
        %v1012 = vadd.f32 0.0, %v1011
        %1013 = vdwg.mxu0
        %v1014 = vpack.c.bf16 %v888, %v886
        %v1015 = vpack.c.bf16 %v950, %v948
        %v1016 = vpack.c.bf16 %v1012, %v1010
        %vm1017 = vcmask 261120
        %v1019 = vsel %vm1017, %v1014, 0
        %v1022 = vsel %vm1017, %v1015, 0
        %1024 = vmatpush.bf16.xpose.msra.mxu0 0
        %1025 = vmatpush.bf16.xpose.msra.mxu0 0
        %1026 = vmatpush.bf16.xpose.msra.mxu0 0
        %1027 = vmatpush.bf16.xpose.msra.mxu0 0
        %1028 = vmatpush.bf16.xpose.msra.mxu0 0
        %1029 = vmatpush.bf16.xpose.msra.mxu0 0
        %1030 = vmatpush.bf16.xpose.msra.mxu0 0
        %1031 = vmatpush.bf16.xpose.msra.mxu0 %v1022
        %1032 = vmatmul.bf16.gmra.mxu0 %v1019
        %v1033 = vpop.f32.mrf.mxu0
        %v1034 = vadd.f32 0.0, %v1033
        %v1035 = vpop.f32.mrf.mxu0
        %v1036 = vadd.f32 0.0, %v1035
        %1037 = vdwg.mxu0
        %v1038 = vmul.f32 %v1034, 0.17677669
        %v1039 = vmul.f32 %v1036, 0.17677669
        %vm1040 = vcmask 130048
        %v1041 = vsel %vm1040, %v1038, -inf
        %1042 = vmax.xlane.f32.xlu0 %v1041
        %v1043 = vpop.xlane.xlu0 %1042
        %v1044 = vsel %vm1040, %v1039, -inf
        %1045 = vmax.xlane.f32.xlu0 %v1044
        %v1046 = vpop.xlane.xlu0 %1045
        %v1047 = vsub.f32 %v1038, %v1043
        %v1048 = vsub.f32 %v1039, %v1046
        %v1049 = vmul.f32 %v1047, 1.442695
        %v1050 = vpow.pop %v1049
        %v1051 = vmul.f32 %v1048, 1.442695
        %v1052 = vpow.pop %v1051
        %v1053 = vsel %vm1040, %v1050, 0.0
        %1054 = vadd.xlane.f32.xlu0 %v1053
        %v1055 = vpop.xlane.xlu0 %1054
        %v1056 = vsel %vm1040, %v1052, 0.0
        %1057 = vadd.xlane.f32.xlu0 %v1056
        %v1058 = vpop.xlane.xlu0 %1057
        %v1059 = vrcp.pop %v1055
        %v1060 = vrcp.pop %v1058
        %v1061 = vmul.f32 %v1050, %v1059
        %v1062 = vmul.f32 %v1052, %v1060
        %v1063 = vpack.c.bf16 %v1062, %v1061
        %v1065 = vsel %vm1040, %v1063, 0
        %1067 = vmatpush.bf16.msra.mxu0 0
        %1068 = vmatpush.bf16.msra.mxu0 0
        %1069 = vmatpush.bf16.msra.mxu0 0
        %1070 = vmatpush.bf16.msra.mxu0 0
        %1071 = vmatpush.bf16.msra.mxu0 0
        %1072 = vmatpush.bf16.msra.mxu0 0
        %1073 = vmatpush.bf16.msra.mxu0 0
        %1074 = vmatpush.bf16.msra.mxu0 %v1016
        %1075 = vmatmul.bf16.gmra.mxu0 %v1065
        %v1076 = vpop.f32.mrf.mxu0
        %v1077 = vadd.f32 0.0, %v1076
        %v1078 = vpop.f32.mrf.mxu0
        %v1079 = vadd.f32 0.0, %v1078
        %1080 = vdwg.mxu0
        %v1081 = vpack.c.bf16 %v1079, %v1077
        %1083 = vrot.lane.b32.xlu0 %v1014, 96
        %v1084 = vpop.permute.xlu0 %1083
        %1086 = vrot.lane.b32.xlu0 %v1015, 96
        %v1087 = vpop.permute.xlu0 %1086
        %v1089 = vsel %vm1017, %v1084, 0
        %v1092 = vsel %vm1017, %v1087, 0
        %1094 = vmatpush.bf16.xpose.msra.mxu0 0
        %1095 = vmatpush.bf16.xpose.msra.mxu0 0
        %1096 = vmatpush.bf16.xpose.msra.mxu0 0
        %1097 = vmatpush.bf16.xpose.msra.mxu0 0
        %1098 = vmatpush.bf16.xpose.msra.mxu0 0
        %1099 = vmatpush.bf16.xpose.msra.mxu0 0
        %1100 = vmatpush.bf16.xpose.msra.mxu0 0
        %1101 = vmatpush.bf16.xpose.msra.mxu0 %v1092
        %1102 = vmatmul.bf16.gmra.mxu0 %v1089
        %v1103 = vpop.f32.mrf.mxu0
        %v1104 = vadd.f32 0.0, %v1103
        %v1105 = vpop.f32.mrf.mxu0
        %v1106 = vadd.f32 0.0, %v1105
        %1107 = vdwg.mxu0
        %v1108 = vmul.f32 %v1104, 0.17677669
        %v1109 = vmul.f32 %v1106, 0.17677669
        %v1110 = vsel %vm1040, %v1108, -inf
        %1111 = vmax.xlane.f32.xlu0 %v1110
        %v1112 = vpop.xlane.xlu0 %1111
        %v1113 = vsel %vm1040, %v1109, -inf
        %1114 = vmax.xlane.f32.xlu0 %v1113
        %v1115 = vpop.xlane.xlu0 %1114
        %v1116 = vsub.f32 %v1108, %v1112
        %v1117 = vsub.f32 %v1109, %v1115
        %v1118 = vmul.f32 %v1116, 1.442695
        %v1119 = vpow.pop %v1118
        %v1120 = vmul.f32 %v1117, 1.442695
        %v1121 = vpow.pop %v1120
        %v1122 = vsel %vm1040, %v1119, 0.0
        %1123 = vadd.xlane.f32.xlu0 %v1122
        %v1124 = vpop.xlane.xlu0 %1123
        %v1125 = vsel %vm1040, %v1121, 0.0
        %1126 = vadd.xlane.f32.xlu0 %v1125
        %v1127 = vpop.xlane.xlu0 %1126
        %v1128 = vrcp.pop %v1124
        %v1129 = vrcp.pop %v1127
        %v1130 = vmul.f32 %v1119, %v1128
        %v1131 = vmul.f32 %v1121, %v1129
        %v1132 = vpack.c.bf16 %v1131, %v1130
        %1134 = vrot.lane.b32.xlu0 %v1016, 96
        %v1135 = vpop.permute.xlu0 %1134
        %v1138 = vsel %vm1040, %v1132, 0
        %1140 = vmatpush.bf16.msra.mxu0 0
        %1141 = vmatpush.bf16.msra.mxu0 0
        %1142 = vmatpush.bf16.msra.mxu0 0
        %1143 = vmatpush.bf16.msra.mxu0 0
        %1144 = vmatpush.bf16.msra.mxu0 0
        %1145 = vmatpush.bf16.msra.mxu0 0
        %1146 = vmatpush.bf16.msra.mxu0 0
        %1147 = vmatpush.bf16.msra.mxu0 %v1135
        %1148 = vmatmul.bf16.gmra.mxu0 %v1138
        %v1149 = vpop.f32.mrf.mxu0
        %v1150 = vadd.f32 0.0, %v1149
        %v1151 = vpop.f32.mrf.mxu0
        %v1152 = vadd.f32 0.0, %v1151
        %1153 = vdwg.mxu0
        %v1154 = vpack.c.bf16 %v1152, %v1150
        %v1159 = vunpack.c.l.b16 %v814
        %v1160 = vunpack.c.l.b16 %v815
        %v1161 = vunpack.c.l.b16 %v816
        %v1162 = vunpack.c.l.b16 %v817
        %v1163 = vpack.c.b16 %v1160, %v1159
        %v1164 = vpack.c.b16 %v1162, %v1161
        %v1168 = vsel %vm1017, %v1154, 0
        %1170 = vmatpush.bf16.msra.mxu0 0
        %1171 = vmatpush.bf16.msra.mxu0 0
        %1172 = vmatpush.bf16.msra.mxu0 0
        %1173 = vmatpush.bf16.msra.mxu0 0
        %1174 = vmatpush.bf16.msra.mxu0 0
        %1175 = vmatpush.bf16.msra.mxu0 0
        %1176 = vmatpush.bf16.msra.mxu0 %v1164
        %1177 = vmatpush.bf16.msra.mxu0 %v1163
        %1178 = vmatmul.bf16.gmra.mxu0 %v1168
        %v1179 = vpop.f32.mrf.mxu0
        %v1180 = vadd.f32 0.0, %v1179
        %v1181 = vpop.f32.mrf.mxu0
        %v1182 = vadd.f32 0.0, %v1181
        %1183 = vdwg.mxu0
        %v1188 = vunpack.c.l.b16 %v810
        %v1189 = vunpack.c.l.b16 %v811
        %v1190 = vunpack.c.l.b16 %v812
        %v1191 = vunpack.c.l.b16 %v813
        %v1192 = vpack.c.b16 %v1189, %v1188
        %v1193 = vpack.c.b16 %v1191, %v1190
        %v1197 = vsel %vm1017, %v1081, 0
        %1199 = vmatpush.bf16.msra.mxu0 0
        %1200 = vmatpush.bf16.msra.mxu0 0
        %1201 = vmatpush.bf16.msra.mxu0 0
        %1202 = vmatpush.bf16.msra.mxu0 0
        %1203 = vmatpush.bf16.msra.mxu0 0
        %1204 = vmatpush.bf16.msra.mxu0 0
        %1205 = vmatpush.bf16.msra.mxu0 %v1193
        %1206 = vmatpush.bf16.msra.mxu0 %v1192
        %1207 = vmatmul.bf16.gmra.mxu0 %v1197
        %v1208 = vpop.f32.mrf.mxu0
        %v1209 = vadd.f32 %v1180, %v1208
        %v1210 = vpop.f32.mrf.mxu0
        %v1211 = vadd.f32 %v1182, %v1210
        %1212 = vdwg.mxu0
        %1213 = vrot.lane.b32.xlu0 %v1014, 64
        %v1214 = vpop.permute.xlu0 %1213
        %1215 = vrot.lane.b32.xlu0 %v1015, 64
        %v1216 = vpop.permute.xlu0 %1215
        %v1218 = vsel %vm1017, %v1214, 0
        %v1221 = vsel %vm1017, %v1216, 0
        %1223 = vmatpush.bf16.xpose.msra.mxu0 0
        %1224 = vmatpush.bf16.xpose.msra.mxu0 0
        %1225 = vmatpush.bf16.xpose.msra.mxu0 0
        %1226 = vmatpush.bf16.xpose.msra.mxu0 0
        %1227 = vmatpush.bf16.xpose.msra.mxu0 0
        %1228 = vmatpush.bf16.xpose.msra.mxu0 0
        %1229 = vmatpush.bf16.xpose.msra.mxu0 0
        %1230 = vmatpush.bf16.xpose.msra.mxu0 %v1221
        %1231 = vmatmul.bf16.gmra.mxu0 %v1218
        %v1232 = vpop.f32.mrf.mxu0
        %v1233 = vadd.f32 0.0, %v1232
        %v1234 = vpop.f32.mrf.mxu0
        %v1235 = vadd.f32 0.0, %v1234
        %1236 = vdwg.mxu0
        %v1237 = vmul.f32 %v1233, 0.17677669
        %v1238 = vmul.f32 %v1235, 0.17677669
        %v1239 = vsel %vm1040, %v1237, -inf
        %1240 = vmax.xlane.f32.xlu0 %v1239
        %v1241 = vpop.xlane.xlu0 %1240
        %v1242 = vsel %vm1040, %v1238, -inf
        %1243 = vmax.xlane.f32.xlu0 %v1242
        %v1244 = vpop.xlane.xlu0 %1243
        %v1245 = vsub.f32 %v1237, %v1241
        %v1246 = vsub.f32 %v1238, %v1244
        %v1247 = vmul.f32 %v1245, 1.442695
        %v1248 = vpow.pop %v1247
        %v1249 = vmul.f32 %v1246, 1.442695
        %v1250 = vpow.pop %v1249
        %v1251 = vsel %vm1040, %v1248, 0.0
        %1252 = vadd.xlane.f32.xlu0 %v1251
        %v1253 = vpop.xlane.xlu0 %1252
        %v1254 = vsel %vm1040, %v1250, 0.0
        %1255 = vadd.xlane.f32.xlu0 %v1254
        %v1256 = vpop.xlane.xlu0 %1255
        %v1257 = vrcp.pop %v1253
        %v1258 = vrcp.pop %v1256
        %v1259 = vmul.f32 %v1248, %v1257
        %v1260 = vmul.f32 %v1250, %v1258
        %v1261 = vpack.c.bf16 %v1260, %v1259
        %1262 = vrot.lane.b32.xlu0 %v1016, 64
        %v1263 = vpop.permute.xlu0 %1262
        %v1266 = vsel %vm1040, %v1261, 0
        %1268 = vmatpush.bf16.msra.mxu0 0
        %1269 = vmatpush.bf16.msra.mxu0 0
        %1270 = vmatpush.bf16.msra.mxu0 0
        %1271 = vmatpush.bf16.msra.mxu0 0
        %1272 = vmatpush.bf16.msra.mxu0 0
        %1273 = vmatpush.bf16.msra.mxu0 0
        %1274 = vmatpush.bf16.msra.mxu0 0
        %1275 = vmatpush.bf16.msra.mxu0 %v1263
        %1276 = vmatmul.bf16.gmra.mxu0 %v1266
        %v1277 = vpop.f32.mrf.mxu0
        %v1278 = vadd.f32 0.0, %v1277
        %v1279 = vpop.f32.mrf.mxu0
        %v1280 = vadd.f32 0.0, %v1279
        %1281 = vdwg.mxu0
        %v1282 = vpack.c.bf16 %v1280, %v1278
        %v1287 = vunpack.c.l.b16 %v818
        %v1288 = vunpack.c.l.b16 %v819
        %v1289 = vunpack.c.l.b16 %v820
        %v1290 = vunpack.c.l.b16 %v821
        %v1291 = vpack.c.b16 %v1288, %v1287
        %v1292 = vpack.c.b16 %v1290, %v1289
        %v1296 = vsel %vm1017, %v1282, 0
        %1298 = vmatpush.bf16.msra.mxu0 0
        %1299 = vmatpush.bf16.msra.mxu0 0
        %1300 = vmatpush.bf16.msra.mxu0 0
        %1301 = vmatpush.bf16.msra.mxu0 0
        %1302 = vmatpush.bf16.msra.mxu0 0
        %1303 = vmatpush.bf16.msra.mxu0 0
        %1304 = vmatpush.bf16.msra.mxu0 %v1292
        %1305 = vmatpush.bf16.msra.mxu0 %v1291
        %1306 = vmatmul.bf16.gmra.mxu0 %v1296
        %v1307 = vpop.f32.mrf.mxu0
        %v1308 = vadd.f32 0.0, %v1307
        %v1309 = vpop.f32.mrf.mxu0
        %v1310 = vadd.f32 0.0, %v1309
        %1311 = vdwg.mxu0
        %v1312 = vadd.f32 %v1209, %v1308
        %v1313 = vadd.f32 %v1211, %v1310
        %1314 = vrot.lane.b32.xlu0 %v1014, 32
        %v1315 = vpop.permute.xlu0 %1314
        %1316 = vrot.lane.b32.xlu0 %v1015, 32
        %v1317 = vpop.permute.xlu0 %1316
        %v1319 = vsel %vm1017, %v1315, 0
        %v1322 = vsel %vm1017, %v1317, 0
        %1324 = vmatpush.bf16.xpose.msra.mxu0 0
        %1325 = vmatpush.bf16.xpose.msra.mxu0 0
        %1326 = vmatpush.bf16.xpose.msra.mxu0 0
        %1327 = vmatpush.bf16.xpose.msra.mxu0 0
        %1328 = vmatpush.bf16.xpose.msra.mxu0 0
        %1329 = vmatpush.bf16.xpose.msra.mxu0 0
        %1330 = vmatpush.bf16.xpose.msra.mxu0 0
        %1331 = vmatpush.bf16.xpose.msra.mxu0 %v1322
        %1332 = vmatmul.bf16.gmra.mxu0 %v1319
        %v1333 = vpop.f32.mrf.mxu0
        %v1334 = vadd.f32 0.0, %v1333
        %v1335 = vpop.f32.mrf.mxu0
        %v1336 = vadd.f32 0.0, %v1335
        %1337 = vdwg.mxu0
        %v1338 = vmul.f32 %v1334, 0.17677669
        %v1339 = vmul.f32 %v1336, 0.17677669
        %v1340 = vsel %vm1040, %v1338, -inf
        %1341 = vmax.xlane.f32.xlu0 %v1340
        %v1342 = vpop.xlane.xlu0 %1341
        %v1343 = vsel %vm1040, %v1339, -inf
        %1344 = vmax.xlane.f32.xlu0 %v1343
        %v1345 = vpop.xlane.xlu0 %1344
        %v1346 = vsub.f32 %v1338, %v1342
        %v1347 = vsub.f32 %v1339, %v1345
        %v1348 = vmul.f32 %v1346, 1.442695
        %v1349 = vpow.pop %v1348
        %v1350 = vmul.f32 %v1347, 1.442695
        %v1351 = vpow.pop %v1350
        %v1352 = vsel %vm1040, %v1349, 0.0
        %1353 = vadd.xlane.f32.xlu0 %v1352
        %v1354 = vpop.xlane.xlu0 %1353
        %v1355 = vsel %vm1040, %v1351, 0.0
        %1356 = vadd.xlane.f32.xlu0 %v1355
        %v1357 = vpop.xlane.xlu0 %1356
        %v1358 = vrcp.pop %v1354
        %v1359 = vrcp.pop %v1357
        %v1360 = vmul.f32 %v1349, %v1358
        %v1361 = vmul.f32 %v1351, %v1359
        %v1362 = vpack.c.bf16 %v1361, %v1360
        %1363 = vrot.lane.b32.xlu0 %v1016, 32
        %v1364 = vpop.permute.xlu0 %1363
        %v1367 = vsel %vm1040, %v1362, 0
        %1369 = vmatpush.bf16.msra.mxu0 0
        %1370 = vmatpush.bf16.msra.mxu0 0
        %1371 = vmatpush.bf16.msra.mxu0 0
        %1372 = vmatpush.bf16.msra.mxu0 0
        %1373 = vmatpush.bf16.msra.mxu0 0
        %1374 = vmatpush.bf16.msra.mxu0 0
        %1375 = vmatpush.bf16.msra.mxu0 0
        %1376 = vmatpush.bf16.msra.mxu0 %v1364
        %1377 = vmatmul.bf16.gmra.mxu0 %v1367
        %v1378 = vpop.f32.mrf.mxu0
        %v1379 = vadd.f32 0.0, %v1378
        %v1380 = vpop.f32.mrf.mxu0
        %v1381 = vadd.f32 0.0, %v1380
        %1382 = vdwg.mxu0
        %v1383 = vpack.c.bf16 %v1381, %v1379
        %v1388 = vunpack.c.l.b16 %v822
        %v1389 = vunpack.c.l.b16 %v823
        %v1390 = vunpack.c.l.b16 %v824
        %v1391 = vunpack.c.l.b16 %v825
        %v1392 = vpack.c.b16 %v1389, %v1388
        %v1393 = vpack.c.b16 %v1391, %v1390
        %v1397 = vsel %vm1017, %v1383, 0
        %1399 = vmatpush.bf16.msra.mxu0 0
        %1400 = vmatpush.bf16.msra.mxu0 0
        %1401 = vmatpush.bf16.msra.mxu0 0
        %1402 = vmatpush.bf16.msra.mxu0 0
        %1403 = vmatpush.bf16.msra.mxu0 0
        %1404 = vmatpush.bf16.msra.mxu0 0
        %1405 = vmatpush.bf16.msra.mxu0 %v1393
        %1406 = vmatpush.bf16.msra.mxu0 %v1392
        %1407 = vmatmul.bf16.gmra.mxu0 %v1397
        %v1408 = vpop.f32.mrf.mxu0
        %v1409 = vadd.f32 0.0, %v1408
        %v1410 = vpop.f32.mrf.mxu0
        %v1411 = vadd.f32 0.0, %v1410
        %1412 = vdwg.mxu0
        %v1413 = vadd.f32 %v1312, %v1409
        %v1414 = vadd.f32 %v1313, %v1411
        %v1416 = vperm.slane %v826, 0
        %v1418 = vadd.f32 %v1413, %v1416
        %v1419 = vadd.f32 %v1414, %v1416
        %v1420 = vadd.f32 %v1418, %v700
        %v1421 = vadd.f32 %v1419, %v701
        %v1422 = vld [vmem:[%s9] sm:$0x1]
        %v1423 = vld [vmem:[%s10] sm:$0x1]
        %1424 = vadd.xlane.f32.xlu0 %v1420
        %v1425 = vpop.xlane.xlu0 %1424
        %1426 = vadd.xlane.f32.xlu0 %v1421
        %v1427 = vpop.xlane.xlu0 %1426
        %v1428 = vmul.f32 %v1425, %v715
        %v1429 = vmul.f32 %v1427, %v715
        %v1430 = vsub.f32 %v1420, %v1428
        %v1431 = vsub.f32 %v1421, %v1429
        %v1432 = vmul.f32 %v1430, %v1430
        %v1433 = vmul.f32 %v1431, %v1431
        %1434 = vadd.xlane.f32.xlu0 %v1432
        %v1435 = vpop.xlane.xlu0 %1434
        %1436 = vadd.xlane.f32.xlu0 %v1433
        %v1437 = vpop.xlane.xlu0 %1436
        %v1438 = vmul.f32 %v1435, %v715
        %v1439 = vmul.f32 %v1437, %v715
        %v1440 = vadd.f32 %v1438, 1e-05
        %v1441 = vadd.f32 %v1439, 1e-05
        %v1442 = vrsqrt.pop %v1440
        %v1443 = vmul.f32 %v1442, %v1440
        %v1444 = vmul.f32 %v1443, %v1442
        %v1445 = vmul.f32 0.5, %v1444
        %v1446 = vsub.f32 1.5, %v1445
        %v1447 = vmul.f32 %v1442, %v1446
        %vm1448 = vweird.f32 %v1440
        %vm1449 = vweird.f32 %v1442
        %vm1450 = vmor %vm1448, %vm1449
        %v1451 = vsel %vm1450, %v1442, %v1447
        %v1452 = vrsqrt.pop %v1441
        %v1453 = vmul.f32 %v1452, %v1441
        %v1454 = vmul.f32 %v1453, %v1452
        %v1455 = vmul.f32 0.5, %v1454
        %v1456 = vsub.f32 1.5, %v1455
        %v1457 = vmul.f32 %v1452, %v1456
        %vm1458 = vweird.f32 %v1441
        %vm1459 = vweird.f32 %v1452
        %vm1460 = vmor %vm1458, %vm1459
        %v1461 = vsel %vm1460, %v1452, %v1457
        %v1462 = vmul.f32 %v1430, %v1451
        %v1463 = vmul.f32 %v1431, %v1461
        %v1465 = vperm.slane %v1422, 0
        %v1467 = vmul.f32 %v1462, %v1465
        %v1468 = vmul.f32 %v1463, %v1465
        %v1470 = vperm.slane %v1423, 0
        %v1472 = vadd.f32 %v1467, %v1470
        %v1473 = vadd.f32 %v1468, %v1470
        %v1474 = vld [vmem:[%s11] sm:$0xf]
        %v1475 = vld [vmem:[%s11 + $0x4] sm:$0xf]
        %v1476 = vld [vmem:[%s11 + $0x8] sm:$0xf]
        %v1477 = vld [vmem:[%s11 + $0xc] sm:$0xf]
        %v1478 = vld [vmem:[%s11 + $0x10] sm:$0xf]
        %v1479 = vld [vmem:[%s11 + $0x14] sm:$0xf]
        %v1480 = vld [vmem:[%s11 + $0x18] sm:$0xf]
        %v1481 = vld [vmem:[%s11 + $0x1c] sm:$0xf]
        %v1482 = vld [vmem:[%s11 + $0x20] sm:$0xf]
        %v1483 = vld [vmem:[%s11 + $0x24] sm:$0xf]
        %v1484 = vld [vmem:[%s11 + $0x28] sm:$0xf]
        %v1485 = vld [vmem:[%s11 + $0x2c] sm:$0xf]
        %v1486 = vld [vmem:[%s11 + $0x30] sm:$0xf]
        %v1487 = vld [vmem:[%s11 + $0x34] sm:$0xf]
        %v1488 = vld [vmem:[%s11 + $0x38] sm:$0xf]
        %v1489 = vld [vmem:[%s11 + $0x3c] sm:$0xf]
        %v1490 = vld [vmem:[%s12] sm:$0xf]
        %v1491 = vld [vmem:[%s12 + $0x4] sm:$0xf]
        %v1492 = vld [vmem:[%s12 + $0x8] sm:$0xf]
        %v1493 = vld [vmem:[%s12 + $0xc] sm:$0xf]
        %v1494 = vld [vmem:[%s12 + $0x10] sm:$0xf]
        %v1495 = vld [vmem:[%s12 + $0x14] sm:$0xf]
        %v1496 = vld [vmem:[%s12 + $0x18] sm:$0xf]
        %v1497 = vld [vmem:[%s12 + $0x1c] sm:$0xf]
        %v1498 = vld [vmem:[%s13] sm:$0xf]
        %v1499 = vld [vmem:[%s13 + $0x4] sm:$0xf]
        %v1500 = vld [vmem:[%s13 + $0x8] sm:$0xf]
        %v1501 = vld [vmem:[%s13 + $0xc] sm:$0xf]
        %v1502 = vld [vmem:[%s13 + $0x10] sm:$0xf]
        %v1503 = vld [vmem:[%s13 + $0x14] sm:$0xf]
        %v1504 = vld [vmem:[%s13 + $0x18] sm:$0xf]
        %v1505 = vld [vmem:[%s13 + $0x1c] sm:$0xf]
        %v1506 = vld [vmem:[%s14] sm:$0xf]
        %v1507 = vld [vmem:[%s14 + $0x4] sm:$0xf]
        %v1508 = vld [vmem:[%s14 + $0x8] sm:$0xf]
        %v1509 = vld [vmem:[%s14 + $0xc] sm:$0xf]
        %v1510 = vld [vmem:[%s14 + $0x10] sm:$0xf]
        %v1511 = vld [vmem:[%s14 + $0x14] sm:$0xf]
        %v1512 = vld [vmem:[%s14 + $0x18] sm:$0xf]
        %v1513 = vld [vmem:[%s14 + $0x1c] sm:$0xf]
        %v1514 = vld [vmem:[%s14 + $0x20] sm:$0xf]
        %v1515 = vld [vmem:[%s14 + $0x24] sm:$0xf]
        %v1516 = vld [vmem:[%s14 + $0x28] sm:$0xf]
        %v1517 = vld [vmem:[%s14 + $0x2c] sm:$0xf]
        %v1518 = vld [vmem:[%s14 + $0x30] sm:$0xf]
        %v1519 = vld [vmem:[%s14 + $0x34] sm:$0xf]
        %v1520 = vld [vmem:[%s14 + $0x38] sm:$0xf]
        %v1521 = vld [vmem:[%s14 + $0x3c] sm:$0xf]
        %v1522 = vld [vmem:[%s15] sm:$0x1]
        %v1523 = vpack.c.bf16 %v1473, %v1472
        %v1540 = vunpack.c.l.b16 %v1474
        %v1541 = vunpack.c.l.b16 %v1475
        %v1542 = vunpack.c.l.b16 %v1476
        %v1543 = vunpack.c.l.b16 %v1477
        %v1544 = vunpack.c.l.b16 %v1478
        %v1545 = vunpack.c.l.b16 %v1479
        %v1546 = vunpack.c.l.b16 %v1480
        %v1547 = vunpack.c.l.b16 %v1481
        %v1548 = vunpack.c.l.b16 %v1482
        %v1549 = vunpack.c.l.b16 %v1483
        %v1550 = vunpack.c.l.b16 %v1484
        %v1551 = vunpack.c.l.b16 %v1485
        %v1552 = vunpack.c.l.b16 %v1486
        %v1553 = vunpack.c.l.b16 %v1487
        %v1554 = vunpack.c.l.b16 %v1488
        %v1555 = vunpack.c.l.b16 %v1489
        %v1556 = vpack.c.b16 %v1541, %v1540
        %v1557 = vpack.c.b16 %v1543, %v1542
        %v1558 = vpack.c.b16 %v1545, %v1544
        %v1559 = vpack.c.b16 %v1547, %v1546
        %v1560 = vpack.c.b16 %v1549, %v1548
        %v1561 = vpack.c.b16 %v1551, %v1550
        %v1562 = vpack.c.b16 %v1553, %v1552
        %v1563 = vpack.c.b16 %v1555, %v1554
        %1572 = vmatpush.bf16.msra.mxu0 %v1563
        %1573 = vmatpush.bf16.msra.mxu0 %v1562
        %1574 = vmatpush.bf16.msra.mxu0 %v1561
        %1575 = vmatpush.bf16.msra.mxu0 %v1560
        %1576 = vmatpush.bf16.msra.mxu0 %v1559
        %1577 = vmatpush.bf16.msra.mxu0 %v1558
        %1578 = vmatpush.bf16.msra.mxu0 %v1557
        %1579 = vmatpush.bf16.msra.mxu0 %v1556
        %1580 = vmatmul.bf16.gmra.mxu0 %v1523
        %v1581 = vpop.f32.mrf.mxu0
        %v1582 = vadd.f32 0.0, %v1581
        %v1583 = vpop.f32.mrf.mxu0
        %v1584 = vadd.f32 0.0, %v1583
        %1585 = vdwg.mxu0
        %v1586 = vpack.c.bf16 %v702, %v702
        %v1595 = vunpack.c.l.b16 %v1490
        %v1596 = vunpack.c.l.b16 %v1491
        %v1597 = vunpack.c.l.b16 %v1492
        %v1598 = vunpack.c.l.b16 %v1493
        %v1599 = vunpack.c.l.b16 %v1494
        %v1600 = vunpack.c.l.b16 %v1495
        %v1601 = vunpack.c.l.b16 %v1496
        %v1602 = vunpack.c.l.b16 %v1497
        %v1603 = vpack.c.b16 %v1596, %v1595
        %v1604 = vpack.c.b16 %v1598, %v1597
        %v1605 = vpack.c.b16 %v1600, %v1599
        %v1606 = vpack.c.b16 %v1602, %v1601
        %vm1611 = vcmask 523264
        %v1613 = vsel %vm1611, %v1586, 0
        %1615 = vmatpush.bf16.msra.mxu0 0
        %1616 = vmatpush.bf16.msra.mxu0 0
        %1617 = vmatpush.bf16.msra.mxu0 0
        %1618 = vmatpush.bf16.msra.mxu0 0
        %1619 = vmatpush.bf16.msra.mxu0 %v1606
        %1620 = vmatpush.bf16.msra.mxu0 %v1605
        %1621 = vmatpush.bf16.msra.mxu0 %v1604
        %1622 = vmatpush.bf16.msra.mxu0 %v1603
        %1623 = vmatmul.bf16.gmra.mxu0 %v1613
        %v1624 = vpop.f32.mrf.mxu0
        %v1625 = vadd.f32 0.0, %v1624
        %v1626 = vpop.f32.mrf.mxu0
        %1627 = vdwg.mxu0
        %v1636 = vunpack.c.l.b16 %v1498
        %v1637 = vunpack.c.l.b16 %v1499
        %v1638 = vunpack.c.l.b16 %v1500
        %v1639 = vunpack.c.l.b16 %v1501
        %v1640 = vunpack.c.l.b16 %v1502
        %v1641 = vunpack.c.l.b16 %v1503
        %v1642 = vunpack.c.l.b16 %v1504
        %v1643 = vunpack.c.l.b16 %v1505
        %v1644 = vpack.c.b16 %v1637, %v1636
        %v1645 = vpack.c.b16 %v1639, %v1638
        %v1646 = vpack.c.b16 %v1641, %v1640
        %v1647 = vpack.c.b16 %v1643, %v1642
        %1652 = vmatpush.bf16.msra.mxu0 0
        %1653 = vmatpush.bf16.msra.mxu0 0
        %1654 = vmatpush.bf16.msra.mxu0 0
        %1655 = vmatpush.bf16.msra.mxu0 0
        %1656 = vmatpush.bf16.msra.mxu0 %v1647
        %1657 = vmatpush.bf16.msra.mxu0 %v1646
        %1658 = vmatpush.bf16.msra.mxu0 %v1645
        %1659 = vmatpush.bf16.msra.mxu0 %v1644
        %1660 = vmatmul.bf16.gmra.mxu0 %v1613
        %v1661 = vpop.f32.mrf.mxu0
        %v1662 = vadd.f32 0.0, %v1661
        %v1663 = vpop.f32.mrf.mxu0
        %1664 = vdwg.mxu0
        %v1665 = vpack.c.bf16 %v1584, %v1582
        %v1666 = vpack.c.bf16 %v1625, %v1625
        %v1667 = vpack.c.bf16 %v1662, %v1662
        %v1669 = vsel %vm1017, %v1665, 0
        %v1672 = vsel %vm1017, %v1666, 0
        %1674 = vmatpush.bf16.xpose.msra.mxu0 0
        %1675 = vmatpush.bf16.xpose.msra.mxu0 0
        %1676 = vmatpush.bf16.xpose.msra.mxu0 0
        %1677 = vmatpush.bf16.xpose.msra.mxu0 0
        %1678 = vmatpush.bf16.xpose.msra.mxu0 0
        %1679 = vmatpush.bf16.xpose.msra.mxu0 0
        %1680 = vmatpush.bf16.xpose.msra.mxu0 0
        %1681 = vmatpush.bf16.xpose.msra.mxu0 %v1672
        %1682 = vmatmul.bf16.gmra.mxu0 %v1669
        %v1683 = vpop.f32.mrf.mxu0
        %v1684 = vadd.f32 0.0, %v1683
        %v1685 = vpop.f32.mrf.mxu0
        %v1686 = vadd.f32 0.0, %v1685
        %1687 = vdwg.mxu0
        %v1688 = vmul.f32 %v1684, 0.17677669
        %v1689 = vmul.f32 %v1686, 0.17677669
        %vm1690 = vcmask 64512
        %v1691 = vsel %vm1690, %v1688, -inf
        %1692 = vmax.xlane.f32.xlu0 %v1691
        %v1693 = vpop.xlane.xlu0 %1692
        %v1694 = vsel %vm1690, %v1689, -inf
        %1695 = vmax.xlane.f32.xlu0 %v1694
        %v1696 = vpop.xlane.xlu0 %1695
        %v1697 = vsub.f32 %v1688, %v1693
        %v1698 = vsub.f32 %v1689, %v1696
        %v1699 = vmul.f32 %v1697, 1.442695
        %v1700 = vpow.pop %v1699
        %v1701 = vmul.f32 %v1698, 1.442695
        %v1702 = vpow.pop %v1701
        %v1703 = vsel %vm1690, %v1700, 0.0
        %1704 = vadd.xlane.f32.xlu0 %v1703
        %v1705 = vpop.xlane.xlu0 %1704
        %v1706 = vsel %vm1690, %v1702, 0.0
        %1707 = vadd.xlane.f32.xlu0 %v1706
        %v1708 = vpop.xlane.xlu0 %1707
        %v1709 = vrcp.pop %v1705
        %v1710 = vrcp.pop %v1708
        %v1711 = vmul.f32 %v1700, %v1709
        %v1712 = vmul.f32 %v1702, %v1710
        %v1713 = vpack.c.bf16 %v1712, %v1711
        %v1715 = vsel %vm1690, %v1713, 0
        %vm1717 = vcmask 1043456
        %v1719 = vsel %vm1717, %v1667, 0
        %1721 = vmatpush.bf16.msra.mxu0 0
        %1722 = vmatpush.bf16.msra.mxu0 0
        %1723 = vmatpush.bf16.msra.mxu0 0
        %1724 = vmatpush.bf16.msra.mxu0 0
        %1725 = vmatpush.bf16.msra.mxu0 0
        %1726 = vmatpush.bf16.msra.mxu0 0
        %1727 = vmatpush.bf16.msra.mxu0 0
        %1728 = vmatpush.bf16.msra.mxu0 %v1719
        %1729 = vmatmul.bf16.gmra.mxu0 %v1715
        %v1730 = vpop.f32.mrf.mxu0
        %v1731 = vadd.f32 0.0, %v1730
        %v1732 = vpop.f32.mrf.mxu0
        %v1733 = vadd.f32 0.0, %v1732
        %1734 = vdwg.mxu0
        %v1735 = vpack.c.bf16 %v1733, %v1731
        %1737 = vrot.lane.b32.xlu0 %v1665, 96
        %v1738 = vpop.permute.xlu0 %1737
        %1740 = vrot.lane.b32.xlu0 %v1666, 96
        %v1741 = vpop.permute.xlu0 %1740
        %v1743 = vsel %vm1017, %v1738, 0
        %v1746 = vsel %vm1017, %v1741, 0
        %1748 = vmatpush.bf16.xpose.msra.mxu0 0
        %1749 = vmatpush.bf16.xpose.msra.mxu0 0
        %1750 = vmatpush.bf16.xpose.msra.mxu0 0
        %1751 = vmatpush.bf16.xpose.msra.mxu0 0
        %1752 = vmatpush.bf16.xpose.msra.mxu0 0
        %1753 = vmatpush.bf16.xpose.msra.mxu0 0
        %1754 = vmatpush.bf16.xpose.msra.mxu0 0
        %1755 = vmatpush.bf16.xpose.msra.mxu0 %v1746
        %1756 = vmatmul.bf16.gmra.mxu0 %v1743
        %v1757 = vpop.f32.mrf.mxu0
        %v1758 = vadd.f32 0.0, %v1757
        %v1759 = vpop.f32.mrf.mxu0
        %v1760 = vadd.f32 0.0, %v1759
        %1761 = vdwg.mxu0
        %v1762 = vmul.f32 %v1758, 0.17677669
        %v1763 = vmul.f32 %v1760, 0.17677669
        %v1764 = vsel %vm1690, %v1762, -inf
        %1765 = vmax.xlane.f32.xlu0 %v1764
        %v1766 = vpop.xlane.xlu0 %1765
        %v1767 = vsel %vm1690, %v1763, -inf
        %1768 = vmax.xlane.f32.xlu0 %v1767
        %v1769 = vpop.xlane.xlu0 %1768
        %v1770 = vsub.f32 %v1762, %v1766
        %v1771 = vsub.f32 %v1763, %v1769
        %v1772 = vmul.f32 %v1770, 1.442695
        %v1773 = vpow.pop %v1772
        %v1774 = vmul.f32 %v1771, 1.442695
        %v1775 = vpow.pop %v1774
        %v1776 = vsel %vm1690, %v1773, 0.0
        %1777 = vadd.xlane.f32.xlu0 %v1776
        %v1778 = vpop.xlane.xlu0 %1777
        %v1779 = vsel %vm1690, %v1775, 0.0
        %1780 = vadd.xlane.f32.xlu0 %v1779
        %v1781 = vpop.xlane.xlu0 %1780
        %v1782 = vrcp.pop %v1778
        %v1783 = vrcp.pop %v1781
        %v1784 = vmul.f32 %v1773, %v1782
        %v1785 = vmul.f32 %v1775, %v1783
        %v1786 = vpack.c.bf16 %v1785, %v1784
        %1788 = vrot.lane.b32.xlu0 %v1667, 96
        %v1789 = vpop.permute.xlu0 %1788
        %v1791 = vsel %vm1690, %v1786, 0
        %v1794 = vsel %vm1717, %v1789, 0
        %1796 = vmatpush.bf16.msra.mxu0 0
        %1797 = vmatpush.bf16.msra.mxu0 0
        %1798 = vmatpush.bf16.msra.mxu0 0
        %1799 = vmatpush.bf16.msra.mxu0 0
        %1800 = vmatpush.bf16.msra.mxu0 0
        %1801 = vmatpush.bf16.msra.mxu0 0
        %1802 = vmatpush.bf16.msra.mxu0 0
        %1803 = vmatpush.bf16.msra.mxu0 %v1794
        %1804 = vmatmul.bf16.gmra.mxu0 %v1791
        %v1805 = vpop.f32.mrf.mxu0
        %v1806 = vadd.f32 0.0, %v1805
        %v1807 = vpop.f32.mrf.mxu0
        %v1808 = vadd.f32 0.0, %v1807
        %1809 = vdwg.mxu0
        %v1810 = vpack.c.bf16 %v1808, %v1806
        %v1815 = vunpack.c.l.b16 %v1510
        %v1816 = vunpack.c.l.b16 %v1511
        %v1817 = vunpack.c.l.b16 %v1512
        %v1818 = vunpack.c.l.b16 %v1513
        %v1819 = vpack.c.b16 %v1816, %v1815
        %v1820 = vpack.c.b16 %v1818, %v1817
        %v1824 = vsel %vm1017, %v1810, 0
        %1826 = vmatpush.bf16.msra.mxu0 0
        %1827 = vmatpush.bf16.msra.mxu0 0
        %1828 = vmatpush.bf16.msra.mxu0 0
        %1829 = vmatpush.bf16.msra.mxu0 0
        %1830 = vmatpush.bf16.msra.mxu0 0
        %1831 = vmatpush.bf16.msra.mxu0 0
        %1832 = vmatpush.bf16.msra.mxu0 %v1820
        %1833 = vmatpush.bf16.msra.mxu0 %v1819
        %1834 = vmatmul.bf16.gmra.mxu0 %v1824
        %v1835 = vpop.f32.mrf.mxu0
        %v1836 = vadd.f32 0.0, %v1835
        %v1837 = vpop.f32.mrf.mxu0
        %v1838 = vadd.f32 0.0, %v1837
        %1839 = vdwg.mxu0
        %v1844 = vunpack.c.l.b16 %v1506
        %v1845 = vunpack.c.l.b16 %v1507
        %v1846 = vunpack.c.l.b16 %v1508
        %v1847 = vunpack.c.l.b16 %v1509
        %v1848 = vpack.c.b16 %v1845, %v1844
        %v1849 = vpack.c.b16 %v1847, %v1846
        %v1853 = vsel %vm1017, %v1735, 0
        %1855 = vmatpush.bf16.msra.mxu0 0
        %1856 = vmatpush.bf16.msra.mxu0 0
        %1857 = vmatpush.bf16.msra.mxu0 0
        %1858 = vmatpush.bf16.msra.mxu0 0
        %1859 = vmatpush.bf16.msra.mxu0 0
        %1860 = vmatpush.bf16.msra.mxu0 0
        %1861 = vmatpush.bf16.msra.mxu0 %v1849
        %1862 = vmatpush.bf16.msra.mxu0 %v1848
        %1863 = vmatmul.bf16.gmra.mxu0 %v1853
        %v1864 = vpop.f32.mrf.mxu0
        %v1865 = vadd.f32 %v1836, %v1864
        %v1866 = vpop.f32.mrf.mxu0
        %v1867 = vadd.f32 %v1838, %v1866
        %1868 = vdwg.mxu0
        %1869 = vrot.lane.b32.xlu0 %v1665, 64
        %v1870 = vpop.permute.xlu0 %1869
        %1871 = vrot.lane.b32.xlu0 %v1666, 64
        %v1872 = vpop.permute.xlu0 %1871
        %v1874 = vsel %vm1017, %v1870, 0
        %v1877 = vsel %vm1017, %v1872, 0
        %1879 = vmatpush.bf16.xpose.msra.mxu0 0
        %1880 = vmatpush.bf16.xpose.msra.mxu0 0
        %1881 = vmatpush.bf16.xpose.msra.mxu0 0
        %1882 = vmatpush.bf16.xpose.msra.mxu0 0
        %1883 = vmatpush.bf16.xpose.msra.mxu0 0
        %1884 = vmatpush.bf16.xpose.msra.mxu0 0
        %1885 = vmatpush.bf16.xpose.msra.mxu0 0
        %1886 = vmatpush.bf16.xpose.msra.mxu0 %v1877
        %1887 = vmatmul.bf16.gmra.mxu0 %v1874
        %v1888 = vpop.f32.mrf.mxu0
        %v1889 = vadd.f32 0.0, %v1888
        %v1890 = vpop.f32.mrf.mxu0
        %v1891 = vadd.f32 0.0, %v1890
        %1892 = vdwg.mxu0
        %v1893 = vmul.f32 %v1889, 0.17677669
        %v1894 = vmul.f32 %v1891, 0.17677669
        %v1895 = vsel %vm1690, %v1893, -inf
        %1896 = vmax.xlane.f32.xlu0 %v1895
        %v1897 = vpop.xlane.xlu0 %1896
        %v1898 = vsel %vm1690, %v1894, -inf
        %1899 = vmax.xlane.f32.xlu0 %v1898
        %v1900 = vpop.xlane.xlu0 %1899
        %v1901 = vsub.f32 %v1893, %v1897
        %v1902 = vsub.f32 %v1894, %v1900
        %v1903 = vmul.f32 %v1901, 1.442695
        %v1904 = vpow.pop %v1903
        %v1905 = vmul.f32 %v1902, 1.442695
        %v1906 = vpow.pop %v1905
        %v1907 = vsel %vm1690, %v1904, 0.0
        %1908 = vadd.xlane.f32.xlu0 %v1907
        %v1909 = vpop.xlane.xlu0 %1908
        %v1910 = vsel %vm1690, %v1906, 0.0
        %1911 = vadd.xlane.f32.xlu0 %v1910
        %v1912 = vpop.xlane.xlu0 %1911
        %v1913 = vrcp.pop %v1909
        %v1914 = vrcp.pop %v1912
        %v1915 = vmul.f32 %v1904, %v1913
        %v1916 = vmul.f32 %v1906, %v1914
        %v1917 = vpack.c.bf16 %v1916, %v1915
        %1918 = vrot.lane.b32.xlu0 %v1667, 64
        %v1919 = vpop.permute.xlu0 %1918
        %v1921 = vsel %vm1690, %v1917, 0
        %v1924 = vsel %vm1717, %v1919, 0
        %1926 = vmatpush.bf16.msra.mxu0 0
        %1927 = vmatpush.bf16.msra.mxu0 0
        %1928 = vmatpush.bf16.msra.mxu0 0
        %1929 = vmatpush.bf16.msra.mxu0 0
        %1930 = vmatpush.bf16.msra.mxu0 0
        %1931 = vmatpush.bf16.msra.mxu0 0
        %1932 = vmatpush.bf16.msra.mxu0 0
        %1933 = vmatpush.bf16.msra.mxu0 %v1924
        %1934 = vmatmul.bf16.gmra.mxu0 %v1921
        %v1935 = vpop.f32.mrf.mxu0
        %v1936 = vadd.f32 0.0, %v1935
        %v1937 = vpop.f32.mrf.mxu0
        %v1938 = vadd.f32 0.0, %v1937
        %1939 = vdwg.mxu0
        %v1940 = vpack.c.bf16 %v1938, %v1936
        %v1945 = vunpack.c.l.b16 %v1514
        %v1946 = vunpack.c.l.b16 %v1515
        %v1947 = vunpack.c.l.b16 %v1516
        %v1948 = vunpack.c.l.b16 %v1517
        %v1949 = vpack.c.b16 %v1946, %v1945
        %v1950 = vpack.c.b16 %v1948, %v1947
        %v1954 = vsel %vm1017, %v1940, 0
        %1956 = vmatpush.bf16.msra.mxu0 0
        %1957 = vmatpush.bf16.msra.mxu0 0
        %1958 = vmatpush.bf16.msra.mxu0 0
        %1959 = vmatpush.bf16.msra.mxu0 0
        %1960 = vmatpush.bf16.msra.mxu0 0
        %1961 = vmatpush.bf16.msra.mxu0 0
        %1962 = vmatpush.bf16.msra.mxu0 %v1950
        %1963 = vmatpush.bf16.msra.mxu0 %v1949
        %1964 = vmatmul.bf16.gmra.mxu0 %v1954
        %v1965 = vpop.f32.mrf.mxu0
        %v1966 = vadd.f32 0.0, %v1965
        %v1967 = vpop.f32.mrf.mxu0
        %v1968 = vadd.f32 0.0, %v1967
        %1969 = vdwg.mxu0
        %v1970 = vadd.f32 %v1865, %v1966
        %v1971 = vadd.f32 %v1867, %v1968
        %1972 = vrot.lane.b32.xlu0 %v1665, 32
        %v1973 = vpop.permute.xlu0 %1972
        %1974 = vrot.lane.b32.xlu0 %v1666, 32
        %v1975 = vpop.permute.xlu0 %1974
        %v1977 = vsel %vm1017, %v1973, 0
        %v1980 = vsel %vm1017, %v1975, 0
        %1982 = vmatpush.bf16.xpose.msra.mxu0 0
        %1983 = vmatpush.bf16.xpose.msra.mxu0 0
        %1984 = vmatpush.bf16.xpose.msra.mxu0 0
        %1985 = vmatpush.bf16.xpose.msra.mxu0 0
        %1986 = vmatpush.bf16.xpose.msra.mxu0 0
        %1987 = vmatpush.bf16.xpose.msra.mxu0 0
        %1988 = vmatpush.bf16.xpose.msra.mxu0 0
        %1989 = vmatpush.bf16.xpose.msra.mxu0 %v1980
        %1990 = vmatmul.bf16.gmra.mxu0 %v1977
        %v1991 = vpop.f32.mrf.mxu0
        %v1992 = vadd.f32 0.0, %v1991
        %v1993 = vpop.f32.mrf.mxu0
        %v1994 = vadd.f32 0.0, %v1993
        %1995 = vdwg.mxu0
        %v1996 = vmul.f32 %v1992, 0.17677669
        %v1997 = vmul.f32 %v1994, 0.17677669
        %v1998 = vsel %vm1690, %v1996, -inf
        %1999 = vmax.xlane.f32.xlu0 %v1998
        %v2000 = vpop.xlane.xlu0 %1999
        %v2001 = vsel %vm1690, %v1997, -inf
        %2002 = vmax.xlane.f32.xlu0 %v2001
        %v2003 = vpop.xlane.xlu0 %2002
        %v2004 = vsub.f32 %v1996, %v2000
        %v2005 = vsub.f32 %v1997, %v2003
        %v2006 = vmul.f32 %v2004, 1.442695
        %v2007 = vpow.pop %v2006
        %v2008 = vmul.f32 %v2005, 1.442695
        %v2009 = vpow.pop %v2008
        %v2010 = vsel %vm1690, %v2007, 0.0
        %2011 = vadd.xlane.f32.xlu0 %v2010
        %v2012 = vpop.xlane.xlu0 %2011
        %v2013 = vsel %vm1690, %v2009, 0.0
        %2014 = vadd.xlane.f32.xlu0 %v2013
        %v2015 = vpop.xlane.xlu0 %2014
        %v2016 = vrcp.pop %v2012
        %v2017 = vrcp.pop %v2015
        %v2018 = vmul.f32 %v2007, %v2016
        %v2019 = vmul.f32 %v2009, %v2017
        %v2020 = vpack.c.bf16 %v2019, %v2018
        %2021 = vrot.lane.b32.xlu0 %v1667, 32
        %v2022 = vpop.permute.xlu0 %2021
        %v2024 = vsel %vm1690, %v2020, 0
        %v2027 = vsel %vm1717, %v2022, 0
        %2029 = vmatpush.bf16.msra.mxu0 0
        %2030 = vmatpush.bf16.msra.mxu0 0
        %2031 = vmatpush.bf16.msra.mxu0 0
        %2032 = vmatpush.bf16.msra.mxu0 0
        %2033 = vmatpush.bf16.msra.mxu0 0
        %2034 = vmatpush.bf16.msra.mxu0 0
        %2035 = vmatpush.bf16.msra.mxu0 0
        %2036 = vmatpush.bf16.msra.mxu0 %v2027
        %2037 = vmatmul.bf16.gmra.mxu0 %v2024
        %v2038 = vpop.f32.mrf.mxu0
        %v2039 = vadd.f32 0.0, %v2038
        %v2040 = vpop.f32.mrf.mxu0
        %v2041 = vadd.f32 0.0, %v2040
        %2042 = vdwg.mxu0
        %v2043 = vpack.c.bf16 %v2041, %v2039
        %v2048 = vunpack.c.l.b16 %v1518
        %v2049 = vunpack.c.l.b16 %v1519
        %v2050 = vunpack.c.l.b16 %v1520
        %v2051 = vunpack.c.l.b16 %v1521
        %v2052 = vpack.c.b16 %v2049, %v2048
        %v2053 = vpack.c.b16 %v2051, %v2050
        %v2057 = vsel %vm1017, %v2043, 0
        %2059 = vmatpush.bf16.msra.mxu0 0
        %2060 = vmatpush.bf16.msra.mxu0 0
        %2061 = vmatpush.bf16.msra.mxu0 0
        %2062 = vmatpush.bf16.msra.mxu0 0
        %2063 = vmatpush.bf16.msra.mxu0 0
        %2064 = vmatpush.bf16.msra.mxu0 0
        %2065 = vmatpush.bf16.msra.mxu0 %v2053
        %2066 = vmatpush.bf16.msra.mxu0 %v2052
        %2067 = vmatmul.bf16.gmra.mxu0 %v2057
        %v2068 = vpop.f32.mrf.mxu0
        %v2069 = vadd.f32 0.0, %v2068
        %v2070 = vpop.f32.mrf.mxu0
        %v2071 = vadd.f32 0.0, %v2070
        %2072 = vdwg.mxu0
        %v2073 = vadd.f32 %v1970, %v2069
        %v2074 = vadd.f32 %v1971, %v2071
        %v2076 = vperm.slane %v1522, 0
        %v2078 = vadd.f32 %v2073, %v2076
        %v2079 = vadd.f32 %v2074, %v2076
        %v2080 = vadd.f32 %v2078, %v1420
        %v2081 = vadd.f32 %v2079, %v1421
        %v2082 = vld [vmem:[%s16] sm:$0x1]
        %v2083 = vld [vmem:[%s17] sm:$0x1]
        %2084 = vadd.xlane.f32.xlu0 %v2080
        %v2085 = vpop.xlane.xlu0 %2084
        %2086 = vadd.xlane.f32.xlu0 %v2081
        %v2087 = vpop.xlane.xlu0 %2086
        %v2088 = vmul.f32 %v2085, %v715
        %v2089 = vmul.f32 %v2087, %v715
        %v2090 = vsub.f32 %v2080, %v2088
        %v2091 = vsub.f32 %v2081, %v2089
        %v2092 = vmul.f32 %v2090, %v2090
        %v2093 = vmul.f32 %v2091, %v2091
        %2094 = vadd.xlane.f32.xlu0 %v2092
        %v2095 = vpop.xlane.xlu0 %2094
        %2096 = vadd.xlane.f32.xlu0 %v2093
        %v2097 = vpop.xlane.xlu0 %2096
        %v2098 = vmul.f32 %v2095, %v715
        %v2099 = vmul.f32 %v2097, %v715
        %v2100 = vadd.f32 %v2098, 1e-05
        %v2101 = vadd.f32 %v2099, 1e-05
        %v2102 = vrsqrt.pop %v2100
        %v2103 = vmul.f32 %v2102, %v2100
        %v2104 = vmul.f32 %v2103, %v2102
        %v2105 = vmul.f32 0.5, %v2104
        %v2106 = vsub.f32 1.5, %v2105
        %v2107 = vmul.f32 %v2102, %v2106
        %vm2108 = vweird.f32 %v2100
        %vm2109 = vweird.f32 %v2102
        %vm2110 = vmor %vm2108, %vm2109
        %v2111 = vsel %vm2110, %v2102, %v2107
        %v2112 = vrsqrt.pop %v2101
        %v2113 = vmul.f32 %v2112, %v2101
        %v2114 = vmul.f32 %v2113, %v2112
        %v2115 = vmul.f32 0.5, %v2114
        %v2116 = vsub.f32 1.5, %v2115
        %v2117 = vmul.f32 %v2112, %v2116
        %vm2118 = vweird.f32 %v2101
        %vm2119 = vweird.f32 %v2112
        %vm2120 = vmor %vm2118, %vm2119
        %v2121 = vsel %vm2120, %v2112, %v2117
        %v2122 = vmul.f32 %v2090, %v2111
        %v2123 = vmul.f32 %v2091, %v2121
        %v2125 = vperm.slane %v2082, 0
        %v2127 = vmul.f32 %v2122, %v2125
        %v2128 = vmul.f32 %v2123, %v2125
        %v2130 = vperm.slane %v2083, 0
        %v2132 = vadd.f32 %v2127, %v2130
        %v2133 = vadd.f32 %v2128, %v2130
        %v2134 = vpack.c.bf16 %v2133, %v2132
        %v2135 = vld [vmem:[%s18] sm:$0xff]
        %v2136 = vld [vmem:[%s18 + $0x8] sm:$0xff]
        %v2137 = vld [vmem:[%s18 + $0x10] sm:$0xff]
        %v2138 = vld [vmem:[%s18 + $0x18] sm:$0xff]
        %v2139 = vld [vmem:[%s18 + $0x20] sm:$0xff]
        %v2140 = vld [vmem:[%s18 + $0x28] sm:$0xff]
        %v2141 = vld [vmem:[%s18 + $0x30] sm:$0xff]
        %v2142 = vld [vmem:[%s18 + $0x38] sm:$0xff]
        %v2143 = vld [vmem:[%s18 + $0x40] sm:$0xff]
        %v2144 = vld [vmem:[%s18 + $0x48] sm:$0xff]
        %v2145 = vld [vmem:[%s18 + $0x50] sm:$0xff]
        %v2146 = vld [vmem:[%s18 + $0x58] sm:$0xff]
        %v2147 = vld [vmem:[%s18 + $0x60] sm:$0xff]
        %v2148 = vld [vmem:[%s18 + $0x68] sm:$0xff]
        %v2149 = vld [vmem:[%s18 + $0x70] sm:$0xff]
        %v2150 = vld [vmem:[%s18 + $0x78] sm:$0xff]
        %v2151 = vld [vmem:[%s18 + $0x80] sm:$0xff]
        %v2152 = vld [vmem:[%s18 + $0x88] sm:$0xff]
        %v2153 = vld [vmem:[%s18 + $0x90] sm:$0xff]
        %v2154 = vld [vmem:[%s18 + $0x98] sm:$0xff]
        %v2155 = vld [vmem:[%s18 + $0xa0] sm:$0xff]
        %v2156 = vld [vmem:[%s18 + $0xa8] sm:$0xff]
        %v2157 = vld [vmem:[%s18 + $0xb0] sm:$0xff]
        %v2158 = vld [vmem:[%s18 + $0xb8] sm:$0xff]
        %v2159 = vld [vmem:[%s18 + $0xc0] sm:$0xff]
        %v2160 = vld [vmem:[%s18 + $0xc8] sm:$0xff]
        %v2161 = vld [vmem:[%s18 + $0xd0] sm:$0xff]
        %v2162 = vld [vmem:[%s18 + $0xd8] sm:$0xff]
        %v2163 = vld [vmem:[%s18 + $0xe0] sm:$0xff]
        %v2164 = vld [vmem:[%s18 + $0xe8] sm:$0xff]
        %v2165 = vld [vmem:[%s18 + $0xf0] sm:$0xff]
        %v2166 = vld [vmem:[%s18 + $0xf8] sm:$0xff]
        %v2167 = vld [vmem:[%s18 + $0x100] sm:$0xff]
        %v2168 = vld [vmem:[%s18 + $0x108] sm:$0xff]
        %v2169 = vld [vmem:[%s18 + $0x110] sm:$0xff]
        %v2170 = vld [vmem:[%s18 + $0x118] sm:$0xff]
        %v2171 = vld [vmem:[%s18 + $0x120] sm:$0xff]
        %v2172 = vld [vmem:[%s18 + $0x128] sm:$0xff]
        %v2173 = vld [vmem:[%s18 + $0x130] sm:$0xff]
        %v2174 = vld [vmem:[%s18 + $0x138] sm:$0xff]
        %v2175 = vld [vmem:[%s18 + $0x140] sm:$0xff]
        %v2176 = vld [vmem:[%s18 + $0x148] sm:$0xff]
        %v2177 = vld [vmem:[%s18 + $0x150] sm:$0xff]
        %v2178 = vld [vmem:[%s18 + $0x158] sm:$0xff]
        %v2179 = vld [vmem:[%s18 + $0x160] sm:$0xff]
        %v2180 = vld [vmem:[%s18 + $0x168] sm:$0xff]
        %v2181 = vld [vmem:[%s18 + $0x170] sm:$0xff]
        %v2182 = vld [vmem:[%s18 + $0x178] sm:$0xff]
        %v2183 = vld [vmem:[%s18 + $0x180] sm:$0xff]
        %v2184 = vld [vmem:[%s18 + $0x188] sm:$0xff]
        %v2185 = vld [vmem:[%s18 + $0x190] sm:$0xff]
        %v2186 = vld [vmem:[%s18 + $0x198] sm:$0xff]
        %v2187 = vld [vmem:[%s18 + $0x1a0] sm:$0xff]
        %v2188 = vld [vmem:[%s18 + $0x1a8] sm:$0xff]
        %v2189 = vld [vmem:[%s18 + $0x1b0] sm:$0xff]
        %v2190 = vld [vmem:[%s18 + $0x1b8] sm:$0xff]
        %v2191 = vld [vmem:[%s18 + $0x1c0] sm:$0xff]
        %v2192 = vld [vmem:[%s18 + $0x1c8] sm:$0xff]
        %v2193 = vld [vmem:[%s18 + $0x1d0] sm:$0xff]
        %v2194 = vld [vmem:[%s18 + $0x1d8] sm:$0xff]
        %v2195 = vld [vmem:[%s18 + $0x1e0] sm:$0xff]
        %v2196 = vld [vmem:[%s18 + $0x1e8] sm:$0xff]
        %v2197 = vld [vmem:[%s18 + $0x1f0] sm:$0xff]
        %v2198 = vld [vmem:[%s18 + $0x1f8] sm:$0xff]
        %v2199 = vld [vmem:[%s19] sm:$0xff]
        %v2201 = vperm.slane %v2199, 0
        %v2202 = vperm.slane %v2199, 1
        %v2203 = vperm.slane %v2199, 2
        %v2204 = vperm.slane %v2199, 3
        %v2205 = vperm.slane %v2199, 4
        %v2206 = vperm.slane %v2199, 5
        %v2207 = vperm.slane %v2199, 6
        %v2208 = vperm.slane %v2199, 7
        %v2281 = vunpack.c.l.b16 %v2135
        %v2282 = vunpack.c.h.b16 %v2135
        %v2283 = vunpack.c.l.b16 %v2136
        %v2284 = vunpack.c.h.b16 %v2136
        %v2285 = vunpack.c.l.b16 %v2137
        %v2286 = vunpack.c.h.b16 %v2137
        %v2287 = vunpack.c.l.b16 %v2138
        %v2288 = vunpack.c.h.b16 %v2138
        %v2289 = vunpack.c.l.b16 %v2139
        %v2290 = vunpack.c.h.b16 %v2139
        %v2291 = vunpack.c.l.b16 %v2140
        %v2292 = vunpack.c.h.b16 %v2140
        %v2293 = vunpack.c.l.b16 %v2141
        %v2294 = vunpack.c.h.b16 %v2141
        %v2295 = vunpack.c.l.b16 %v2142
        %v2296 = vunpack.c.h.b16 %v2142
        %v2297 = vunpack.c.l.b16 %v2143
        %v2298 = vunpack.c.h.b16 %v2143
        %v2299 = vunpack.c.l.b16 %v2144
        %v2300 = vunpack.c.h.b16 %v2144
        %v2301 = vunpack.c.l.b16 %v2145
        %v2302 = vunpack.c.h.b16 %v2145
        %v2303 = vunpack.c.l.b16 %v2146
        %v2304 = vunpack.c.h.b16 %v2146
        %v2305 = vunpack.c.l.b16 %v2147
        %v2306 = vunpack.c.h.b16 %v2147
        %v2307 = vunpack.c.l.b16 %v2148
        %v2308 = vunpack.c.h.b16 %v2148
        %v2309 = vunpack.c.l.b16 %v2149
        %v2310 = vunpack.c.h.b16 %v2149
        %v2311 = vunpack.c.l.b16 %v2150
        %v2312 = vunpack.c.h.b16 %v2150
        %v2313 = vunpack.c.l.b16 %v2151
        %v2314 = vunpack.c.h.b16 %v2151
        %v2315 = vunpack.c.l.b16 %v2152
        %v2316 = vunpack.c.h.b16 %v2152
        %v2317 = vunpack.c.l.b16 %v2153
        %v2318 = vunpack.c.h.b16 %v2153
        %v2319 = vunpack.c.l.b16 %v2154
        %v2320 = vunpack.c.h.b16 %v2154
        %v2321 = vunpack.c.l.b16 %v2155
        %v2322 = vunpack.c.h.b16 %v2155
        %v2323 = vunpack.c.l.b16 %v2156
        %v2324 = vunpack.c.h.b16 %v2156
        %v2325 = vunpack.c.l.b16 %v2157
        %v2326 = vunpack.c.h.b16 %v2157
        %v2327 = vunpack.c.l.b16 %v2158
        %v2328 = vunpack.c.h.b16 %v2158
        %v2329 = vunpack.c.l.b16 %v2159
        %v2330 = vunpack.c.h.b16 %v2159
        %v2331 = vunpack.c.l.b16 %v2160
        %v2332 = vunpack.c.h.b16 %v2160
        %v2333 = vunpack.c.l.b16 %v2161
        %v2334 = vunpack.c.h.b16 %v2161
        %v2335 = vunpack.c.l.b16 %v2162
        %v2336 = vunpack.c.h.b16 %v2162
        %v2337 = vunpack.c.l.b16 %v2163
        %v2338 = vunpack.c.h.b16 %v2163
        %v2339 = vunpack.c.l.b16 %v2164
        %v2340 = vunpack.c.h.b16 %v2164
        %v2341 = vunpack.c.l.b16 %v2165
        %v2342 = vunpack.c.h.b16 %v2165
        %v2343 = vunpack.c.l.b16 %v2166
        %v2344 = vunpack.c.h.b16 %v2166
        %v2345 = vunpack.c.l.b16 %v2167
        %v2346 = vunpack.c.h.b16 %v2167
        %v2347 = vunpack.c.l.b16 %v2168
        %v2348 = vunpack.c.h.b16 %v2168
        %v2349 = vunpack.c.l.b16 %v2169
        %v2350 = vunpack.c.h.b16 %v2169
        %v2351 = vunpack.c.l.b16 %v2170
        %v2352 = vunpack.c.h.b16 %v2170
        %v2353 = vunpack.c.l.b16 %v2171
        %v2354 = vunpack.c.h.b16 %v2171
        %v2355 = vunpack.c.l.b16 %v2172
        %v2356 = vunpack.c.h.b16 %v2172
        %v2357 = vunpack.c.l.b16 %v2173
        %v2358 = vunpack.c.h.b16 %v2173
        %v2359 = vunpack.c.l.b16 %v2174
        %v2360 = vunpack.c.h.b16 %v2174
        %v2361 = vunpack.c.l.b16 %v2175
        %v2362 = vunpack.c.h.b16 %v2175
        %v2363 = vunpack.c.l.b16 %v2176
        %v2364 = vunpack.c.h.b16 %v2176
        %v2365 = vunpack.c.l.b16 %v2177
        %v2366 = vunpack.c.h.b16 %v2177
        %v2367 = vunpack.c.l.b16 %v2178
        %v2368 = vunpack.c.h.b16 %v2178
        %v2369 = vunpack.c.l.b16 %v2179
        %v2370 = vunpack.c.h.b16 %v2179
        %v2371 = vunpack.c.l.b16 %v2180
        %v2372 = vunpack.c.h.b16 %v2180
        %v2373 = vunpack.c.l.b16 %v2181
        %v2374 = vunpack.c.h.b16 %v2181
        %v2375 = vunpack.c.l.b16 %v2182
        %v2376 = vunpack.c.h.b16 %v2182
        %v2377 = vunpack.c.l.b16 %v2183
        %v2378 = vunpack.c.h.b16 %v2183
        %v2379 = vunpack.c.l.b16 %v2184
        %v2380 = vunpack.c.h.b16 %v2184
        %v2381 = vunpack.c.l.b16 %v2185
        %v2382 = vunpack.c.h.b16 %v2185
        %v2383 = vunpack.c.l.b16 %v2186
        %v2384 = vunpack.c.h.b16 %v2186
        %v2385 = vunpack.c.l.b16 %v2187
        %v2386 = vunpack.c.h.b16 %v2187
        %v2387 = vunpack.c.l.b16 %v2188
        %v2388 = vunpack.c.h.b16 %v2188
        %v2389 = vunpack.c.l.b16 %v2189
        %v2390 = vunpack.c.h.b16 %v2189
        %v2391 = vunpack.c.l.b16 %v2190
        %v2392 = vunpack.c.h.b16 %v2190
        %v2393 = vunpack.c.l.b16 %v2191
        %v2394 = vunpack.c.h.b16 %v2191
        %v2395 = vunpack.c.l.b16 %v2192
        %v2396 = vunpack.c.h.b16 %v2192
        %v2397 = vunpack.c.l.b16 %v2193
        %v2398 = vunpack.c.h.b16 %v2193
        %v2399 = vunpack.c.l.b16 %v2194
        %v2400 = vunpack.c.h.b16 %v2194
        %v2401 = vunpack.c.l.b16 %v2195
        %v2402 = vunpack.c.h.b16 %v2195
        %v2403 = vunpack.c.l.b16 %v2196
        %v2404 = vunpack.c.h.b16 %v2196
        %v2405 = vunpack.c.l.b16 %v2197
        %v2406 = vunpack.c.h.b16 %v2197
        %v2407 = vunpack.c.l.b16 %v2198
        %v2408 = vunpack.c.h.b16 %v2198
        %v2409 = vpack.c.b16 %v2289, %v2281
        %v2410 = vpack.c.b16 %v2290, %v2282
        %v2411 = vpack.c.b16 %v2291, %v2283
        %v2412 = vpack.c.b16 %v2292, %v2284
        %v2413 = vpack.c.b16 %v2293, %v2285
        %v2414 = vpack.c.b16 %v2294, %v2286
        %v2415 = vpack.c.b16 %v2295, %v2287
        %v2416 = vpack.c.b16 %v2296, %v2288
        %v2417 = vpack.c.b16 %v2305, %v2297
        %v2418 = vpack.c.b16 %v2306, %v2298
        %v2419 = vpack.c.b16 %v2307, %v2299
        %v2420 = vpack.c.b16 %v2308, %v2300
        %v2421 = vpack.c.b16 %v2309, %v2301
        %v2422 = vpack.c.b16 %v2310, %v2302
        %v2423 = vpack.c.b16 %v2311, %v2303
        %v2424 = vpack.c.b16 %v2312, %v2304
        %v2425 = vpack.c.b16 %v2321, %v2313
        %v2426 = vpack.c.b16 %v2322, %v2314
        %v2427 = vpack.c.b16 %v2323, %v2315
        %v2428 = vpack.c.b16 %v2324, %v2316
        %v2429 = vpack.c.b16 %v2325, %v2317
        %v2430 = vpack.c.b16 %v2326, %v2318
        %v2431 = vpack.c.b16 %v2327, %v2319
        %v2432 = vpack.c.b16 %v2328, %v2320
        %v2433 = vpack.c.b16 %v2337, %v2329
        %v2434 = vpack.c.b16 %v2338, %v2330
        %v2435 = vpack.c.b16 %v2339, %v2331
        %v2436 = vpack.c.b16 %v2340, %v2332
        %v2437 = vpack.c.b16 %v2341, %v2333
        %v2438 = vpack.c.b16 %v2342, %v2334
        %v2439 = vpack.c.b16 %v2343, %v2335
        %v2440 = vpack.c.b16 %v2344, %v2336
        %v2441 = vpack.c.b16 %v2353, %v2345
        %v2442 = vpack.c.b16 %v2354, %v2346
        %v2443 = vpack.c.b16 %v2355, %v2347
        %v2444 = vpack.c.b16 %v2356, %v2348
        %v2445 = vpack.c.b16 %v2357, %v2349
        %v2446 = vpack.c.b16 %v2358, %v2350
        %v2447 = vpack.c.b16 %v2359, %v2351
        %v2448 = vpack.c.b16 %v2360, %v2352
        %v2449 = vpack.c.b16 %v2369, %v2361
        %v2450 = vpack.c.b16 %v2370, %v2362
        %v2451 = vpack.c.b16 %v2371, %v2363
        %v2452 = vpack.c.b16 %v2372, %v2364
        %v2453 = vpack.c.b16 %v2373, %v2365
        %v2454 = vpack.c.b16 %v2374, %v2366
        %v2455 = vpack.c.b16 %v2375, %v2367
        %v2456 = vpack.c.b16 %v2376, %v2368
        %v2457 = vpack.c.b16 %v2385, %v2377
        %v2458 = vpack.c.b16 %v2386, %v2378
        %v2459 = vpack.c.b16 %v2387, %v2379
        %v2460 = vpack.c.b16 %v2388, %v2380
        %v2461 = vpack.c.b16 %v2389, %v2381
        %v2462 = vpack.c.b16 %v2390, %v2382
        %v2463 = vpack.c.b16 %v2391, %v2383
        %v2464 = vpack.c.b16 %v2392, %v2384
        %v2465 = vpack.c.b16 %v2401, %v2393
        %v2466 = vpack.c.b16 %v2402, %v2394
        %v2467 = vpack.c.b16 %v2403, %v2395
        %v2468 = vpack.c.b16 %v2404, %v2396
        %v2469 = vpack.c.b16 %v2405, %v2397
        %v2470 = vpack.c.b16 %v2406, %v2398
        %v2471 = vpack.c.b16 %v2407, %v2399
        %v2472 = vpack.c.b16 %v2408, %v2400
        %2537 = vmatpush.bf16.msra.mxu0 %v2465
        %2538 = vmatpush.bf16.msra.mxu0 %v2457
        %2539 = vmatpush.bf16.msra.mxu0 %v2449
        %2540 = vmatpush.bf16.msra.mxu0 %v2441
        %2541 = vmatpush.bf16.msra.mxu0 %v2433
        %2542 = vmatpush.bf16.msra.mxu0 %v2425
        %2543 = vmatpush.bf16.msra.mxu0 %v2417
        %2544 = vmatpush.bf16.msra.mxu0 %v2409
        %2545 = vmatmul.bf16.gmra.mxu0 %v2134
        %v2546 = vpop.f32.mrf.mxu0
        %v2547 = vadd.f32 %v2201, %v2546
        %v2548 = vpop.f32.mrf.mxu0
        %v2549 = vadd.f32 %v2201, %v2548
        %2550 = vdwg.mxu0
        %2551 = vmatpush.bf16.msra.mxu0 %v2466
        %2552 = vmatpush.bf16.msra.mxu0 %v2458
        %2553 = vmatpush.bf16.msra.mxu0 %v2450
        %2554 = vmatpush.bf16.msra.mxu0 %v2442
        %2555 = vmatpush.bf16.msra.mxu0 %v2434
        %2556 = vmatpush.bf16.msra.mxu0 %v2426
        %2557 = vmatpush.bf16.msra.mxu0 %v2418
        %2558 = vmatpush.bf16.msra.mxu0 %v2410
        %2559 = vmatmul.bf16.gmra.mxu0 %v2134
        %v2560 = vpop.f32.mrf.mxu0
        %v2561 = vadd.f32 %v2202, %v2560
        %v2562 = vpop.f32.mrf.mxu0
        %v2563 = vadd.f32 %v2202, %v2562
        %2564 = vdwg.mxu0
        %2565 = vmatpush.bf16.msra.mxu0 %v2467
        %2566 = vmatpush.bf16.msra.mxu0 %v2459
        %2567 = vmatpush.bf16.msra.mxu0 %v2451
        %2568 = vmatpush.bf16.msra.mxu0 %v2443
        %2569 = vmatpush.bf16.msra.mxu0 %v2435
        %2570 = vmatpush.bf16.msra.mxu0 %v2427
        %2571 = vmatpush.bf16.msra.mxu0 %v2419
        %2572 = vmatpush.bf16.msra.mxu0 %v2411
        %2573 = vmatmul.bf16.gmra.mxu0 %v2134
        %v2574 = vpop.f32.mrf.mxu0
        %v2575 = vadd.f32 %v2203, %v2574
        %v2576 = vpop.f32.mrf.mxu0
        %v2577 = vadd.f32 %v2203, %v2576
        %2578 = vdwg.mxu0
        %2579 = vmatpush.bf16.msra.mxu0 %v2468
        %2580 = vmatpush.bf16.msra.mxu0 %v2460
        %2581 = vmatpush.bf16.msra.mxu0 %v2452
        %2582 = vmatpush.bf16.msra.mxu0 %v2444
        %2583 = vmatpush.bf16.msra.mxu0 %v2436
        %2584 = vmatpush.bf16.msra.mxu0 %v2428
        %2585 = vmatpush.bf16.msra.mxu0 %v2420
        %2586 = vmatpush.bf16.msra.mxu0 %v2412
        %2587 = vmatmul.bf16.gmra.mxu0 %v2134
        %v2588 = vpop.f32.mrf.mxu0
        %v2589 = vadd.f32 %v2204, %v2588
        %v2590 = vpop.f32.mrf.mxu0
        %v2591 = vadd.f32 %v2204, %v2590
        %2592 = vdwg.mxu0
        %2593 = vmatpush.bf16.msra.mxu0 %v2469
        %2594 = vmatpush.bf16.msra.mxu0 %v2461
        %2595 = vmatpush.bf16.msra.mxu0 %v2453
        %2596 = vmatpush.bf16.msra.mxu0 %v2445
        %2597 = vmatpush.bf16.msra.mxu0 %v2437
        %2598 = vmatpush.bf16.msra.mxu0 %v2429
        %2599 = vmatpush.bf16.msra.mxu0 %v2421
        %2600 = vmatpush.bf16.msra.mxu0 %v2413
        %2601 = vmatmul.bf16.gmra.mxu0 %v2134
        %v2602 = vpop.f32.mrf.mxu0
        %v2603 = vadd.f32 %v2205, %v2602
        %v2604 = vpop.f32.mrf.mxu0
        %v2605 = vadd.f32 %v2205, %v2604
        %2606 = vdwg.mxu0
        %2607 = vmatpush.bf16.msra.mxu0 %v2470
        %2608 = vmatpush.bf16.msra.mxu0 %v2462
        %2609 = vmatpush.bf16.msra.mxu0 %v2454
        %2610 = vmatpush.bf16.msra.mxu0 %v2446
        %2611 = vmatpush.bf16.msra.mxu0 %v2438
        %2612 = vmatpush.bf16.msra.mxu0 %v2430
        %2613 = vmatpush.bf16.msra.mxu0 %v2422
        %2614 = vmatpush.bf16.msra.mxu0 %v2414
        %2615 = vmatmul.bf16.gmra.mxu0 %v2134
        %v2616 = vpop.f32.mrf.mxu0
        %v2617 = vadd.f32 %v2206, %v2616
        %v2618 = vpop.f32.mrf.mxu0
        %v2619 = vadd.f32 %v2206, %v2618
        %2620 = vdwg.mxu0
        %2621 = vmatpush.bf16.msra.mxu0 %v2471
        %2622 = vmatpush.bf16.msra.mxu0 %v2463
        %2623 = vmatpush.bf16.msra.mxu0 %v2455
        %2624 = vmatpush.bf16.msra.mxu0 %v2447
        %2625 = vmatpush.bf16.msra.mxu0 %v2439
        %2626 = vmatpush.bf16.msra.mxu0 %v2431
        %2627 = vmatpush.bf16.msra.mxu0 %v2423
        %2628 = vmatpush.bf16.msra.mxu0 %v2415
        %2629 = vmatmul.bf16.gmra.mxu0 %v2134
        %v2630 = vpop.f32.mrf.mxu0
        %v2631 = vadd.f32 %v2207, %v2630
        %v2632 = vpop.f32.mrf.mxu0
        %v2633 = vadd.f32 %v2207, %v2632
        %2634 = vdwg.mxu0
        %2635 = vmatpush.bf16.msra.mxu0 %v2472
        %2636 = vmatpush.bf16.msra.mxu0 %v2464
        %2637 = vmatpush.bf16.msra.mxu0 %v2456
        %2638 = vmatpush.bf16.msra.mxu0 %v2448
        %2639 = vmatpush.bf16.msra.mxu0 %v2440
        %2640 = vmatpush.bf16.msra.mxu0 %v2432
        %2641 = vmatpush.bf16.msra.mxu0 %v2424
        %2642 = vmatpush.bf16.msra.mxu0 %v2416
        %2643 = vmatmul.bf16.gmra.mxu0 %v2134
        %v2644 = vpop.f32.mrf.mxu0
        %v2645 = vadd.f32 %v2208, %v2644
        %v2646 = vpop.f32.mrf.mxu0
        %v2647 = vadd.f32 %v2208, %v2646
        %2648 = vdwg.mxu0
        %v2649 = vmul.f32 %v2603, 0.5
        %v2650 = vmul.f32 %v2617, 0.5
        %v2651 = vmul.f32 %v2631, 0.5
        %v2652 = vmul.f32 %v2645, 0.5
        %v2653 = vmul.f32 %v2605, 0.5
        %v2654 = vmul.f32 %v2619, 0.5
        %v2655 = vmul.f32 %v2633, 0.5
        %v2656 = vmul.f32 %v2647, 0.5
        %v2657 = vmul.f32 %v2603, 0.044715
        %v2658 = vmul.f32 %v2617, 0.044715
        %v2659 = vmul.f32 %v2631, 0.044715
        %v2660 = vmul.f32 %v2645, 0.044715
        %v2661 = vmul.f32 %v2605, 0.044715
        %v2662 = vmul.f32 %v2619, 0.044715
        %v2663 = vmul.f32 %v2633, 0.044715
        %v2664 = vmul.f32 %v2647, 0.044715
        %v2665 = vmul.f32 %v2657, %v2603
        %v2666 = vmul.f32 %v2658, %v2617
        %v2667 = vmul.f32 %v2659, %v2631
        %v2668 = vmul.f32 %v2660, %v2645
        %v2669 = vmul.f32 %v2661, %v2605
        %v2670 = vmul.f32 %v2662, %v2619
        %v2671 = vmul.f32 %v2663, %v2633
        %v2672 = vmul.f32 %v2664, %v2647
        %v2673 = vmul.f32 %v2665, %v2603
        %v2674 = vmul.f32 %v2666, %v2617
        %v2675 = vmul.f32 %v2667, %v2631
        %v2676 = vmul.f32 %v2668, %v2645
        %v2677 = vmul.f32 %v2669, %v2605
        %v2678 = vmul.f32 %v2670, %v2619
        %v2679 = vmul.f32 %v2671, %v2633
        %v2680 = vmul.f32 %v2672, %v2647
        %v2681 = vadd.f32 %v2603, %v2673
        %v2682 = vadd.f32 %v2617, %v2674
        %v2683 = vadd.f32 %v2631, %v2675
        %v2684 = vadd.f32 %v2645, %v2676
        %v2685 = vadd.f32 %v2605, %v2677
        %v2686 = vadd.f32 %v2619, %v2678
        %v2687 = vadd.f32 %v2633, %v2679
        %v2688 = vadd.f32 %v2647, %v2680
        %v2689 = vmul.f32 %v2681, 0.7978846
        %v2690 = vmul.f32 %v2682, 0.7978846
        %v2691 = vmul.f32 %v2683, 0.7978846
        %v2692 = vmul.f32 %v2684, 0.7978846
        %v2693 = vmul.f32 %v2685, 0.7978846
        %v2694 = vmul.f32 %v2686, 0.7978846
        %v2695 = vmul.f32 %v2687, 0.7978846
        %v2696 = vmul.f32 %v2688, 0.7978846
        %v2697 = vtanh.pop %v2689
        %v2698 = vtanh.pop %v2690
        %v2699 = vtanh.pop %v2691
        %v2700 = vtanh.pop %v2692
        %v2701 = vtanh.pop %v2693
        %v2702 = vtanh.pop %v2694
        %v2703 = vtanh.pop %v2695
        %v2704 = vtanh.pop %v2696
        %v2705 = vadd.f32 %v2697, 1.0
        %v2706 = vadd.f32 %v2698, 1.0
        %v2707 = vadd.f32 %v2699, 1.0
        %v2708 = vadd.f32 %v2700, 1.0
        %v2709 = vadd.f32 %v2701, 1.0
        %v2710 = vadd.f32 %v2702, 1.0
        %v2711 = vadd.f32 %v2703, 1.0
        %v2712 = vadd.f32 %v2704, 1.0
        %v2713 = vmul.f32 %v2649, %v2705
        %v2714 = vmul.f32 %v2650, %v2706
        %v2715 = vmul.f32 %v2651, %v2707
        %v2716 = vmul.f32 %v2652, %v2708
        %v2717 = vmul.f32 %v2653, %v2709
        %v2718 = vmul.f32 %v2654, %v2710
        %v2719 = vmul.f32 %v2655, %v2711
        %v2720 = vmul.f32 %v2656, %v2712
        %v2721 = vmul.f32 %v2547, %v2713
        %v2722 = vmul.f32 %v2561, %v2714
        %v2723 = vmul.f32 %v2575, %v2715
        %v2724 = vmul.f32 %v2589, %v2716
        %v2725 = vmul.f32 %v2549, %v2717
        %v2726 = vmul.f32 %v2563, %v2718
        %v2727 = vmul.f32 %v2577, %v2719
        %v2728 = vmul.f32 %v2591, %v2720
        %v2729 = vpack.c.bf16 %v2725, %v2721
        %v2730 = vpack.c.bf16 %v2726, %v2722
        %v2731 = vpack.c.bf16 %v2727, %v2723
        %v2732 = vpack.c.bf16 %v2728, %v2724
        %v2733 = vld [vmem:[%s20] sm:$0xf]
        %v2734 = vld [vmem:[%s20 + $0x4] sm:$0xf]
        %v2735 = vld [vmem:[%s20 + $0x8] sm:$0xf]
        %v2736 = vld [vmem:[%s20 + $0xc] sm:$0xf]
        %v2737 = vld [vmem:[%s20 + $0x10] sm:$0xf]
        %v2738 = vld [vmem:[%s20 + $0x14] sm:$0xf]
        %v2739 = vld [vmem:[%s20 + $0x18] sm:$0xf]
        %v2740 = vld [vmem:[%s20 + $0x1c] sm:$0xf]
        %v2741 = vld [vmem:[%s20 + $0x20] sm:$0xf]
        %v2742 = vld [vmem:[%s20 + $0x24] sm:$0xf]
        %v2743 = vld [vmem:[%s20 + $0x28] sm:$0xf]
        %v2744 = vld [vmem:[%s20 + $0x2c] sm:$0xf]
        %v2745 = vld [vmem:[%s20 + $0x30] sm:$0xf]
        %v2746 = vld [vmem:[%s20 + $0x34] sm:$0xf]
        %v2747 = vld [vmem:[%s20 + $0x38] sm:$0xf]
        %v2748 = vld [vmem:[%s20 + $0x3c] sm:$0xf]
        %v2749 = vld [vmem:[%s20 + $0x40] sm:$0xf]
        %v2750 = vld [vmem:[%s20 + $0x44] sm:$0xf]
        %v2751 = vld [vmem:[%s20 + $0x48] sm:$0xf]
        %v2752 = vld [vmem:[%s20 + $0x4c] sm:$0xf]
        %v2753 = vld [vmem:[%s20 + $0x50] sm:$0xf]
        %v2754 = vld [vmem:[%s20 + $0x54] sm:$0xf]
        %v2755 = vld [vmem:[%s20 + $0x58] sm:$0xf]
        %v2756 = vld [vmem:[%s20 + $0x5c] sm:$0xf]
        %v2757 = vld [vmem:[%s20 + $0x60] sm:$0xf]
        %v2758 = vld [vmem:[%s20 + $0x64] sm:$0xf]
        %v2759 = vld [vmem:[%s20 + $0x68] sm:$0xf]
        %v2760 = vld [vmem:[%s20 + $0x6c] sm:$0xf]
        %v2761 = vld [vmem:[%s20 + $0x70] sm:$0xf]
        %v2762 = vld [vmem:[%s20 + $0x74] sm:$0xf]
        %v2763 = vld [vmem:[%s20 + $0x78] sm:$0xf]
        %v2764 = vld [vmem:[%s20 + $0x7c] sm:$0xf]
        %v2765 = vld [vmem:[%s20 + $0x80] sm:$0xf]
        %v2766 = vld [vmem:[%s20 + $0x84] sm:$0xf]
        %v2767 = vld [vmem:[%s20 + $0x88] sm:$0xf]
        %v2768 = vld [vmem:[%s20 + $0x8c] sm:$0xf]
        %v2769 = vld [vmem:[%s20 + $0x90] sm:$0xf]
        %v2770 = vld [vmem:[%s20 + $0x94] sm:$0xf]
        %v2771 = vld [vmem:[%s20 + $0x98] sm:$0xf]
        %v2772 = vld [vmem:[%s20 + $0x9c] sm:$0xf]
        %v2773 = vld [vmem:[%s20 + $0xa0] sm:$0xf]
        %v2774 = vld [vmem:[%s20 + $0xa4] sm:$0xf]
        %v2775 = vld [vmem:[%s20 + $0xa8] sm:$0xf]
        %v2776 = vld [vmem:[%s20 + $0xac] sm:$0xf]
        %v2777 = vld [vmem:[%s20 + $0xb0] sm:$0xf]
        %v2778 = vld [vmem:[%s20 + $0xb4] sm:$0xf]
        %v2779 = vld [vmem:[%s20 + $0xb8] sm:$0xf]
        %v2780 = vld [vmem:[%s20 + $0xbc] sm:$0xf]
        %v2781 = vld [vmem:[%s20 + $0xc0] sm:$0xf]
        %v2782 = vld [vmem:[%s20 + $0xc4] sm:$0xf]
        %v2783 = vld [vmem:[%s20 + $0xc8] sm:$0xf]
        %v2784 = vld [vmem:[%s20 + $0xcc] sm:$0xf]
        %v2785 = vld [vmem:[%s20 + $0xd0] sm:$0xf]
        %v2786 = vld [vmem:[%s20 + $0xd4] sm:$0xf]
        %v2787 = vld [vmem:[%s20 + $0xd8] sm:$0xf]
        %v2788 = vld [vmem:[%s20 + $0xdc] sm:$0xf]
        %v2789 = vld [vmem:[%s20 + $0xe0] sm:$0xf]
        %v2790 = vld [vmem:[%s20 + $0xe4] sm:$0xf]
        %v2791 = vld [vmem:[%s20 + $0xe8] sm:$0xf]
        %v2792 = vld [vmem:[%s20 + $0xec] sm:$0xf]
        %v2793 = vld [vmem:[%s20 + $0xf0] sm:$0xf]
        %v2794 = vld [vmem:[%s20 + $0xf4] sm:$0xf]
        %v2795 = vld [vmem:[%s20 + $0xf8] sm:$0xf]
        %v2796 = vld [vmem:[%s20 + $0xfc] sm:$0xf]
        %v2797 = vld [vmem:[%s21] sm:$0x1]
        %v2799 = vperm.slane %v2797, 0
        %v2865 = vunpack.c.l.b16 %v2733
        %v2866 = vunpack.c.l.b16 %v2734
        %v2867 = vunpack.c.l.b16 %v2735
        %v2868 = vunpack.c.l.b16 %v2736
        %v2869 = vunpack.c.l.b16 %v2737
        %v2870 = vunpack.c.l.b16 %v2738
        %v2871 = vunpack.c.l.b16 %v2739
        %v2872 = vunpack.c.l.b16 %v2740
        %v2873 = vunpack.c.l.b16 %v2741
        %v2874 = vunpack.c.l.b16 %v2742
        %v2875 = vunpack.c.l.b16 %v2743
        %v2876 = vunpack.c.l.b16 %v2744
        %v2877 = vunpack.c.l.b16 %v2745
        %v2878 = vunpack.c.l.b16 %v2746
        %v2879 = vunpack.c.l.b16 %v2747
        %v2880 = vunpack.c.l.b16 %v2748
        %v2881 = vunpack.c.l.b16 %v2749
        %v2882 = vunpack.c.l.b16 %v2750
        %v2883 = vunpack.c.l.b16 %v2751
        %v2884 = vunpack.c.l.b16 %v2752
        %v2885 = vunpack.c.l.b16 %v2753
        %v2886 = vunpack.c.l.b16 %v2754
        %v2887 = vunpack.c.l.b16 %v2755
        %v2888 = vunpack.c.l.b16 %v2756
        %v2889 = vunpack.c.l.b16 %v2757
        %v2890 = vunpack.c.l.b16 %v2758
        %v2891 = vunpack.c.l.b16 %v2759
        %v2892 = vunpack.c.l.b16 %v2760
        %v2893 = vunpack.c.l.b16 %v2761
        %v2894 = vunpack.c.l.b16 %v2762
        %v2895 = vunpack.c.l.b16 %v2763
        %v2896 = vunpack.c.l.b16 %v2764
        %v2897 = vunpack.c.l.b16 %v2765
        %v2898 = vunpack.c.l.b16 %v2766
        %v2899 = vunpack.c.l.b16 %v2767
        %v2900 = vunpack.c.l.b16 %v2768
        %v2901 = vunpack.c.l.b16 %v2769
        %v2902 = vunpack.c.l.b16 %v2770
        %v2903 = vunpack.c.l.b16 %v2771
        %v2904 = vunpack.c.l.b16 %v2772
        %v2905 = vunpack.c.l.b16 %v2773
        %v2906 = vunpack.c.l.b16 %v2774
        %v2907 = vunpack.c.l.b16 %v2775
        %v2908 = vunpack.c.l.b16 %v2776
        %v2909 = vunpack.c.l.b16 %v2777
        %v2910 = vunpack.c.l.b16 %v2778
        %v2911 = vunpack.c.l.b16 %v2779
        %v2912 = vunpack.c.l.b16 %v2780
        %v2913 = vunpack.c.l.b16 %v2781
        %v2914 = vunpack.c.l.b16 %v2782
        %v2915 = vunpack.c.l.b16 %v2783
        %v2916 = vunpack.c.l.b16 %v2784
        %v2917 = vunpack.c.l.b16 %v2785
        %v2918 = vunpack.c.l.b16 %v2786
        %v2919 = vunpack.c.l.b16 %v2787
        %v2920 = vunpack.c.l.b16 %v2788
        %v2921 = vunpack.c.l.b16 %v2789
        %v2922 = vunpack.c.l.b16 %v2790
        %v2923 = vunpack.c.l.b16 %v2791
        %v2924 = vunpack.c.l.b16 %v2792
        %v2925 = vunpack.c.l.b16 %v2793
        %v2926 = vunpack.c.l.b16 %v2794
        %v2927 = vunpack.c.l.b16 %v2795
        %v2928 = vunpack.c.l.b16 %v2796
        %v2929 = vpack.c.b16 %v2866, %v2865
        %v2930 = vpack.c.b16 %v2868, %v2867
        %v2931 = vpack.c.b16 %v2870, %v2869
        %v2932 = vpack.c.b16 %v2872, %v2871
        %v2933 = vpack.c.b16 %v2874, %v2873
        %v2934 = vpack.c.b16 %v2876, %v2875
        %v2935 = vpack.c.b16 %v2878, %v2877
        %v2936 = vpack.c.b16 %v2880, %v2879
        %v2937 = vpack.c.b16 %v2882, %v2881
        %v2938 = vpack.c.b16 %v2884, %v2883
        %v2939 = vpack.c.b16 %v2886, %v2885
        %v2940 = vpack.c.b16 %v2888, %v2887
        %v2941 = vpack.c.b16 %v2890, %v2889
        %v2942 = vpack.c.b16 %v2892, %v2891
        %v2943 = vpack.c.b16 %v2894, %v2893
        %v2944 = vpack.c.b16 %v2896, %v2895
        %v2945 = vpack.c.b16 %v2898, %v2897
        %v2946 = vpack.c.b16 %v2900, %v2899
        %v2947 = vpack.c.b16 %v2902, %v2901
        %v2948 = vpack.c.b16 %v2904, %v2903
        %v2949 = vpack.c.b16 %v2906, %v2905
        %v2950 = vpack.c.b16 %v2908, %v2907
        %v2951 = vpack.c.b16 %v2910, %v2909
        %v2952 = vpack.c.b16 %v2912, %v2911
        %v2953 = vpack.c.b16 %v2914, %v2913
        %v2954 = vpack.c.b16 %v2916, %v2915
        %v2955 = vpack.c.b16 %v2918, %v2917
        %v2956 = vpack.c.b16 %v2920, %v2919
        %v2957 = vpack.c.b16 %v2922, %v2921
        %v2958 = vpack.c.b16 %v2924, %v2923
        %v2959 = vpack.c.b16 %v2926, %v2925
        %v2960 = vpack.c.b16 %v2928, %v2927
        %2993 = vmatpush.bf16.msra.mxu0 %v2936
        %2994 = vmatpush.bf16.msra.mxu0 %v2935
        %2995 = vmatpush.bf16.msra.mxu0 %v2934
        %2996 = vmatpush.bf16.msra.mxu0 %v2933
        %2997 = vmatpush.bf16.msra.mxu0 %v2932
        %2998 = vmatpush.bf16.msra.mxu0 %v2931
        %2999 = vmatpush.bf16.msra.mxu0 %v2930
        %3000 = vmatpush.bf16.msra.mxu0 %v2929
        %3001 = vmatmul.bf16.gmra.mxu0 %v2729
        %v3002 = vpop.f32.mrf.mxu0
        %v3003 = vadd.f32 %v2799, %v3002
        %v3004 = vpop.f32.mrf.mxu0
        %v3005 = vadd.f32 %v2799, %v3004
        %3006 = vdwg.mxu0
        %3007 = vmatpush.bf16.msra.mxu0 %v2944
        %3008 = vmatpush.bf16.msra.mxu0 %v2943
        %3009 = vmatpush.bf16.msra.mxu0 %v2942
        %3010 = vmatpush.bf16.msra.mxu0 %v2941
        %3011 = vmatpush.bf16.msra.mxu0 %v2940
        %3012 = vmatpush.bf16.msra.mxu0 %v2939
        %3013 = vmatpush.bf16.msra.mxu0 %v2938
        %3014 = vmatpush.bf16.msra.mxu0 %v2937
        %3015 = vmatmul.bf16.gmra.mxu0 %v2730
        %v3016 = vpop.f32.mrf.mxu0
        %v3017 = vadd.f32 %v3003, %v3016
        %v3018 = vpop.f32.mrf.mxu0
        %v3019 = vadd.f32 %v3005, %v3018
        %3020 = vdwg.mxu0
        %3021 = vmatpush.bf16.msra.mxu0 %v2952
        %3022 = vmatpush.bf16.msra.mxu0 %v2951
        %3023 = vmatpush.bf16.msra.mxu0 %v2950
        %3024 = vmatpush.bf16.msra.mxu0 %v2949
        %3025 = vmatpush.bf16.msra.mxu0 %v2948
        %3026 = vmatpush.bf16.msra.mxu0 %v2947
        %3027 = vmatpush.bf16.msra.mxu0 %v2946
        %3028 = vmatpush.bf16.msra.mxu0 %v2945
        %3029 = vmatmul.bf16.gmra.mxu0 %v2731
        %v3030 = vpop.f32.mrf.mxu0
        %v3031 = vadd.f32 %v3017, %v3030
        %v3032 = vpop.f32.mrf.mxu0
        %v3033 = vadd.f32 %v3019, %v3032
        %3034 = vdwg.mxu0
        %3035 = vmatpush.bf16.msra.mxu0 %v2960
        %3036 = vmatpush.bf16.msra.mxu0 %v2959
        %3037 = vmatpush.bf16.msra.mxu0 %v2958
        %3038 = vmatpush.bf16.msra.mxu0 %v2957
        %3039 = vmatpush.bf16.msra.mxu0 %v2956
        %3040 = vmatpush.bf16.msra.mxu0 %v2955
        %3041 = vmatpush.bf16.msra.mxu0 %v2954
        %3042 = vmatpush.bf16.msra.mxu0 %v2953
        %3043 = vmatmul.bf16.gmra.mxu0 %v2732
        %v3044 = vpop.f32.mrf.mxu0
        %v3045 = vadd.f32 %v3031, %v3044
        %v3046 = vpop.f32.mrf.mxu0
        %v3047 = vadd.f32 %v3033, %v3046
        %3048 = vdwg.mxu0
        %v3049 = vadd.f32 %v3045, %v2080
        %v3050 = vadd.f32 %v3047, %v2081
        %3051 = vst [vmem:[%s689] sm:$0xff] %v3049
        %3052 = vst [vmem:[%s689 + $0x8] sm:$0xff] %v3050
        %s3053 = sand.u32 %s516, 1
        %s3054 = scalar_lea.sflag [#allocation3], %s3053
        %s3055 = sand.u32 %s516, 1
        %s3056 = smul.addr %s3055, 16
        %s3057 = scalar_lea.vmem [#allocation2], %s3056
        // Predicated region
        $region109: #{basic_transformer_block.1} parent=107 // pred_check
          %p3058 = pneg %p526
        $region110: #{basic_transformer_block.1} parent=107 // pred_check_branch
          %3060 = sbr.rel (%p3058) target = $region112
        $region111: #{basic_transformer_block.1} parent=107 // pred_region
          %3062 = vsyncadd %s3054, 0
          %s3063 = smul.addr %s36, 2
          %s3064 = smul.addr %s3063, 8
          %s3065 = scalar_lea.hbm %s22, %s3064
          %s3066 = sshll.u32 %s3057, 4
          %s3067 = int_to_ptr.vmem [resolvable:$true] %s3066
          %s3068 = sshll.u32 %s3065, 4
          %s3069 = int_to_ptr.hbm [resolvable:$true] %s3068
          %3074 = dma.vmem_to_hbm [thread:$0]  %s3067, 256, %s3069, %s3054, 128, 128, 8
        $region112: #{basic_transformer_block.1} parent=107 // pred_fallthru
          _
      $region108: #{basic_transformer_block.1} parent=5 // pred_fallthru
        _
      %p3075 = scmp.le.s32.totalorder 2, %s31
      // Predicated region
      $region113: #{basic_transformer_block.1} parent=5 // pred_check
        %p3076 = pneg %p3075
      $region114: #{basic_transformer_block.1} parent=5 // pred_check_branch
        %3078 = sbr.rel (%p3076) target = $region116
      $region115: #{basic_transformer_block.1} parent=5 // pred_region
        %s3079 = ssub.s32 %s31, 2
        // Predicated region
        $region117: #{basic_transformer_block.1} parent=115 // pred_check
          %p3080 = pneg %p532
        $region118: #{basic_transformer_block.1} parent=115 // pred_check_branch
          %3082 = sbr.rel (%p3080) target = $region120
        $region119: #{basic_transformer_block.1} parent=115 // pred_region
          %s3083 = sand.u32 %s517, 1
          %s3084 = scalar_lea.sflag [#allocation3], %s3083
          %s3085 = sand.u32 %s517, 1
          %s3086 = smul.addr %s3085, 16
          %s3087 = scalar_lea.vmem [#allocation2], %s3086
          %3089 = dma.done %s3084, 256
        $region120: #{basic_transformer_block.1} parent=115 // pred_fallthru
          _
      $region116: #{basic_transformer_block.1} parent=5 // pred_fallthru
        _
    $region6: #{basic_transformer_block.1} parent=1 // loop_footer
      %s35 = sadd.s32 1, %s31
    $region7: #{basic_transformer_block.1} parent=1 // loop_footer_branch
      %30 = sbr.rel target = $region3
    $region8: #{basic_transformer_block.1} parent=1 // loop_exit
      _
    %3090 = vsyncpa [#allocation3], 1
    %s3091 = scalar_lea.sflag [#allocation3], 1
    %3092 = vsyncpa %s3091, 1

</llo_original>
